<compile_context>
chip_gen: v7x
topology: tpu7x:2x2x1
jax: 0.10.0
libtpu: 0.0.40
codegen_flags: <defaults>
</compile_context>

<pallas_src>
import jax
import jax.numpy as jnp
import numpy as np
from jax.experimental import pallas as pl
from jax.experimental.pallas import tpu as pltpu


def _make_lstm_kernel(n_layers, n_hidden, seq_len, batch_pad):
    L, H, T, Bp = n_layers, n_hidden, seq_len, batch_pad

    def kernel(*refs):
        # arg order: scalar-prefetch, inputs, outputs, scratch
        maxlen_ref = refs[0]                                    # SMEM (1,) int32
        lens_ref, x_ref, h0_ref, c0_ref = refs[1:5]             # VMEM, resident
        w_refs = refs[5:5 + 3 * L]                              # (w_ih, w_hh, b) per layer
        w_out_ref, b_out_ref, out_ref = refs[5 + 3 * L:5 + 3 * L + 3]
        xproj_scr, stash_scr = refs[-2:]                        # (T,Bp,4H), (T,Bp,H)

        max_len = maxlen_ref[0]                                 # scalar in SMEM
        lens_v = lens_ref[...]                                  # (Bp, 1) int32

        # --- Hoisted layer-0 input projection (off the recurrent chain). ---
        # Bp is a multiple of 8, so the reshapes merging (T, Bp) are layout
        # no-ops. Fused bias (b_ih0 + b_hh0) is folded in here.
        x2 = x_ref[...].reshape(T * Bp, -1)                     # (T*Bp, F)
        xproj_scr[...] = (
            jnp.dot(x2, w_refs[0][...], preferred_element_type=jnp.float32)
            + w_refs[2][...]).reshape(T, Bp, 4 * H)

        # --- Recurrence: state carried in values (vregs), not scratch ld/st. ---
        hs = [h0_ref[l] for l in range(L)]                      # (Bp, H) each
        cs = [c0_ref[l] for l in range(L)]

        # Fully-unrolled static time loop (T is small and static here).
        # TODO(synk): at large T switch to lax.fori_loop(unroll=k) or a
        # time-chunked grid axis so code size / live ranges stay bounded.
        for t in range(T):
            mask = lens_v > t                                   # (Bp, 1) valid-step mask
            layer_in = None
            for l in range(L):
                h_prev, c_prev = hs[l], cs[l]
                if l == 0:
                    # x-projection precomputed; only the recurrent dot remains
                    # on the serial chain.
                    gates = xproj_scr[t] + jnp.dot(
                        h_prev, w_refs[1][...],
                        preferred_element_type=jnp.float32)
                else:
                    # Two accumulating dots instead of a per-step lane concat.
                    gates = (jnp.dot(layer_in, w_refs[3 * l][...],
                                     preferred_element_type=jnp.float32)
                             + jnp.dot(h_prev, w_refs[3 * l + 1][...],
                                       preferred_element_type=jnp.float32)
                             + w_refs[3 * l + 2][...])          # (Bp, 4H), order i,f,g,o

                # (Bp, 4H) = (8, 128) = one vreg -> 2 full-width EUP passes.
                sg = jax.nn.sigmoid(gates)
                tg = jnp.tanh(gates)
                i_g = sg[:, 0:H]
                f_g = sg[:, H:2 * H]
                g_g = tg[:, 2 * H:3 * H]
                o_g = sg[:, 3 * H:4 * H]

                c_new = f_g * c_prev + i_g * g_g
                h_new = o_g * jnp.tanh(c_new)

                # packed-sequence semantics: freeze state, zero output past length.
                hs[l] = jnp.where(mask, h_new, h_prev)
                cs[l] = jnp.where(mask, c_new, c_prev)
                layer_in = jnp.where(mask, h_new, jnp.zeros_like(h_new))

            stash_scr[t] = layer_in                             # masked last-layer h_t

        # --- Hoisted output Linear: one (T*Bp,H)x(H,O) matmul + bulk store. ---
        out2 = (jnp.dot(stash_scr[...].reshape(T * Bp, H), w_out_ref[...],
                        preferred_element_type=jnp.float32)
                + b_out_ref[...])                               # (T*Bp, O)
        # rows t >= max_len are exactly zero (torch.cat-with-zeros path);
        # rows lens[b] <= t < max_len correctly keep the Linear bias.
        r_ids = jax.lax.broadcasted_iota(jnp.int32, (T * Bp, 1), 0)
        out2 = jnp.where(r_ids < max_len * Bp, out2, 0.0)
        out_ref[...] = out2.reshape(T, Bp, -1)                  # one bulk writeback

    return kernel


def simple_lstm_forward(seqs, lens, h0, c0, layer_params, w_out, b_out):
    """seqs: (B, T, F) f32; lens: (B,) int; h0/c0: (L, B, H) f32.
    layer_params: list of (w_ih (F_in,4H), w_hh (H,4H), b_ih (1,4H), b_hh (1,4H)).
    w_out: (H, O); b_out: (1, O).  Returns (B, T, O) f32."""
    B, T, F = seqs.shape
    L, _, H = h0.shape
    O = w_out.shape[1]

    # Pad batch to the next multiple of 8 (f32 sublane granularity); padded rows
    # get lens = 0 so they stay fully masked, and are sliced off on return.
    Bp = ((B + 7) // 8) * 8
    pad = Bp - B
    lens_i = lens.astype(jnp.int32)
    if pad:
        seqs = jnp.pad(seqs, ((0, pad), (0, 0), (0, 0)))
        lens_i = jnp.pad(lens_i, (0, pad))
        h0 = jnp.pad(h0, ((0, 0), (0, pad), (0, 0)))
        c0 = jnp.pad(c0, ((0, 0), (0, pad), (0, 0)))

    max_len = jnp.max(lens_i).reshape(1)             # scalar-prefetch (SMEM)
    lens_col = lens_i.reshape(Bp, 1)                 # vector mask source (VMEM)
    # TODO(synk): at production T*B, fold this transpose (and the one on the
    # output) into time-chunked BlockSpecs instead of standalone HBM passes.
    x_tm = jnp.transpose(seqs, (1, 0, 2))            # (T, Bp, F) time-major

    # Host-side one-time prep: per-layer (w_ih, w_hh, b_ih + b_hh).
    # TODO(synk): at production H, pre-cast weights/activations to bf16 for the
    # v6e/v7x MXU (keep f32 accumulation) and relax the test tolerance.
    flat = []
    for (w_ih, w_hh, b_ih, b_hh) in layer_params:
        flat += [w_ih, w_hh, b_ih + b_hh]

    in_specs = [
        pl.BlockSpec((Bp, 1), lambda i, ml: (0, 0)),            # lens (Bp,1) int32
        pl.BlockSpec((T, Bp, F), lambda i, ml: (0, 0, 0)),      # x, fully resident
        pl.BlockSpec((L, Bp, H), lambda i, ml: (0, 0, 0)),      # h0
        pl.BlockSpec((L, Bp, H), lambda i, ml: (0, 0, 0)),      # c0
    ]
    for w in flat:                                              # all 2D weights/biases
        in_specs.append(pl.BlockSpec(w.shape, lambda i, ml: (0, 0)))
    in_specs.append(pl.BlockSpec((H, O), lambda i, ml: (0, 0)))  # w_out
    in_specs.append(pl.BlockSpec((1, O), lambda i, ml: (0, 0)))  # b_out

    out_spec = pl.BlockSpec((T, Bp, O), lambda i, ml: (0, 0, 0))

    kernel = _make_lstm_kernel(L, H, T, Bp)
    out_tm = pl.pallas_call(
        kernel,
        out_shape=jax.ShapeDtypeStruct((T, Bp, O), jnp.float32),
        grid_spec=pltpu.PrefetchScalarGridSpec(
            num_scalar_prefetch=1,                  # max_len -> SMEM scalar
            grid=(1,),                              # single invocation; loop inside
            in_specs=in_specs,
            out_specs=out_spec,
            scratch_shapes=[pltpu.VMEM((T, Bp, 4 * H), jnp.float32),  # hoisted x-proj
                            pltpu.VMEM((T, Bp, H), jnp.float32)],     # last-layer h stash
        ),
        compiler_params=pltpu.CompilerParams(
            dimension_semantics=("arbitrary",)),    # recurrent -> sequential
        # TODO(synk): v7x — add a leading "parallel" batch grid axis at production
        # B (second TensorCore), time-chunk x/out BlockSpecs and raise
        # vmem_limit_bytes once T*B grows beyond the scoped-VMEM default.
    )(max_len, lens_col, x_tm, h0, c0, *flat, w_out, b_out)

    out = jnp.transpose(out_tm, (1, 0, 2))           # back to (Bp, T, O)
    return out[:B]


def simple_lstm_reference(seqs, lens, h0, c0, layer_params, w_out, b_out):
    """Pure-JAX reference with identical math, for verification."""
    B, T, F = seqs.shape
    L, _, H = h0.shape
    h = [h0[l] for l in range(L)]
    c = [c0[l] for l in range(L)]
    max_len = int(jnp.max(lens))
    outs = []
    for t in range(T):
        mask = (lens > t)[:, None]
        layer_in = seqs[:, t, :]
        for l, (w_ih, w_hh, b_ih, b_hh) in enumerate(layer_params):
            gates = layer_in @ w_ih + h[l] @ w_hh + b_ih + b_hh
            i_g = jax.nn.sigmoid(gates[:, 0:H])
            f_g = jax.nn.sigmoid(gates[:, H:2 * H])
            g_g = jnp.tanh(gates[:, 2 * H:3 * H])
            o_g = jax.nn.sigmoid(gates[:, 3 * H:4 * H])
            c_cand = f_g * c[l] + i_g * g_g
            h_cand = o_g * jnp.tanh(c_cand)
            h[l] = jnp.where(mask, h_cand, h[l])
            c[l] = jnp.where(mask, c_cand, c[l])
            layer_in = jnp.where(mask, h_cand, 0.0)
        out_t = layer_in @ w_out + b_out
        if t >= max_len:
            out_t = jnp.zeros_like(out_t)
        outs.append(out_t)
    return jnp.stack(outs, axis=1)


if __name__ == "__main__":
    # SimpleLSTM(n_feature=16, n_hidden=32, n_out=8, nb_layers=2, on_gpu=False)
    B, T, F, H, O, L = 4, 8, 16, 32, 8, 2

    key = jax.random.PRNGKey(0)
    keys = jax.random.split(key, 16)

    seqs = jax.random.normal(keys[0], (B, T, F), jnp.float32)
    lens = jnp.array([7, 5, 3, 2], dtype=jnp.int32)  # sorted desc, as pack_padded_sequence expects
    # init_hidden(): torch.randn -> deterministic normals
    h0 = jax.random.normal(keys[1], (L, B, H), jnp.float32)
    c0 = jax.random.normal(keys[2], (L, B, H), jnp.float32)

    k = 1.0 / np.sqrt(H)
    layer_params = []
    kidx = 3
    for l in range(L):
        fin = F if l == 0 else H
        w_ih = jax.random.uniform(keys[kidx], (fin, 4 * H), jnp.float32, -k, k); kidx += 1
        w_hh = jax.random.uniform(keys[kidx], (H, 4 * H), jnp.float32, -k, k); kidx += 1
        b_ih = jax.random.uniform(keys[kidx], (1, 4 * H), jnp.float32, -k, k); kidx += 1
        b_hh = jax.random.uniform(keys[kidx], (1, 4 * H), jnp.float32, -k, k); kidx += 1
        layer_params.append((w_ih, w_hh, b_ih, b_hh))
    w_out = jax.random.uniform(keys[kidx], (H, O), jnp.float32, -k, k); kidx += 1
    b_out = jax.random.uniform(keys[kidx], (1, O), jnp.float32, -k, k)

    out = simple_lstm_forward(seqs, lens, h0, c0, layer_params, w_out, b_out)
    out = jax.block_until_ready(out)

    ref = simple_lstm_reference(seqs, lens, h0, c0, layer_params, w_out, b_out)
    np.testing.assert_allclose(np.asarray(out), np.asarray(ref), atol=1e-3, rtol=1e-3)

    print("KERNEL_OK")
</pallas_src>

<mosaic_0001>
module attributes {stable_mosaic.version = 11 : i64} {
  func.func @kernel(%arg0: i32, %arg1: memref<1xi32, #tpu.memory_space<smem>>, %arg2: memref<8x1xi32, #tpu.memory_space<vmem>>, %arg3: memref<8x8x16xf32, #tpu.memory_space<vmem>>, %arg4: memref<2x8x32xf32, #tpu.memory_space<vmem>>, %arg5: memref<2x8x32xf32, #tpu.memory_space<vmem>>, %arg6: memref<16x128xf32, #tpu.memory_space<vmem>>, %arg7: memref<32x128xf32, #tpu.memory_space<vmem>>, %arg8: memref<1x128xf32, #tpu.memory_space<vmem>>, %arg9: memref<32x128xf32, #tpu.memory_space<vmem>>, %arg10: memref<32x128xf32, #tpu.memory_space<vmem>>, %arg11: memref<1x128xf32, #tpu.memory_space<vmem>>, %arg12: memref<32x8xf32, #tpu.memory_space<vmem>>, %arg13: memref<1x8xf32, #tpu.memory_space<vmem>>, %arg14: memref<8x8x8xf32, #tpu.memory_space<vmem>>, %arg15: memref<8x8x128xf32, #tpu.memory_space<vmem>>, %arg16: memref<8x8x32xf32, #tpu.memory_space<vmem>>) attributes {dimension_semantics = [#tpu.dimension_semantics<arbitrary>], iteration_bounds = array<i64: 1>, scalar_prefetch = 1 : i64, scratch_operands = 2 : i64, tpu.core_type = #tpu.core_type<tc>, window_params = [{pipeline_mode = #tpu.pipeline_mode<synchronous>, transform_indices = @transform_0, window_bounds = array<i64: 8, 1>}, {pipeline_mode = #tpu.pipeline_mode<synchronous>, transform_indices = @transform_1, window_bounds = array<i64: 8, 8, 16>}, {pipeline_mode = #tpu.pipeline_mode<synchronous>, transform_indices = @transform_2, window_bounds = array<i64: 2, 8, 32>}, {pipeline_mode = #tpu.pipeline_mode<synchronous>, transform_indices = @transform_3, window_bounds = array<i64: 2, 8, 32>}, {pipeline_mode = #tpu.pipeline_mode<synchronous>, transform_indices = @transform_4, window_bounds = array<i64: 16, 128>}, {pipeline_mode = #tpu.pipeline_mode<synchronous>, transform_indices = @transform_5, window_bounds = array<i64: 32, 128>}, {pipeline_mode = #tpu.pipeline_mode<synchronous>, transform_indices = @transform_6, window_bounds = array<i64: 1, 128>}, {pipeline_mode = #tpu.pipeline_mode<synchronous>, transform_indices = @transform_7, window_bounds = array<i64: 32, 128>}, {pipeline_mode = #tpu.pipeline_mode<synchronous>, transform_indices = @transform_8, window_bounds = array<i64: 32, 128>}, {pipeline_mode = #tpu.pipeline_mode<synchronous>, transform_indices = @transform_9, window_bounds = array<i64: 1, 128>}, {pipeline_mode = #tpu.pipeline_mode<synchronous>, transform_indices = @transform_10, window_bounds = array<i64: 32, 8>}, {pipeline_mode = #tpu.pipeline_mode<synchronous>, transform_indices = @transform_11, window_bounds = array<i64: 1, 8>}, {pipeline_mode = #tpu.pipeline_mode<synchronous>, transform_indices = @transform_12, window_bounds = array<i64: 8, 8, 8>}]} {
    %c0 = arith.constant 0 : index
    %0 = memref.load %arg1[%c0] : memref<1xi32, #tpu.memory_space<smem>>
    %c0_0 = arith.constant 0 : index
    %c0_1 = arith.constant 0 : index
    %1 = vector.load %arg2[%c0_0, %c0_1] : memref<8x1xi32, #tpu.memory_space<vmem>>, vector<8x1xi32>
    %c0_2 = arith.constant 0 : index
    %c0_3 = arith.constant 0 : index
    %c0_4 = arith.constant 0 : index
    %2 = vector.load %arg3[%c0_2, %c0_3, %c0_4] : memref<8x8x16xf32, #tpu.memory_space<vmem>>, vector<8x8x16xf32>
    %3 = vector.shape_cast %2 : vector<8x8x16xf32> to vector<64x16xf32>
    %c0_5 = arith.constant 0 : index
    %c0_6 = arith.constant 0 : index
    %4 = vector.load %arg6[%c0_5, %c0_6] : memref<16x128xf32, #tpu.memory_space<vmem>>, vector<16x128xf32>
    %cst = arith.constant dense<0.000000e+00> : vector<64x128xf32>
    %5 = tpu.matmul %3, %4, %cst {dimension_numbers = #tpu.dot_dimension_numbers<[1], [0], [0], [1], [0, 0, 1, 1], [], []>} : vector<64x16xf32>, vector<16x128xf32>, vector<64x128xf32> -> vector<64x128xf32>
    %c0_7 = arith.constant 0 : index
    %c0_8 = arith.constant 0 : index
    %6 = vector.load %arg8[%c0_7, %c0_8] : memref<1x128xf32, #tpu.memory_space<vmem>>, vector<1x128xf32>
    %7 = vector.broadcast %6 : vector<1x128xf32> to vector<64x128xf32>
    %8 = arith.addf %5, %7 : vector<64x128xf32>
    %9 = vector.shape_cast %8 : vector<64x128xf32> to vector<8x8x128xf32>
    %c0_9 = arith.constant 0 : index
    %c0_10 = arith.constant 0 : index
    %c0_11 = arith.constant 0 : index
    %10 = vector.load %arg15[%c0_9, %c0_10, %c0_11] : memref<8x8x128xf32, #tpu.memory_space<vmem>>, vector<8x8x128xf32>
    tpu.vector_store %arg15[%c0_9, %c0_10, %c0_11], %9 {strides = array<i32>} : memref<8x8x128xf32, #tpu.memory_space<vmem>>, vector<8x8x128xf32>,
    %c0_12 = arith.constant 0 : index
    %c0_13 = arith.constant 0 : index
    %c0_14 = arith.constant 0 : index
    %11 = vector.load %arg4[%c0_12, %c0_13, %c0_14] : memref<2x8x32xf32, #tpu.memory_space<vmem>>, vector<1x8x32xf32>
    %12 = vector.shape_cast %11 : vector<1x8x32xf32> to vector<8x32xf32>
    %c1 = arith.constant 1 : index
    %c0_15 = arith.constant 0 : index
    %c0_16 = arith.constant 0 : index
    %13 = vector.load %arg4[%c1, %c0_15, %c0_16] : memref<2x8x32xf32, #tpu.memory_space<vmem>>, vector<1x8x32xf32>
    %14 = vector.shape_cast %13 : vector<1x8x32xf32> to vector<8x32xf32>
    %c0_17 = arith.constant 0 : index
    %c0_18 = arith.constant 0 : index
    %c0_19 = arith.constant 0 : index
    %15 = vector.load %arg5[%c0_17, %c0_18, %c0_19] : memref<2x8x32xf32, #tpu.memory_space<vmem>>, vector<1x8x32xf32>
    %16 = vector.shape_cast %15 : vector<1x8x32xf32> to vector<8x32xf32>
    %c1_20 = arith.constant 1 : index
    %c0_21 = arith.constant 0 : index
    %c0_22 = arith.constant 0 : index
    %17 = vector.load %arg5[%c1_20, %c0_21, %c0_22] : memref<2x8x32xf32, #tpu.memory_space<vmem>>, vector<1x8x32xf32>
    %18 = vector.shape_cast %17 : vector<1x8x32xf32> to vector<8x32xf32>
    %c0_i32 = arith.constant 0 : i32
    %19 = vector.broadcast %c0_i32 : i32 to vector<8x1xi32>
    %20 = arith.cmpi sgt, %1, %19 : vector<8x1xi32>
    %c0_23 = arith.constant 0 : index
    %c0_24 = arith.constant 0 : index
    %c0_25 = arith.constant 0 : index
    %21 = vector.load %arg15[%c0_23, %c0_24, %c0_25] : memref<8x8x128xf32, #tpu.memory_space<vmem>>, vector<1x8x128xf32>
    %22 = vector.shape_cast %21 : vector<1x8x128xf32> to vector<8x128xf32>
    %c0_26 = arith.constant 0 : index
    %c0_27 = arith.constant 0 : index
    %23 = vector.load %arg7[%c0_26, %c0_27] : memref<32x128xf32, #tpu.memory_space<vmem>>, vector<32x128xf32>
    %cst_28 = arith.constant dense<0.000000e+00> : vector<8x128xf32>
    %24 = tpu.matmul %12, %23, %cst_28 {dimension_numbers = #tpu.dot_dimension_numbers<[1], [0], [0], [1], [0, 0, 1, 1], [], []>} : vector<8x32xf32>, vector<32x128xf32>, vector<8x128xf32> -> vector<8x128xf32>
    %25 = arith.addf %22, %24 : vector<8x128xf32>
    %26 = arith.negf %25 : vector<8x128xf32>
    %27 = math.exp %26 : vector<8x128xf32>
    %cst_29 = arith.constant 1.000000e+00 : f32
    %28 = vector.broadcast %cst_29 : f32 to vector<8x128xf32>
    %29 = arith.addf %28, %27 : vector<8x128xf32>
    %30 = arith.divf %28, %29 : vector<8x128xf32>
    %31 = math.tanh %25 : vector<8x128xf32>
    %32 = vector.extract_strided_slice %30 {offsets = [0, 0], sizes = [8, 32], strides = [1, 1]} : vector<8x128xf32> to vector<8x32xf32>
    %33 = vector.extract_strided_slice %30 {offsets = [0, 32], sizes = [8, 32], strides = [1, 1]} : vector<8x128xf32> to vector<8x32xf32>
    %34 = vector.extract_strided_slice %31 {offsets = [0, 64], sizes = [8, 32], strides = [1, 1]} : vector<8x128xf32> to vector<8x32xf32>
    %35 = vector.extract_strided_slice %30 {offsets = [0, 96], sizes = [8, 32], strides = [1, 1]} : vector<8x128xf32> to vector<8x32xf32>
    %36 = arith.mulf %33, %16 : vector<8x32xf32>
    %37 = arith.mulf %32, %34 : vector<8x32xf32>
    %38 = arith.addf %36, %37 : vector<8x32xf32>
    %39 = math.tanh %38 : vector<8x32xf32>
    %40 = arith.mulf %35, %39 : vector<8x32xf32>
    %41 = vector.shape_cast %20 : vector<8x1xi1> to vector<8x1xi1>
    %42 = vector.broadcast %41 : vector<8x1xi1> to vector<8x32xi1>
    %43 = arith.select %42, %40, %12 : vector<8x32xi1>, vector<8x32xf32>
    %44 = vector.shape_cast %20 : vector<8x1xi1> to vector<8x1xi1>
    %45 = vector.broadcast %44 : vector<8x1xi1> to vector<8x32xi1>
    %46 = arith.select %45, %38, %16 : vector<8x32xi1>, vector<8x32xf32>
    %cst_30 = arith.constant 0.000000e+00 : f32
    %47 = vector.broadcast %cst_30 : f32 to vector<8x32xf32>
    %48 = vector.shape_cast %20 : vector<8x1xi1> to vector<8x1xi1>
    %49 = vector.broadcast %48 : vector<8x1xi1> to vector<8x32xi1>
    %50 = arith.select %49, %40, %47 : vector<8x32xi1>, vector<8x32xf32>
    %c0_31 = arith.constant 0 : index
    %c0_32 = arith.constant 0 : index
    %51 = vector.load %arg9[%c0_31, %c0_32] : memref<32x128xf32, #tpu.memory_space<vmem>>, vector<32x128xf32>
    %cst_33 = arith.constant dense<0.000000e+00> : vector<8x128xf32>
    %52 = tpu.matmul %50, %51, %cst_33 {dimension_numbers = #tpu.dot_dimension_numbers<[1], [0], [0], [1], [0, 0, 1, 1], [], []>} : vector<8x32xf32>, vector<32x128xf32>, vector<8x128xf32> -> vector<8x128xf32>
    %c0_34 = arith.constant 0 : index
    %c0_35 = arith.constant 0 : index
    %53 = vector.load %arg10[%c0_34, %c0_35] : memref<32x128xf32, #tpu.memory_space<vmem>>, vector<32x128xf32>
    %cst_36 = arith.constant dense<0.000000e+00> : vector<8x128xf32>
    %54 = tpu.matmul %14, %53, %cst_36 {dimension_numbers = #tpu.dot_dimension_numbers<[1], [0], [0], [1], [0, 0, 1, 1], [], []>} : vector<8x32xf32>, vector<32x128xf32>, vector<8x128xf32> -> vector<8x128xf32>
    %55 = arith.addf %52, %54 : vector<8x128xf32>
    %c0_37 = arith.constant 0 : index
    %c0_38 = arith.constant 0 : index
    %56 = vector.load %arg11[%c0_37, %c0_38] : memref<1x128xf32, #tpu.memory_space<vmem>>, vector<1x128xf32>
    %57 = vector.broadcast %56 : vector<1x128xf32> to vector<8x128xf32>
    %58 = arith.addf %55, %57 : vector<8x128xf32>
    %59 = arith.negf %58 : vector<8x128xf32>
    %60 = math.exp %59 : vector<8x128xf32>
    %cst_39 = arith.constant 1.000000e+00 : f32
    %61 = vector.broadcast %cst_39 : f32 to vector<8x128xf32>
    %62 = arith.addf %61, %60 : vector<8x128xf32>
    %63 = arith.divf %61, %62 : vector<8x128xf32>
    %64 = math.tanh %58 : vector<8x128xf32>
    %65 = vector.extract_strided_slice %63 {offsets = [0, 0], sizes = [8, 32], strides = [1, 1]} : vector<8x128xf32> to vector<8x32xf32>
    %66 = vector.extract_strided_slice %63 {offsets = [0, 32], sizes = [8, 32], strides = [1, 1]} : vector<8x128xf32> to vector<8x32xf32>
    %67 = vector.extract_strided_slice %64 {offsets = [0, 64], sizes = [8, 32], strides = [1, 1]} : vector<8x128xf32> to vector<8x32xf32>
    %68 = vector.extract_strided_slice %63 {offsets = [0, 96], sizes = [8, 32], strides = [1, 1]} : vector<8x128xf32> to vector<8x32xf32>
    %69 = arith.mulf %66, %18 : vector<8x32xf32>
    %70 = arith.mulf %65, %67 : vector<8x32xf32>
    %71 = arith.addf %69, %70 : vector<8x32xf32>
    %72 = math.tanh %71 : vector<8x32xf32>
    %73 = arith.mulf %68, %72 : vector<8x32xf32>
    %74 = vector.shape_cast %20 : vector<8x1xi1> to vector<8x1xi1>
    %75 = vector.broadcast %74 : vector<8x1xi1> to vector<8x32xi1>
    %76 = arith.select %75, %73, %14 : vector<8x32xi1>, vector<8x32xf32>
    %77 = vector.shape_cast %20 : vector<8x1xi1> to vector<8x1xi1>
    %78 = vector.broadcast %77 : vector<8x1xi1> to vector<8x32xi1>
    %79 = arith.select %78, %71, %18 : vector<8x32xi1>, vector<8x32xf32>
    %cst_40 = arith.constant 0.000000e+00 : f32
    %80 = vector.broadcast %cst_40 : f32 to vector<8x32xf32>
    %81 = vector.shape_cast %20 : vector<8x1xi1> to vector<8x1xi1>
    %82 = vector.broadcast %81 : vector<8x1xi1> to vector<8x32xi1>
    %83 = arith.select %82, %73, %80 : vector<8x32xi1>, vector<8x32xf32>
    %c0_41 = arith.constant 0 : index
    %c0_42 = arith.constant 0 : index
    %c0_43 = arith.constant 0 : index
    %84 = vector.load %arg16[%c0_41, %c0_42, %c0_43] : memref<8x8x32xf32, #tpu.memory_space<vmem>>, vector<1x8x32xf32>
    %85 = vector.shape_cast %84 : vector<1x8x32xf32> to vector<8x32xf32>
    %86 = vector.shape_cast %83 : vector<8x32xf32> to vector<1x8x32xf32>
    tpu.vector_store %arg16[%c0_41, %c0_42, %c0_43], %86 {strides = array<i32>} : memref<8x8x32xf32, #tpu.memory_space<vmem>>, vector<1x8x32xf32>,
    %c1_i32 = arith.constant 1 : i32
    %87 = vector.broadcast %c1_i32 : i32 to vector<8x1xi32>
    %88 = arith.cmpi sgt, %1, %87 : vector<8x1xi32>
    %c1_44 = arith.constant 1 : index
    %c0_45 = arith.constant 0 : index
    %c0_46 = arith.constant 0 : index
    %89 = vector.load %arg15[%c1_44, %c0_45, %c0_46] : memref<8x8x128xf32, #tpu.memory_space<vmem>>, vector<1x8x128xf32>
    %90 = vector.shape_cast %89 : vector<1x8x128xf32> to vector<8x128xf32>
    %c0_47 = arith.constant 0 : index
    %c0_48 = arith.constant 0 : index
    %91 = vector.load %arg7[%c0_47, %c0_48] : memref<32x128xf32, #tpu.memory_space<vmem>>, vector<32x128xf32>
    %cst_49 = arith.constant dense<0.000000e+00> : vector<8x128xf32>
    %92 = tpu.matmul %43, %91, %cst_49 {dimension_numbers = #tpu.dot_dimension_numbers<[1], [0], [0], [1], [0, 0, 1, 1], [], []>} : vector<8x32xf32>, vector<32x128xf32>, vector<8x128xf32> -> vector<8x128xf32>
    %93 = arith.addf %90, %92 : vector<8x128xf32>
    %94 = arith.negf %93 : vector<8x128xf32>
    %95 = math.exp %94 : vector<8x128xf32>
    %cst_50 = arith.constant 1.000000e+00 : f32
    %96 = vector.broadcast %cst_50 : f32 to vector<8x128xf32>
    %97 = arith.addf %96, %95 : vector<8x128xf32>
    %98 = arith.divf %96, %97 : vector<8x128xf32>
    %99 = math.tanh %93 : vector<8x128xf32>
    %100 = vector.extract_strided_slice %98 {offsets = [0, 0], sizes = [8, 32], strides = [1, 1]} : vector<8x128xf32> to vector<8x32xf32>
    %101 = vector.extract_strided_slice %98 {offsets = [0, 32], sizes = [8, 32], strides = [1, 1]} : vector<8x128xf32> to vector<8x32xf32>
    %102 = vector.extract_strided_slice %99 {offsets = [0, 64], sizes = [8, 32], strides = [1, 1]} : vector<8x128xf32> to vector<8x32xf32>
    %103 = vector.extract_strided_slice %98 {offsets = [0, 96], sizes = [8, 32], strides = [1, 1]} : vector<8x128xf32> to vector<8x32xf32>
    %104 = arith.mulf %101, %46 : vector<8x32xf32>
    %105 = arith.mulf %100, %102 : vector<8x32xf32>
    %106 = arith.addf %104, %105 : vector<8x32xf32>
    %107 = math.tanh %106 : vector<8x32xf32>
    %108 = arith.mulf %103, %107 : vector<8x32xf32>
    %109 = vector.shape_cast %88 : vector<8x1xi1> to vector<8x1xi1>
    %110 = vector.broadcast %109 : vector<8x1xi1> to vector<8x32xi1>
    %111 = arith.select %110, %108, %43 : vector<8x32xi1>, vector<8x32xf32>
    %112 = vector.shape_cast %88 : vector<8x1xi1> to vector<8x1xi1>
    %113 = vector.broadcast %112 : vector<8x1xi1> to vector<8x32xi1>
    %114 = arith.select %113, %106, %46 : vector<8x32xi1>, vector<8x32xf32>
    %cst_51 = arith.constant 0.000000e+00 : f32
    %115 = vector.broadcast %cst_51 : f32 to vector<8x32xf32>
    %116 = vector.shape_cast %88 : vector<8x1xi1> to vector<8x1xi1>
    %117 = vector.broadcast %116 : vector<8x1xi1> to vector<8x32xi1>
    %118 = arith.select %117, %108, %115 : vector<8x32xi1>, vector<8x32xf32>
    %c0_52 = arith.constant 0 : index
    %c0_53 = arith.constant 0 : index
    %119 = vector.load %arg9[%c0_52, %c0_53] : memref<32x128xf32, #tpu.memory_space<vmem>>, vector<32x128xf32>
    %cst_54 = arith.constant dense<0.000000e+00> : vector<8x128xf32>
    %120 = tpu.matmul %118, %119, %cst_54 {dimension_numbers = #tpu.dot_dimension_numbers<[1], [0], [0], [1], [0, 0, 1, 1], [], []>} : vector<8x32xf32>, vector<32x128xf32>, vector<8x128xf32> -> vector<8x128xf32>
    %c0_55 = arith.constant 0 : index
    %c0_56 = arith.constant 0 : index
    %121 = vector.load %arg10[%c0_55, %c0_56] : memref<32x128xf32, #tpu.memory_space<vmem>>, vector<32x128xf32>
    %cst_57 = arith.constant dense<0.000000e+00> : vector<8x128xf32>
    %122 = tpu.matmul %76, %121, %cst_57 {dimension_numbers = #tpu.dot_dimension_numbers<[1], [0], [0], [1], [0, 0, 1, 1], [], []>} : vector<8x32xf32>, vector<32x128xf32>, vector<8x128xf32> -> vector<8x128xf32>
    %123 = arith.addf %120, %122 : vector<8x128xf32>
    %c0_58 = arith.constant 0 : index
    %c0_59 = arith.constant 0 : index
    %124 = vector.load %arg11[%c0_58, %c0_59] : memref<1x128xf32, #tpu.memory_space<vmem>>, vector<1x128xf32>
    %125 = vector.broadcast %124 : vector<1x128xf32> to vector<8x128xf32>
    %126 = arith.addf %123, %125 : vector<8x128xf32>
    %127 = arith.negf %126 : vector<8x128xf32>
    %128 = math.exp %127 : vector<8x128xf32>
    %cst_60 = arith.constant 1.000000e+00 : f32
    %129 = vector.broadcast %cst_60 : f32 to vector<8x128xf32>
    %130 = arith.addf %129, %128 : vector<8x128xf32>
    %131 = arith.divf %129, %130 : vector<8x128xf32>
    %132 = math.tanh %126 : vector<8x128xf32>
    %133 = vector.extract_strided_slice %131 {offsets = [0, 0], sizes = [8, 32], strides = [1, 1]} : vector<8x128xf32> to vector<8x32xf32>
    %134 = vector.extract_strided_slice %131 {offsets = [0, 32], sizes = [8, 32], strides = [1, 1]} : vector<8x128xf32> to vector<8x32xf32>
    %135 = vector.extract_strided_slice %132 {offsets = [0, 64], sizes = [8, 32], strides = [1, 1]} : vector<8x128xf32> to vector<8x32xf32>
    %136 = vector.extract_strided_slice %131 {offsets = [0, 96], sizes = [8, 32], strides = [1, 1]} : vector<8x128xf32> to vector<8x32xf32>
    %137 = arith.mulf %134, %79 : vector<8x32xf32>
    %138 = arith.mulf %133, %135 : vector<8x32xf32>
    %139 = arith.addf %137, %138 : vector<8x32xf32>
    %140 = math.tanh %139 : vector<8x32xf32>
    %141 = arith.mulf %136, %140 : vector<8x32xf32>
    %142 = vector.shape_cast %88 : vector<8x1xi1> to vector<8x1xi1>
    %143 = vector.broadcast %142 : vector<8x1xi1> to vector<8x32xi1>
    %144 = arith.select %143, %141, %76 : vector<8x32xi1>, vector<8x32xf32>
    %145 = vector.shape_cast %88 : vector<8x1xi1> to vector<8x1xi1>
    %146 = vector.broadcast %145 : vector<8x1xi1> to vector<8x32xi1>
    %147 = arith.select %146, %139, %79 : vector<8x32xi1>, vector<8x32xf32>
    %cst_61 = arith.constant 0.000000e+00 : f32
    %148 = vector.broadcast %cst_61 : f32 to vector<8x32xf32>
    %149 = vector.shape_cast %88 : vector<8x1xi1> to vector<8x1xi1>
    %150 = vector.broadcast %149 : vector<8x1xi1> to vector<8x32xi1>
    %151 = arith.select %150, %141, %148 : vector<8x32xi1>, vector<8x32xf32>
    %c1_62 = arith.constant 1 : index
    %c0_63 = arith.constant 0 : index
    %c0_64 = arith.constant 0 : index
    %152 = vector.load %arg16[%c1_62, %c0_63, %c0_64] : memref<8x8x32xf32, #tpu.memory_space<vmem>>, vector<1x8x32xf32>
    %153 = vector.shape_cast %152 : vector<1x8x32xf32> to vector<8x32xf32>
    %154 = vector.shape_cast %151 : vector<8x32xf32> to vector<1x8x32xf32>
    tpu.vector_store %arg16[%c1_62, %c0_63, %c0_64], %154 {strides = array<i32>} : memref<8x8x32xf32, #tpu.memory_space<vmem>>, vector<1x8x32xf32>,
    %c2_i32 = arith.constant 2 : i32
    %155 = vector.broadcast %c2_i32 : i32 to vector<8x1xi32>
    %156 = arith.cmpi sgt, %1, %155 : vector<8x1xi32>
    %c2 = arith.constant 2 : index
    %c0_65 = arith.constant 0 : index
    %c0_66 = arith.constant 0 : index
    %157 = vector.load %arg15[%c2, %c0_65, %c0_66] : memref<8x8x128xf32, #tpu.memory_space<vmem>>, vector<1x8x128xf32>
    %158 = vector.shape_cast %157 : vector<1x8x128xf32> to vector<8x128xf32>
    %c0_67 = arith.constant 0 : index
    %c0_68 = arith.constant 0 : index
    %159 = vector.load %arg7[%c0_67, %c0_68] : memref<32x128xf32, #tpu.memory_space<vmem>>, vector<32x128xf32>
    %cst_69 = arith.constant dense<0.000000e+00> : vector<8x128xf32>
    %160 = tpu.matmul %111, %159, %cst_69 {dimension_numbers = #tpu.dot_dimension_numbers<[1], [0], [0], [1], [0, 0, 1, 1], [], []>} : vector<8x32xf32>, vector<32x128xf32>, vector<8x128xf32> -> vector<8x128xf32>
    %161 = arith.addf %158, %160 : vector<8x128xf32>
    %162 = arith.negf %161 : vector<8x128xf32>
    %163 = math.exp %162 : vector<8x128xf32>
    %cst_70 = arith.constant 1.000000e+00 : f32
    %164 = vector.broadcast %cst_70 : f32 to vector<8x128xf32>
    %165 = arith.addf %164, %163 : vector<8x128xf32>
    %166 = arith.divf %164, %165 : vector<8x128xf32>
    %167 = math.tanh %161 : vector<8x128xf32>
    %168 = vector.extract_strided_slice %166 {offsets = [0, 0], sizes = [8, 32], strides = [1, 1]} : vector<8x128xf32> to vector<8x32xf32>
    %169 = vector.extract_strided_slice %166 {offsets = [0, 32], sizes = [8, 32], strides = [1, 1]} : vector<8x128xf32> to vector<8x32xf32>
    %170 = vector.extract_strided_slice %167 {offsets = [0, 64], sizes = [8, 32], strides = [1, 1]} : vector<8x128xf32> to vector<8x32xf32>
    %171 = vector.extract_strided_slice %166 {offsets = [0, 96], sizes = [8, 32], strides = [1, 1]} : vector<8x128xf32> to vector<8x32xf32>
    %172 = arith.mulf %169, %114 : vector<8x32xf32>
    %173 = arith.mulf %168, %170 : vector<8x32xf32>
    %174 = arith.addf %172, %173 : vector<8x32xf32>
    %175 = math.tanh %174 : vector<8x32xf32>
    %176 = arith.mulf %171, %175 : vector<8x32xf32>
    %177 = vector.shape_cast %156 : vector<8x1xi1> to vector<8x1xi1>
    %178 = vector.broadcast %177 : vector<8x1xi1> to vector<8x32xi1>
    %179 = arith.select %178, %176, %111 : vector<8x32xi1>, vector<8x32xf32>
    %180 = vector.shape_cast %156 : vector<8x1xi1> to vector<8x1xi1>
    %181 = vector.broadcast %180 : vector<8x1xi1> to vector<8x32xi1>
    %182 = arith.select %181, %174, %114 : vector<8x32xi1>, vector<8x32xf32>
    %cst_71 = arith.constant 0.000000e+00 : f32
    %183 = vector.broadcast %cst_71 : f32 to vector<8x32xf32>
    %184 = vector.shape_cast %156 : vector<8x1xi1> to vector<8x1xi1>
    %185 = vector.broadcast %184 : vector<8x1xi1> to vector<8x32xi1>
    %186 = arith.select %185, %176, %183 : vector<8x32xi1>, vector<8x32xf32>
    %c0_72 = arith.constant 0 : index
    %c0_73 = arith.constant 0 : index
    %187 = vector.load %arg9[%c0_72, %c0_73] : memref<32x128xf32, #tpu.memory_space<vmem>>, vector<32x128xf32>
    %cst_74 = arith.constant dense<0.000000e+00> : vector<8x128xf32>
    %188 = tpu.matmul %186, %187, %cst_74 {dimension_numbers = #tpu.dot_dimension_numbers<[1], [0], [0], [1], [0, 0, 1, 1], [], []>} : vector<8x32xf32>, vector<32x128xf32>, vector<8x128xf32> -> vector<8x128xf32>
    %c0_75 = arith.constant 0 : index
    %c0_76 = arith.constant 0 : index
    %189 = vector.load %arg10[%c0_75, %c0_76] : memref<32x128xf32, #tpu.memory_space<vmem>>, vector<32x128xf32>
    %cst_77 = arith.constant dense<0.000000e+00> : vector<8x128xf32>
    %190 = tpu.matmul %144, %189, %cst_77 {dimension_numbers = #tpu.dot_dimension_numbers<[1], [0], [0], [1], [0, 0, 1, 1], [], []>} : vector<8x32xf32>, vector<32x128xf32>, vector<8x128xf32> -> vector<8x128xf32>
    %191 = arith.addf %188, %190 : vector<8x128xf32>
    %c0_78 = arith.constant 0 : index
    %c0_79 = arith.constant 0 : index
    %192 = vector.load %arg11[%c0_78, %c0_79] : memref<1x128xf32, #tpu.memory_space<vmem>>, vector<1x128xf32>
    %193 = vector.broadcast %192 : vector<1x128xf32> to vector<8x128xf32>
    %194 = arith.addf %191, %193 : vector<8x128xf32>
    %195 = arith.negf %194 : vector<8x128xf32>
    %196 = math.exp %195 : vector<8x128xf32>
    %cst_80 = arith.constant 1.000000e+00 : f32
    %197 = vector.broadcast %cst_80 : f32 to vector<8x128xf32>
    %198 = arith.addf %197, %196 : vector<8x128xf32>
    %199 = arith.divf %197, %198 : vector<8x128xf32>
    %200 = math.tanh %194 : vector<8x128xf32>
    %201 = vector.extract_strided_slice %199 {offsets = [0, 0], sizes = [8, 32], strides = [1, 1]} : vector<8x128xf32> to vector<8x32xf32>
    %202 = vector.extract_strided_slice %199 {offsets = [0, 32], sizes = [8, 32], strides = [1, 1]} : vector<8x128xf32> to vector<8x32xf32>
    %203 = vector.extract_strided_slice %200 {offsets = [0, 64], sizes = [8, 32], strides = [1, 1]} : vector<8x128xf32> to vector<8x32xf32>
    %204 = vector.extract_strided_slice %199 {offsets = [0, 96], sizes = [8, 32], strides = [1, 1]} : vector<8x128xf32> to vector<8x32xf32>
    %205 = arith.mulf %202, %147 : vector<8x32xf32>
    %206 = arith.mulf %201, %203 : vector<8x32xf32>
    %207 = arith.addf %205, %206 : vector<8x32xf32>
    %208 = math.tanh %207 : vector<8x32xf32>
    %209 = arith.mulf %204, %208 : vector<8x32xf32>
    %210 = vector.shape_cast %156 : vector<8x1xi1> to vector<8x1xi1>
    %211 = vector.broadcast %210 : vector<8x1xi1> to vector<8x32xi1>
    %212 = arith.select %211, %209, %144 : vector<8x32xi1>, vector<8x32xf32>
    %213 = vector.shape_cast %156 : vector<8x1xi1> to vector<8x1xi1>
    %214 = vector.broadcast %213 : vector<8x1xi1> to vector<8x32xi1>
    %215 = arith.select %214, %207, %147 : vector<8x32xi1>, vector<8x32xf32>
    %cst_81 = arith.constant 0.000000e+00 : f32
    %216 = vector.broadcast %cst_81 : f32 to vector<8x32xf32>
    %217 = vector.shape_cast %156 : vector<8x1xi1> to vector<8x1xi1>
    %218 = vector.broadcast %217 : vector<8x1xi1> to vector<8x32xi1>
    %219 = arith.select %218, %209, %216 : vector<8x32xi1>, vector<8x32xf32>
    %c2_82 = arith.constant 2 : index
    %c0_83 = arith.constant 0 : index
    %c0_84 = arith.constant 0 : index
    %220 = vector.load %arg16[%c2_82, %c0_83, %c0_84] : memref<8x8x32xf32, #tpu.memory_space<vmem>>, vector<1x8x32xf32>
    %221 = vector.shape_cast %220 : vector<1x8x32xf32> to vector<8x32xf32>
    %222 = vector.shape_cast %219 : vector<8x32xf32> to vector<1x8x32xf32>
    tpu.vector_store %arg16[%c2_82, %c0_83, %c0_84], %222 {strides = array<i32>} : memref<8x8x32xf32, #tpu.memory_space<vmem>>, vector<1x8x32xf32>,
    %c3_i32 = arith.constant 3 : i32
    %223 = vector.broadcast %c3_i32 : i32 to vector<8x1xi32>
    %224 = arith.cmpi sgt, %1, %223 : vector<8x1xi32>
    %c3 = arith.constant 3 : index
    %c0_85 = arith.constant 0 : index
    %c0_86 = arith.constant 0 : index
    %225 = vector.load %arg15[%c3, %c0_85, %c0_86] : memref<8x8x128xf32, #tpu.memory_space<vmem>>, vector<1x8x128xf32>
    %226 = vector.shape_cast %225 : vector<1x8x128xf32> to vector<8x128xf32>
    %c0_87 = arith.constant 0 : index
    %c0_88 = arith.constant 0 : index
    %227 = vector.load %arg7[%c0_87, %c0_88] : memref<32x128xf32, #tpu.memory_space<vmem>>, vector<32x128xf32>
    %cst_89 = arith.constant dense<0.000000e+00> : vector<8x128xf32>
    %228 = tpu.matmul %179, %227, %cst_89 {dimension_numbers = #tpu.dot_dimension_numbers<[1], [0], [0], [1], [0, 0, 1, 1], [], []>} : vector<8x32xf32>, vector<32x128xf32>, vector<8x128xf32> -> vector<8x128xf32>
    %229 = arith.addf %226, %228 : vector<8x128xf32>
    %230 = arith.negf %229 : vector<8x128xf32>
    %231 = math.exp %230 : vector<8x128xf32>
    %cst_90 = arith.constant 1.000000e+00 : f32
    %232 = vector.broadcast %cst_90 : f32 to vector<8x128xf32>
    %233 = arith.addf %232, %231 : vector<8x128xf32>
    %234 = arith.divf %232, %233 : vector<8x128xf32>
    %235 = math.tanh %229 : vector<8x128xf32>
    %236 = vector.extract_strided_slice %234 {offsets = [0, 0], sizes = [8, 32], strides = [1, 1]} : vector<8x128xf32> to vector<8x32xf32>
    %237 = vector.extract_strided_slice %234 {offsets = [0, 32], sizes = [8, 32], strides = [1, 1]} : vector<8x128xf32> to vector<8x32xf32>
    %238 = vector.extract_strided_slice %235 {offsets = [0, 64], sizes = [8, 32], strides = [1, 1]} : vector<8x128xf32> to vector<8x32xf32>
    %239 = vector.extract_strided_slice %234 {offsets = [0, 96], sizes = [8, 32], strides = [1, 1]} : vector<8x128xf32> to vector<8x32xf32>
    %240 = arith.mulf %237, %182 : vector<8x32xf32>
    %241 = arith.mulf %236, %238 : vector<8x32xf32>
    %242 = arith.addf %240, %241 : vector<8x32xf32>
    %243 = math.tanh %242 : vector<8x32xf32>
    %244 = arith.mulf %239, %243 : vector<8x32xf32>
    %245 = vector.shape_cast %224 : vector<8x1xi1> to vector<8x1xi1>
    %246 = vector.broadcast %245 : vector<8x1xi1> to vector<8x32xi1>
    %247 = arith.select %246, %244, %179 : vector<8x32xi1>, vector<8x32xf32>
    %248 = vector.shape_cast %224 : vector<8x1xi1> to vector<8x1xi1>
    %249 = vector.broadcast %248 : vector<8x1xi1> to vector<8x32xi1>
    %250 = arith.select %249, %242, %182 : vector<8x32xi1>, vector<8x32xf32>
    %cst_91 = arith.constant 0.000000e+00 : f32
    %251 = vector.broadcast %cst_91 : f32 to vector<8x32xf32>
    %252 = vector.shape_cast %224 : vector<8x1xi1> to vector<8x1xi1>
    %253 = vector.broadcast %252 : vector<8x1xi1> to vector<8x32xi1>
    %254 = arith.select %253, %244, %251 : vector<8x32xi1>, vector<8x32xf32>
    %c0_92 = arith.constant 0 : index
    %c0_93 = arith.constant 0 : index
    %255 = vector.load %arg9[%c0_92, %c0_93] : memref<32x128xf32, #tpu.memory_space<vmem>>, vector<32x128xf32>
    %cst_94 = arith.constant dense<0.000000e+00> : vector<8x128xf32>
    %256 = tpu.matmul %254, %255, %cst_94 {dimension_numbers = #tpu.dot_dimension_numbers<[1], [0], [0], [1], [0, 0, 1, 1], [], []>} : vector<8x32xf32>, vector<32x128xf32>, vector<8x128xf32> -> vector<8x128xf32>
    %c0_95 = arith.constant 0 : index
    %c0_96 = arith.constant 0 : index
    %257 = vector.load %arg10[%c0_95, %c0_96] : memref<32x128xf32, #tpu.memory_space<vmem>>, vector<32x128xf32>
    %cst_97 = arith.constant dense<0.000000e+00> : vector<8x128xf32>
    %258 = tpu.matmul %212, %257, %cst_97 {dimension_numbers = #tpu.dot_dimension_numbers<[1], [0], [0], [1], [0, 0, 1, 1], [], []>} : vector<8x32xf32>, vector<32x128xf32>, vector<8x128xf32> -> vector<8x128xf32>
    %259 = arith.addf %256, %258 : vector<8x128xf32>
    %c0_98 = arith.constant 0 : index
    %c0_99 = arith.constant 0 : index
    %260 = vector.load %arg11[%c0_98, %c0_99] : memref<1x128xf32, #tpu.memory_space<vmem>>, vector<1x128xf32>
    %261 = vector.broadcast %260 : vector<1x128xf32> to vector<8x128xf32>
    %262 = arith.addf %259, %261 : vector<8x128xf32>
    %263 = arith.negf %262 : vector<8x128xf32>
    %264 = math.exp %263 : vector<8x128xf32>
    %cst_100 = arith.constant 1.000000e+00 : f32
    %265 = vector.broadcast %cst_100 : f32 to vector<8x128xf32>
    %266 = arith.addf %265, %264 : vector<8x128xf32>
    %267 = arith.divf %265, %266 : vector<8x128xf32>
    %268 = math.tanh %262 : vector<8x128xf32>
    %269 = vector.extract_strided_slice %267 {offsets = [0, 0], sizes = [8, 32], strides = [1, 1]} : vector<8x128xf32> to vector<8x32xf32>
    %270 = vector.extract_strided_slice %267 {offsets = [0, 32], sizes = [8, 32], strides = [1, 1]} : vector<8x128xf32> to vector<8x32xf32>
    %271 = vector.extract_strided_slice %268 {offsets = [0, 64], sizes = [8, 32], strides = [1, 1]} : vector<8x128xf32> to vector<8x32xf32>
    %272 = vector.extract_strided_slice %267 {offsets = [0, 96], sizes = [8, 32], strides = [1, 1]} : vector<8x128xf32> to vector<8x32xf32>
    %273 = arith.mulf %270, %215 : vector<8x32xf32>
    %274 = arith.mulf %269, %271 : vector<8x32xf32>
    %275 = arith.addf %273, %274 : vector<8x32xf32>
    %276 = math.tanh %275 : vector<8x32xf32>
    %277 = arith.mulf %272, %276 : vector<8x32xf32>
    %278 = vector.shape_cast %224 : vector<8x1xi1> to vector<8x1xi1>
    %279 = vector.broadcast %278 : vector<8x1xi1> to vector<8x32xi1>
    %280 = arith.select %279, %277, %212 : vector<8x32xi1>, vector<8x32xf32>
    %281 = vector.shape_cast %224 : vector<8x1xi1> to vector<8x1xi1>
    %282 = vector.broadcast %281 : vector<8x1xi1> to vector<8x32xi1>
    %283 = arith.select %282, %275, %215 : vector<8x32xi1>, vector<8x32xf32>
    %cst_101 = arith.constant 0.000000e+00 : f32
    %284 = vector.broadcast %cst_101 : f32 to vector<8x32xf32>
    %285 = vector.shape_cast %224 : vector<8x1xi1> to vector<8x1xi1>
    %286 = vector.broadcast %285 : vector<8x1xi1> to vector<8x32xi1>
    %287 = arith.select %286, %277, %284 : vector<8x32xi1>, vector<8x32xf32>
    %c3_102 = arith.constant 3 : index
    %c0_103 = arith.constant 0 : index
    %c0_104 = arith.constant 0 : index
    %288 = vector.load %arg16[%c3_102, %c0_103, %c0_104] : memref<8x8x32xf32, #tpu.memory_space<vmem>>, vector<1x8x32xf32>
    %289 = vector.shape_cast %288 : vector<1x8x32xf32> to vector<8x32xf32>
    %290 = vector.shape_cast %287 : vector<8x32xf32> to vector<1x8x32xf32>
    tpu.vector_store %arg16[%c3_102, %c0_103, %c0_104], %290 {strides = array<i32>} : memref<8x8x32xf32, #tpu.memory_space<vmem>>, vector<1x8x32xf32>,
    %c4_i32 = arith.constant 4 : i32
    %291 = vector.broadcast %c4_i32 : i32 to vector<8x1xi32>
    %292 = arith.cmpi sgt, %1, %291 : vector<8x1xi32>
    %c4 = arith.constant 4 : index
    %c0_105 = arith.constant 0 : index
    %c0_106 = arith.constant 0 : index
    %293 = vector.load %arg15[%c4, %c0_105, %c0_106] : memref<8x8x128xf32, #tpu.memory_space<vmem>>, vector<1x8x128xf32>
    %294 = vector.shape_cast %293 : vector<1x8x128xf32> to vector<8x128xf32>
    %c0_107 = arith.constant 0 : index
    %c0_108 = arith.constant 0 : index
    %295 = vector.load %arg7[%c0_107, %c0_108] : memref<32x128xf32, #tpu.memory_space<vmem>>, vector<32x128xf32>
    %cst_109 = arith.constant dense<0.000000e+00> : vector<8x128xf32>
    %296 = tpu.matmul %247, %295, %cst_109 {dimension_numbers = #tpu.dot_dimension_numbers<[1], [0], [0], [1], [0, 0, 1, 1], [], []>} : vector<8x32xf32>, vector<32x128xf32>, vector<8x128xf32> -> vector<8x128xf32>
    %297 = arith.addf %294, %296 : vector<8x128xf32>
    %298 = arith.negf %297 : vector<8x128xf32>
    %299 = math.exp %298 : vector<8x128xf32>
    %cst_110 = arith.constant 1.000000e+00 : f32
    %300 = vector.broadcast %cst_110 : f32 to vector<8x128xf32>
    %301 = arith.addf %300, %299 : vector<8x128xf32>
    %302 = arith.divf %300, %301 : vector<8x128xf32>
    %303 = math.tanh %297 : vector<8x128xf32>
    %304 = vector.extract_strided_slice %302 {offsets = [0, 0], sizes = [8, 32], strides = [1, 1]} : vector<8x128xf32> to vector<8x32xf32>
    %305 = vector.extract_strided_slice %302 {offsets = [0, 32], sizes = [8, 32], strides = [1, 1]} : vector<8x128xf32> to vector<8x32xf32>
    %306 = vector.extract_strided_slice %303 {offsets = [0, 64], sizes = [8, 32], strides = [1, 1]} : vector<8x128xf32> to vector<8x32xf32>
    %307 = vector.extract_strided_slice %302 {offsets = [0, 96], sizes = [8, 32], strides = [1, 1]} : vector<8x128xf32> to vector<8x32xf32>
    %308 = arith.mulf %305, %250 : vector<8x32xf32>
    %309 = arith.mulf %304, %306 : vector<8x32xf32>
    %310 = arith.addf %308, %309 : vector<8x32xf32>
    %311 = math.tanh %310 : vector<8x32xf32>
    %312 = arith.mulf %307, %311 : vector<8x32xf32>
    %313 = vector.shape_cast %292 : vector<8x1xi1> to vector<8x1xi1>
    %314 = vector.broadcast %313 : vector<8x1xi1> to vector<8x32xi1>
    %315 = arith.select %314, %312, %247 : vector<8x32xi1>, vector<8x32xf32>
    %316 = vector.shape_cast %292 : vector<8x1xi1> to vector<8x1xi1>
    %317 = vector.broadcast %316 : vector<8x1xi1> to vector<8x32xi1>
    %318 = arith.select %317, %310, %250 : vector<8x32xi1>, vector<8x32xf32>
    %cst_111 = arith.constant 0.000000e+00 : f32
    %319 = vector.broadcast %cst_111 : f32 to vector<8x32xf32>
    %320 = vector.shape_cast %292 : vector<8x1xi1> to vector<8x1xi1>
    %321 = vector.broadcast %320 : vector<8x1xi1> to vector<8x32xi1>
    %322 = arith.select %321, %312, %319 : vector<8x32xi1>, vector<8x32xf32>
    %c0_112 = arith.constant 0 : index
    %c0_113 = arith.constant 0 : index
    %323 = vector.load %arg9[%c0_112, %c0_113] : memref<32x128xf32, #tpu.memory_space<vmem>>, vector<32x128xf32>
    %cst_114 = arith.constant dense<0.000000e+00> : vector<8x128xf32>
    %324 = tpu.matmul %322, %323, %cst_114 {dimension_numbers = #tpu.dot_dimension_numbers<[1], [0], [0], [1], [0, 0, 1, 1], [], []>} : vector<8x32xf32>, vector<32x128xf32>, vector<8x128xf32> -> vector<8x128xf32>
    %c0_115 = arith.constant 0 : index
    %c0_116 = arith.constant 0 : index
    %325 = vector.load %arg10[%c0_115, %c0_116] : memref<32x128xf32, #tpu.memory_space<vmem>>, vector<32x128xf32>
    %cst_117 = arith.constant dense<0.000000e+00> : vector<8x128xf32>
    %326 = tpu.matmul %280, %325, %cst_117 {dimension_numbers = #tpu.dot_dimension_numbers<[1], [0], [0], [1], [0, 0, 1, 1], [], []>} : vector<8x32xf32>, vector<32x128xf32>, vector<8x128xf32> -> vector<8x128xf32>
    %327 = arith.addf %324, %326 : vector<8x128xf32>
    %c0_118 = arith.constant 0 : index
    %c0_119 = arith.constant 0 : index
    %328 = vector.load %arg11[%c0_118, %c0_119] : memref<1x128xf32, #tpu.memory_space<vmem>>, vector<1x128xf32>
    %329 = vector.broadcast %328 : vector<1x128xf32> to vector<8x128xf32>
    %330 = arith.addf %327, %329 : vector<8x128xf32>
    %331 = arith.negf %330 : vector<8x128xf32>
    %332 = math.exp %331 : vector<8x128xf32>
    %cst_120 = arith.constant 1.000000e+00 : f32
    %333 = vector.broadcast %cst_120 : f32 to vector<8x128xf32>
    %334 = arith.addf %333, %332 : vector<8x128xf32>
    %335 = arith.divf %333, %334 : vector<8x128xf32>
    %336 = math.tanh %330 : vector<8x128xf32>
    %337 = vector.extract_strided_slice %335 {offsets = [0, 0], sizes = [8, 32], strides = [1, 1]} : vector<8x128xf32> to vector<8x32xf32>
    %338 = vector.extract_strided_slice %335 {offsets = [0, 32], sizes = [8, 32], strides = [1, 1]} : vector<8x128xf32> to vector<8x32xf32>
    %339 = vector.extract_strided_slice %336 {offsets = [0, 64], sizes = [8, 32], strides = [1, 1]} : vector<8x128xf32> to vector<8x32xf32>
    %340 = vector.extract_strided_slice %335 {offsets = [0, 96], sizes = [8, 32], strides = [1, 1]} : vector<8x128xf32> to vector<8x32xf32>
    %341 = arith.mulf %338, %283 : vector<8x32xf32>
    %342 = arith.mulf %337, %339 : vector<8x32xf32>
    %343 = arith.addf %341, %342 : vector<8x32xf32>
    %344 = math.tanh %343 : vector<8x32xf32>
    %345 = arith.mulf %340, %344 : vector<8x32xf32>
    %346 = vector.shape_cast %292 : vector<8x1xi1> to vector<8x1xi1>
    %347 = vector.broadcast %346 : vector<8x1xi1> to vector<8x32xi1>
    %348 = arith.select %347, %345, %280 : vector<8x32xi1>, vector<8x32xf32>
    %349 = vector.shape_cast %292 : vector<8x1xi1> to vector<8x1xi1>
    %350 = vector.broadcast %349 : vector<8x1xi1> to vector<8x32xi1>
    %351 = arith.select %350, %343, %283 : vector<8x32xi1>, vector<8x32xf32>
    %cst_121 = arith.constant 0.000000e+00 : f32
    %352 = vector.broadcast %cst_121 : f32 to vector<8x32xf32>
    %353 = vector.shape_cast %292 : vector<8x1xi1> to vector<8x1xi1>
    %354 = vector.broadcast %353 : vector<8x1xi1> to vector<8x32xi1>
    %355 = arith.select %354, %345, %352 : vector<8x32xi1>, vector<8x32xf32>
    %c4_122 = arith.constant 4 : index
    %c0_123 = arith.constant 0 : index
    %c0_124 = arith.constant 0 : index
    %356 = vector.load %arg16[%c4_122, %c0_123, %c0_124] : memref<8x8x32xf32, #tpu.memory_space<vmem>>, vector<1x8x32xf32>
    %357 = vector.shape_cast %356 : vector<1x8x32xf32> to vector<8x32xf32>
    %358 = vector.shape_cast %355 : vector<8x32xf32> to vector<1x8x32xf32>
    tpu.vector_store %arg16[%c4_122, %c0_123, %c0_124], %358 {strides = array<i32>} : memref<8x8x32xf32, #tpu.memory_space<vmem>>, vector<1x8x32xf32>,
    %c5_i32 = arith.constant 5 : i32
    %359 = vector.broadcast %c5_i32 : i32 to vector<8x1xi32>
    %360 = arith.cmpi sgt, %1, %359 : vector<8x1xi32>
    %c5 = arith.constant 5 : index
    %c0_125 = arith.constant 0 : index
    %c0_126 = arith.constant 0 : index
    %361 = vector.load %arg15[%c5, %c0_125, %c0_126] : memref<8x8x128xf32, #tpu.memory_space<vmem>>, vector<1x8x128xf32>
    %362 = vector.shape_cast %361 : vector<1x8x128xf32> to vector<8x128xf32>
    %c0_127 = arith.constant 0 : index
    %c0_128 = arith.constant 0 : index
    %363 = vector.load %arg7[%c0_127, %c0_128] : memref<32x128xf32, #tpu.memory_space<vmem>>, vector<32x128xf32>
    %cst_129 = arith.constant dense<0.000000e+00> : vector<8x128xf32>
    %364 = tpu.matmul %315, %363, %cst_129 {dimension_numbers = #tpu.dot_dimension_numbers<[1], [0], [0], [1], [0, 0, 1, 1], [], []>} : vector<8x32xf32>, vector<32x128xf32>, vector<8x128xf32> -> vector<8x128xf32>
    %365 = arith.addf %362, %364 : vector<8x128xf32>
    %366 = arith.negf %365 : vector<8x128xf32>
    %367 = math.exp %366 : vector<8x128xf32>
    %cst_130 = arith.constant 1.000000e+00 : f32
    %368 = vector.broadcast %cst_130 : f32 to vector<8x128xf32>
    %369 = arith.addf %368, %367 : vector<8x128xf32>
    %370 = arith.divf %368, %369 : vector<8x128xf32>
    %371 = math.tanh %365 : vector<8x128xf32>
    %372 = vector.extract_strided_slice %370 {offsets = [0, 0], sizes = [8, 32], strides = [1, 1]} : vector<8x128xf32> to vector<8x32xf32>
    %373 = vector.extract_strided_slice %370 {offsets = [0, 32], sizes = [8, 32], strides = [1, 1]} : vector<8x128xf32> to vector<8x32xf32>
    %374 = vector.extract_strided_slice %371 {offsets = [0, 64], sizes = [8, 32], strides = [1, 1]} : vector<8x128xf32> to vector<8x32xf32>
    %375 = vector.extract_strided_slice %370 {offsets = [0, 96], sizes = [8, 32], strides = [1, 1]} : vector<8x128xf32> to vector<8x32xf32>
    %376 = arith.mulf %373, %318 : vector<8x32xf32>
    %377 = arith.mulf %372, %374 : vector<8x32xf32>
    %378 = arith.addf %376, %377 : vector<8x32xf32>
    %379 = math.tanh %378 : vector<8x32xf32>
    %380 = arith.mulf %375, %379 : vector<8x32xf32>
    %381 = vector.shape_cast %360 : vector<8x1xi1> to vector<8x1xi1>
    %382 = vector.broadcast %381 : vector<8x1xi1> to vector<8x32xi1>
    %383 = arith.select %382, %380, %315 : vector<8x32xi1>, vector<8x32xf32>
    %384 = vector.shape_cast %360 : vector<8x1xi1> to vector<8x1xi1>
    %385 = vector.broadcast %384 : vector<8x1xi1> to vector<8x32xi1>
    %386 = arith.select %385, %378, %318 : vector<8x32xi1>, vector<8x32xf32>
    %cst_131 = arith.constant 0.000000e+00 : f32
    %387 = vector.broadcast %cst_131 : f32 to vector<8x32xf32>
    %388 = vector.shape_cast %360 : vector<8x1xi1> to vector<8x1xi1>
    %389 = vector.broadcast %388 : vector<8x1xi1> to vector<8x32xi1>
    %390 = arith.select %389, %380, %387 : vector<8x32xi1>, vector<8x32xf32>
    %c0_132 = arith.constant 0 : index
    %c0_133 = arith.constant 0 : index
    %391 = vector.load %arg9[%c0_132, %c0_133] : memref<32x128xf32, #tpu.memory_space<vmem>>, vector<32x128xf32>
    %cst_134 = arith.constant dense<0.000000e+00> : vector<8x128xf32>
    %392 = tpu.matmul %390, %391, %cst_134 {dimension_numbers = #tpu.dot_dimension_numbers<[1], [0], [0], [1], [0, 0, 1, 1], [], []>} : vector<8x32xf32>, vector<32x128xf32>, vector<8x128xf32> -> vector<8x128xf32>
    %c0_135 = arith.constant 0 : index
    %c0_136 = arith.constant 0 : index
    %393 = vector.load %arg10[%c0_135, %c0_136] : memref<32x128xf32, #tpu.memory_space<vmem>>, vector<32x128xf32>
    %cst_137 = arith.constant dense<0.000000e+00> : vector<8x128xf32>
    %394 = tpu.matmul %348, %393, %cst_137 {dimension_numbers = #tpu.dot_dimension_numbers<[1], [0], [0], [1], [0, 0, 1, 1], [], []>} : vector<8x32xf32>, vector<32x128xf32>, vector<8x128xf32> -> vector<8x128xf32>
    %395 = arith.addf %392, %394 : vector<8x128xf32>
    %c0_138 = arith.constant 0 : index
    %c0_139 = arith.constant 0 : index
    %396 = vector.load %arg11[%c0_138, %c0_139] : memref<1x128xf32, #tpu.memory_space<vmem>>, vector<1x128xf32>
    %397 = vector.broadcast %396 : vector<1x128xf32> to vector<8x128xf32>
    %398 = arith.addf %395, %397 : vector<8x128xf32>
    %399 = arith.negf %398 : vector<8x128xf32>
    %400 = math.exp %399 : vector<8x128xf32>
    %cst_140 = arith.constant 1.000000e+00 : f32
    %401 = vector.broadcast %cst_140 : f32 to vector<8x128xf32>
    %402 = arith.addf %401, %400 : vector<8x128xf32>
    %403 = arith.divf %401, %402 : vector<8x128xf32>
    %404 = math.tanh %398 : vector<8x128xf32>
    %405 = vector.extract_strided_slice %403 {offsets = [0, 0], sizes = [8, 32], strides = [1, 1]} : vector<8x128xf32> to vector<8x32xf32>
    %406 = vector.extract_strided_slice %403 {offsets = [0, 32], sizes = [8, 32], strides = [1, 1]} : vector<8x128xf32> to vector<8x32xf32>
    %407 = vector.extract_strided_slice %404 {offsets = [0, 64], sizes = [8, 32], strides = [1, 1]} : vector<8x128xf32> to vector<8x32xf32>
    %408 = vector.extract_strided_slice %403 {offsets = [0, 96], sizes = [8, 32], strides = [1, 1]} : vector<8x128xf32> to vector<8x32xf32>
    %409 = arith.mulf %406, %351 : vector<8x32xf32>
    %410 = arith.mulf %405, %407 : vector<8x32xf32>
    %411 = arith.addf %409, %410 : vector<8x32xf32>
    %412 = math.tanh %411 : vector<8x32xf32>
    %413 = arith.mulf %408, %412 : vector<8x32xf32>
    %414 = vector.shape_cast %360 : vector<8x1xi1> to vector<8x1xi1>
    %415 = vector.broadcast %414 : vector<8x1xi1> to vector<8x32xi1>
    %416 = arith.select %415, %413, %348 : vector<8x32xi1>, vector<8x32xf32>
    %417 = vector.shape_cast %360 : vector<8x1xi1> to vector<8x1xi1>
    %418 = vector.broadcast %417 : vector<8x1xi1> to vector<8x32xi1>
    %419 = arith.select %418, %411, %351 : vector<8x32xi1>, vector<8x32xf32>
    %cst_141 = arith.constant 0.000000e+00 : f32
    %420 = vector.broadcast %cst_141 : f32 to vector<8x32xf32>
    %421 = vector.shape_cast %360 : vector<8x1xi1> to vector<8x1xi1>
    %422 = vector.broadcast %421 : vector<8x1xi1> to vector<8x32xi1>
    %423 = arith.select %422, %413, %420 : vector<8x32xi1>, vector<8x32xf32>
    %c5_142 = arith.constant 5 : index
    %c0_143 = arith.constant 0 : index
    %c0_144 = arith.constant 0 : index
    %424 = vector.load %arg16[%c5_142, %c0_143, %c0_144] : memref<8x8x32xf32, #tpu.memory_space<vmem>>, vector<1x8x32xf32>
    %425 = vector.shape_cast %424 : vector<1x8x32xf32> to vector<8x32xf32>
    %426 = vector.shape_cast %423 : vector<8x32xf32> to vector<1x8x32xf32>
    tpu.vector_store %arg16[%c5_142, %c0_143, %c0_144], %426 {strides = array<i32>} : memref<8x8x32xf32, #tpu.memory_space<vmem>>, vector<1x8x32xf32>,
    %c6_i32 = arith.constant 6 : i32
    %427 = vector.broadcast %c6_i32 : i32 to vector<8x1xi32>
    %428 = arith.cmpi sgt, %1, %427 : vector<8x1xi32>
    %c6 = arith.constant 6 : index
    %c0_145 = arith.constant 0 : index
    %c0_146 = arith.constant 0 : index
    %429 = vector.load %arg15[%c6, %c0_145, %c0_146] : memref<8x8x128xf32, #tpu.memory_space<vmem>>, vector<1x8x128xf32>
    %430 = vector.shape_cast %429 : vector<1x8x128xf32> to vector<8x128xf32>
    %c0_147 = arith.constant 0 : index
    %c0_148 = arith.constant 0 : index
    %431 = vector.load %arg7[%c0_147, %c0_148] : memref<32x128xf32, #tpu.memory_space<vmem>>, vector<32x128xf32>
    %cst_149 = arith.constant dense<0.000000e+00> : vector<8x128xf32>
    %432 = tpu.matmul %383, %431, %cst_149 {dimension_numbers = #tpu.dot_dimension_numbers<[1], [0], [0], [1], [0, 0, 1, 1], [], []>} : vector<8x32xf32>, vector<32x128xf32>, vector<8x128xf32> -> vector<8x128xf32>
    %433 = arith.addf %430, %432 : vector<8x128xf32>
    %434 = arith.negf %433 : vector<8x128xf32>
    %435 = math.exp %434 : vector<8x128xf32>
    %cst_150 = arith.constant 1.000000e+00 : f32
    %436 = vector.broadcast %cst_150 : f32 to vector<8x128xf32>
    %437 = arith.addf %436, %435 : vector<8x128xf32>
    %438 = arith.divf %436, %437 : vector<8x128xf32>
    %439 = math.tanh %433 : vector<8x128xf32>
    %440 = vector.extract_strided_slice %438 {offsets = [0, 0], sizes = [8, 32], strides = [1, 1]} : vector<8x128xf32> to vector<8x32xf32>
    %441 = vector.extract_strided_slice %438 {offsets = [0, 32], sizes = [8, 32], strides = [1, 1]} : vector<8x128xf32> to vector<8x32xf32>
    %442 = vector.extract_strided_slice %439 {offsets = [0, 64], sizes = [8, 32], strides = [1, 1]} : vector<8x128xf32> to vector<8x32xf32>
    %443 = vector.extract_strided_slice %438 {offsets = [0, 96], sizes = [8, 32], strides = [1, 1]} : vector<8x128xf32> to vector<8x32xf32>
    %444 = arith.mulf %441, %386 : vector<8x32xf32>
    %445 = arith.mulf %440, %442 : vector<8x32xf32>
    %446 = arith.addf %444, %445 : vector<8x32xf32>
    %447 = math.tanh %446 : vector<8x32xf32>
    %448 = arith.mulf %443, %447 : vector<8x32xf32>
    %449 = vector.shape_cast %428 : vector<8x1xi1> to vector<8x1xi1>
    %450 = vector.broadcast %449 : vector<8x1xi1> to vector<8x32xi1>
    %451 = arith.select %450, %448, %383 : vector<8x32xi1>, vector<8x32xf32>
    %452 = vector.shape_cast %428 : vector<8x1xi1> to vector<8x1xi1>
    %453 = vector.broadcast %452 : vector<8x1xi1> to vector<8x32xi1>
    %454 = arith.select %453, %446, %386 : vector<8x32xi1>, vector<8x32xf32>
    %cst_151 = arith.constant 0.000000e+00 : f32
    %455 = vector.broadcast %cst_151 : f32 to vector<8x32xf32>
    %456 = vector.shape_cast %428 : vector<8x1xi1> to vector<8x1xi1>
    %457 = vector.broadcast %456 : vector<8x1xi1> to vector<8x32xi1>
    %458 = arith.select %457, %448, %455 : vector<8x32xi1>, vector<8x32xf32>
    %c0_152 = arith.constant 0 : index
    %c0_153 = arith.constant 0 : index
    %459 = vector.load %arg9[%c0_152, %c0_153] : memref<32x128xf32, #tpu.memory_space<vmem>>, vector<32x128xf32>
    %cst_154 = arith.constant dense<0.000000e+00> : vector<8x128xf32>
    %460 = tpu.matmul %458, %459, %cst_154 {dimension_numbers = #tpu.dot_dimension_numbers<[1], [0], [0], [1], [0, 0, 1, 1], [], []>} : vector<8x32xf32>, vector<32x128xf32>, vector<8x128xf32> -> vector<8x128xf32>
    %c0_155 = arith.constant 0 : index
    %c0_156 = arith.constant 0 : index
    %461 = vector.load %arg10[%c0_155, %c0_156] : memref<32x128xf32, #tpu.memory_space<vmem>>, vector<32x128xf32>
    %cst_157 = arith.constant dense<0.000000e+00> : vector<8x128xf32>
    %462 = tpu.matmul %416, %461, %cst_157 {dimension_numbers = #tpu.dot_dimension_numbers<[1], [0], [0], [1], [0, 0, 1, 1], [], []>} : vector<8x32xf32>, vector<32x128xf32>, vector<8x128xf32> -> vector<8x128xf32>
    %463 = arith.addf %460, %462 : vector<8x128xf32>
    %c0_158 = arith.constant 0 : index
    %c0_159 = arith.constant 0 : index
    %464 = vector.load %arg11[%c0_158, %c0_159] : memref<1x128xf32, #tpu.memory_space<vmem>>, vector<1x128xf32>
    %465 = vector.broadcast %464 : vector<1x128xf32> to vector<8x128xf32>
    %466 = arith.addf %463, %465 : vector<8x128xf32>
    %467 = arith.negf %466 : vector<8x128xf32>
    %468 = math.exp %467 : vector<8x128xf32>
    %cst_160 = arith.constant 1.000000e+00 : f32
    %469 = vector.broadcast %cst_160 : f32 to vector<8x128xf32>
    %470 = arith.addf %469, %468 : vector<8x128xf32>
    %471 = arith.divf %469, %470 : vector<8x128xf32>
    %472 = math.tanh %466 : vector<8x128xf32>
    %473 = vector.extract_strided_slice %471 {offsets = [0, 0], sizes = [8, 32], strides = [1, 1]} : vector<8x128xf32> to vector<8x32xf32>
    %474 = vector.extract_strided_slice %471 {offsets = [0, 32], sizes = [8, 32], strides = [1, 1]} : vector<8x128xf32> to vector<8x32xf32>
    %475 = vector.extract_strided_slice %472 {offsets = [0, 64], sizes = [8, 32], strides = [1, 1]} : vector<8x128xf32> to vector<8x32xf32>
    %476 = vector.extract_strided_slice %471 {offsets = [0, 96], sizes = [8, 32], strides = [1, 1]} : vector<8x128xf32> to vector<8x32xf32>
    %477 = arith.mulf %474, %419 : vector<8x32xf32>
    %478 = arith.mulf %473, %475 : vector<8x32xf32>
    %479 = arith.addf %477, %478 : vector<8x32xf32>
    %480 = math.tanh %479 : vector<8x32xf32>
    %481 = arith.mulf %476, %480 : vector<8x32xf32>
    %482 = vector.shape_cast %428 : vector<8x1xi1> to vector<8x1xi1>
    %483 = vector.broadcast %482 : vector<8x1xi1> to vector<8x32xi1>
    %484 = arith.select %483, %481, %416 : vector<8x32xi1>, vector<8x32xf32>
    %485 = vector.shape_cast %428 : vector<8x1xi1> to vector<8x1xi1>
    %486 = vector.broadcast %485 : vector<8x1xi1> to vector<8x32xi1>
    %487 = arith.select %486, %479, %419 : vector<8x32xi1>, vector<8x32xf32>
    %cst_161 = arith.constant 0.000000e+00 : f32
    %488 = vector.broadcast %cst_161 : f32 to vector<8x32xf32>
    %489 = vector.shape_cast %428 : vector<8x1xi1> to vector<8x1xi1>
    %490 = vector.broadcast %489 : vector<8x1xi1> to vector<8x32xi1>
    %491 = arith.select %490, %481, %488 : vector<8x32xi1>, vector<8x32xf32>
    %c6_162 = arith.constant 6 : index
    %c0_163 = arith.constant 0 : index
    %c0_164 = arith.constant 0 : index
    %492 = vector.load %arg16[%c6_162, %c0_163, %c0_164] : memref<8x8x32xf32, #tpu.memory_space<vmem>>, vector<1x8x32xf32>
    %493 = vector.shape_cast %492 : vector<1x8x32xf32> to vector<8x32xf32>
    %494 = vector.shape_cast %491 : vector<8x32xf32> to vector<1x8x32xf32>
    tpu.vector_store %arg16[%c6_162, %c0_163, %c0_164], %494 {strides = array<i32>} : memref<8x8x32xf32, #tpu.memory_space<vmem>>, vector<1x8x32xf32>,
    %c7_i32 = arith.constant 7 : i32
    %495 = vector.broadcast %c7_i32 : i32 to vector<8x1xi32>
    %496 = arith.cmpi sgt, %1, %495 : vector<8x1xi32>
    %c7 = arith.constant 7 : index
    %c0_165 = arith.constant 0 : index
    %c0_166 = arith.constant 0 : index
    %497 = vector.load %arg15[%c7, %c0_165, %c0_166] : memref<8x8x128xf32, #tpu.memory_space<vmem>>, vector<1x8x128xf32>
    %498 = vector.shape_cast %497 : vector<1x8x128xf32> to vector<8x128xf32>
    %c0_167 = arith.constant 0 : index
    %c0_168 = arith.constant 0 : index
    %499 = vector.load %arg7[%c0_167, %c0_168] : memref<32x128xf32, #tpu.memory_space<vmem>>, vector<32x128xf32>
    %cst_169 = arith.constant dense<0.000000e+00> : vector<8x128xf32>
    %500 = tpu.matmul %451, %499, %cst_169 {dimension_numbers = #tpu.dot_dimension_numbers<[1], [0], [0], [1], [0, 0, 1, 1], [], []>} : vector<8x32xf32>, vector<32x128xf32>, vector<8x128xf32> -> vector<8x128xf32>
    %501 = arith.addf %498, %500 : vector<8x128xf32>
    %502 = arith.negf %501 : vector<8x128xf32>
    %503 = math.exp %502 : vector<8x128xf32>
    %cst_170 = arith.constant 1.000000e+00 : f32
    %504 = vector.broadcast %cst_170 : f32 to vector<8x128xf32>
    %505 = arith.addf %504, %503 : vector<8x128xf32>
    %506 = arith.divf %504, %505 : vector<8x128xf32>
    %507 = math.tanh %501 : vector<8x128xf32>
    %508 = vector.extract_strided_slice %506 {offsets = [0, 0], sizes = [8, 32], strides = [1, 1]} : vector<8x128xf32> to vector<8x32xf32>
    %509 = vector.extract_strided_slice %506 {offsets = [0, 32], sizes = [8, 32], strides = [1, 1]} : vector<8x128xf32> to vector<8x32xf32>
    %510 = vector.extract_strided_slice %507 {offsets = [0, 64], sizes = [8, 32], strides = [1, 1]} : vector<8x128xf32> to vector<8x32xf32>
    %511 = vector.extract_strided_slice %506 {offsets = [0, 96], sizes = [8, 32], strides = [1, 1]} : vector<8x128xf32> to vector<8x32xf32>
    %512 = arith.mulf %509, %454 : vector<8x32xf32>
    %513 = arith.mulf %508, %510 : vector<8x32xf32>
    %514 = arith.addf %512, %513 : vector<8x32xf32>
    %515 = math.tanh %514 : vector<8x32xf32>
    %516 = arith.mulf %511, %515 : vector<8x32xf32>
    %cst_171 = arith.constant 0.000000e+00 : f32
    %517 = vector.broadcast %cst_171 : f32 to vector<8x32xf32>
    %518 = vector.shape_cast %496 : vector<8x1xi1> to vector<8x1xi1>
    %519 = vector.broadcast %518 : vector<8x1xi1> to vector<8x32xi1>
    %520 = arith.select %519, %516, %517 : vector<8x32xi1>, vector<8x32xf32>
    %c0_172 = arith.constant 0 : index
    %c0_173 = arith.constant 0 : index
    %521 = vector.load %arg9[%c0_172, %c0_173] : memref<32x128xf32, #tpu.memory_space<vmem>>, vector<32x128xf32>
    %cst_174 = arith.constant dense<0.000000e+00> : vector<8x128xf32>
    %522 = tpu.matmul %520, %521, %cst_174 {dimension_numbers = #tpu.dot_dimension_numbers<[1], [0], [0], [1], [0, 0, 1, 1], [], []>} : vector<8x32xf32>, vector<32x128xf32>, vector<8x128xf32> -> vector<8x128xf32>
    %c0_175 = arith.constant 0 : index
    %c0_176 = arith.constant 0 : index
    %523 = vector.load %arg10[%c0_175, %c0_176] : memref<32x128xf32, #tpu.memory_space<vmem>>, vector<32x128xf32>
    %cst_177 = arith.constant dense<0.000000e+00> : vector<8x128xf32>
    %524 = tpu.matmul %484, %523, %cst_177 {dimension_numbers = #tpu.dot_dimension_numbers<[1], [0], [0], [1], [0, 0, 1, 1], [], []>} : vector<8x32xf32>, vector<32x128xf32>, vector<8x128xf32> -> vector<8x128xf32>
    %525 = arith.addf %522, %524 : vector<8x128xf32>
    %c0_178 = arith.constant 0 : index
    %c0_179 = arith.constant 0 : index
    %526 = vector.load %arg11[%c0_178, %c0_179] : memref<1x128xf32, #tpu.memory_space<vmem>>, vector<1x128xf32>
    %527 = vector.broadcast %526 : vector<1x128xf32> to vector<8x128xf32>
    %528 = arith.addf %525, %527 : vector<8x128xf32>
    %529 = arith.negf %528 : vector<8x128xf32>
    %530 = math.exp %529 : vector<8x128xf32>
    %cst_180 = arith.constant 1.000000e+00 : f32
    %531 = vector.broadcast %cst_180 : f32 to vector<8x128xf32>
    %532 = arith.addf %531, %530 : vector<8x128xf32>
    %533 = arith.divf %531, %532 : vector<8x128xf32>
    %534 = math.tanh %528 : vector<8x128xf32>
    %535 = vector.extract_strided_slice %533 {offsets = [0, 0], sizes = [8, 32], strides = [1, 1]} : vector<8x128xf32> to vector<8x32xf32>
    %536 = vector.extract_strided_slice %533 {offsets = [0, 32], sizes = [8, 32], strides = [1, 1]} : vector<8x128xf32> to vector<8x32xf32>
    %537 = vector.extract_strided_slice %534 {offsets = [0, 64], sizes = [8, 32], strides = [1, 1]} : vector<8x128xf32> to vector<8x32xf32>
    %538 = vector.extract_strided_slice %533 {offsets = [0, 96], sizes = [8, 32], strides = [1, 1]} : vector<8x128xf32> to vector<8x32xf32>
    %539 = arith.mulf %536, %487 : vector<8x32xf32>
    %540 = arith.mulf %535, %537 : vector<8x32xf32>
    %541 = arith.addf %539, %540 : vector<8x32xf32>
    %542 = math.tanh %541 : vector<8x32xf32>
    %543 = arith.mulf %538, %542 : vector<8x32xf32>
    %cst_181 = arith.constant 0.000000e+00 : f32
    %544 = vector.broadcast %cst_181 : f32 to vector<8x32xf32>
    %545 = vector.shape_cast %496 : vector<8x1xi1> to vector<8x1xi1>
    %546 = vector.broadcast %545 : vector<8x1xi1> to vector<8x32xi1>
    %547 = arith.select %546, %543, %544 : vector<8x32xi1>, vector<8x32xf32>
    %c7_182 = arith.constant 7 : index
    %c0_183 = arith.constant 0 : index
    %c0_184 = arith.constant 0 : index
    %548 = vector.load %arg16[%c7_182, %c0_183, %c0_184] : memref<8x8x32xf32, #tpu.memory_space<vmem>>, vector<1x8x32xf32>
    %549 = vector.shape_cast %548 : vector<1x8x32xf32> to vector<8x32xf32>
    %550 = vector.shape_cast %547 : vector<8x32xf32> to vector<1x8x32xf32>
    tpu.vector_store %arg16[%c7_182, %c0_183, %c0_184], %550 {strides = array<i32>} : memref<8x8x32xf32, #tpu.memory_space<vmem>>, vector<1x8x32xf32>,
    %c0_185 = arith.constant 0 : index
    %c0_186 = arith.constant 0 : index
    %c0_187 = arith.constant 0 : index
    %551 = vector.load %arg16[%c0_185, %c0_186, %c0_187] : memref<8x8x32xf32, #tpu.memory_space<vmem>>, vector<8x8x32xf32>
    %552 = vector.shape_cast %551 : vector<8x8x32xf32> to vector<64x32xf32>
    %c0_188 = arith.constant 0 : index
    %c0_189 = arith.constant 0 : index
    %553 = vector.load %arg12[%c0_188, %c0_189] : memref<32x8xf32, #tpu.memory_space<vmem>>, vector<32x8xf32>
    %cst_190 = arith.constant dense<0.000000e+00> : vector<64x8xf32>
    %554 = tpu.matmul %552, %553, %cst_190 {dimension_numbers = #tpu.dot_dimension_numbers<[1], [0], [0], [1], [0, 0, 1, 1], [], []>} : vector<64x32xf32>, vector<32x8xf32>, vector<64x8xf32> -> vector<64x8xf32>
    %c0_191 = arith.constant 0 : index
    %c0_192 = arith.constant 0 : index
    %555 = vector.load %arg13[%c0_191, %c0_192] : memref<1x8xf32, #tpu.memory_space<vmem>>, vector<1x8xf32>
    %556 = vector.broadcast %555 : vector<1x8xf32> to vector<64x8xf32>
    %557 = arith.addf %554, %556 : vector<64x8xf32>
    %558 = tpu.iota {dimensions = array<i32: 0>} : vector<64x1xi32>
    %c8_i32 = arith.constant 8 : i32
    %559 = arith.muli %0, %c8_i32 : i32
    %560 = vector.broadcast %559 : i32 to vector<64x1xi32>
    %561 = arith.cmpi slt, %558, %560 : vector<64x1xi32>
    %cst_193 = arith.constant 0.000000e+00 : f32
    %562 = vector.shape_cast %561 : vector<64x1xi1> to vector<64x1xi1>
    %563 = vector.broadcast %562 : vector<64x1xi1> to vector<64x8xi1>
    %564 = vector.broadcast %cst_193 : f32 to vector<64x8xf32>
    %565 = arith.select %563, %557, %564 : vector<64x8xi1>, vector<64x8xf32>
    %566 = vector.shape_cast %565 : vector<64x8xf32> to vector<8x8x8xf32>
    %c0_194 = arith.constant 0 : index
    %c0_195 = arith.constant 0 : index
    %c0_196 = arith.constant 0 : index
    %567 = vector.load %arg14[%c0_194, %c0_195, %c0_196] : memref<8x8x8xf32, #tpu.memory_space<vmem>>, vector<8x8x8xf32>
    tpu.vector_store %arg14[%c0_194, %c0_195, %c0_196], %566 {strides = array<i32>} : memref<8x8x8xf32, #tpu.memory_space<vmem>>, vector<8x8x8xf32>,
    return
  }
  func.func @transform_0(%arg0: i32, %arg1: memref<1xi32, #tpu.memory_space<smem>>) -> (i32, i32) {
    %c0_i32 = arith.constant 0 : i32
    %c0_i32_0 = arith.constant 0 : i32
    %c0_i32_1 = arith.constant 0 : i32
    return %c0_i32, %c0_i32_0 : i32, i32
  }
  func.func @transform_1(%arg0: i32, %arg1: memref<1xi32, #tpu.memory_space<smem>>) -> (i32, i32, i32) {
    %c0_i32 = arith.constant 0 : i32
    %c0_i32_0 = arith.constant 0 : i32
    %c0_i32_1 = arith.constant 0 : i32
    %c0_i32_2 = arith.constant 0 : i32
    return %c0_i32, %c0_i32_0, %c0_i32_1 : i32, i32, i32
  }
  func.func @transform_2(%arg0: i32, %arg1: memref<1xi32, #tpu.memory_space<smem>>) -> (i32, i32, i32) {
    %c0_i32 = arith.constant 0 : i32
    %c0_i32_0 = arith.constant 0 : i32
    %c0_i32_1 = arith.constant 0 : i32
    %c0_i32_2 = arith.constant 0 : i32
    return %c0_i32, %c0_i32_0, %c0_i32_1 : i32, i32, i32
  }
  func.func @transform_3(%arg0: i32, %arg1: memref<1xi32, #tpu.memory_space<smem>>) -> (i32, i32, i32) {
    %c0_i32 = arith.constant 0 : i32
    %c0_i32_0 = arith.constant 0 : i32
    %c0_i32_1 = arith.constant 0 : i32
    %c0_i32_2 = arith.constant 0 : i32
    return %c0_i32, %c0_i32_0, %c0_i32_1 : i32, i32, i32
  }
  func.func @transform_4(%arg0: i32, %arg1: memref<1xi32, #tpu.memory_space<smem>>) -> (i32, i32) {
    %c0_i32 = arith.constant 0 : i32
    %c0_i32_0 = arith.constant 0 : i32
    %c0_i32_1 = arith.constant 0 : i32
    return %c0_i32, %c0_i32_0 : i32, i32
  }
  func.func @transform_5(%arg0: i32, %arg1: memref<1xi32, #tpu.memory_space<smem>>) -> (i32, i32) {
    %c0_i32 = arith.constant 0 : i32
    %c0_i32_0 = arith.constant 0 : i32
    %c0_i32_1 = arith.constant 0 : i32
    return %c0_i32, %c0_i32_0 : i32, i32
  }
  func.func @transform_6(%arg0: i32, %arg1: memref<1xi32, #tpu.memory_space<smem>>) -> (i32, i32) {
    %c0_i32 = arith.constant 0 : i32
    %c0_i32_0 = arith.constant 0 : i32
    %c0_i32_1 = arith.constant 0 : i32
    return %c0_i32, %c0_i32_0 : i32, i32
  }
  func.func @transform_7(%arg0: i32, %arg1: memref<1xi32, #tpu.memory_space<smem>>) -> (i32, i32) {
    %c0_i32 = arith.constant 0 : i32
    %c0_i32_0 = arith.constant 0 : i32
    %c0_i32_1 = arith.constant 0 : i32
    return %c0_i32, %c0_i32_0 : i32, i32
  }
  func.func @transform_8(%arg0: i32, %arg1: memref<1xi32, #tpu.memory_space<smem>>) -> (i32, i32) {
    %c0_i32 = arith.constant 0 : i32
    %c0_i32_0 = arith.constant 0 : i32
    %c0_i32_1 = arith.constant 0 : i32
    return %c0_i32, %c0_i32_0 : i32, i32
  }
  func.func @transform_9(%arg0: i32, %arg1: memref<1xi32, #tpu.memory_space<smem>>) -> (i32, i32) {
    %c0_i32 = arith.constant 0 : i32
    %c0_i32_0 = arith.constant 0 : i32
    %c0_i32_1 = arith.constant 0 : i32
    return %c0_i32, %c0_i32_0 : i32, i32
  }
  func.func @transform_10(%arg0: i32, %arg1: memref<1xi32, #tpu.memory_space<smem>>) -> (i32, i32) {
    %c0_i32 = arith.constant 0 : i32
    %c0_i32_0 = arith.constant 0 : i32
    %c0_i32_1 = arith.constant 0 : i32
    return %c0_i32, %c0_i32_0 : i32, i32
  }
  func.func @transform_11(%arg0: i32, %arg1: memref<1xi32, #tpu.memory_space<smem>>) -> (i32, i32) {
    %c0_i32 = arith.constant 0 : i32
    %c0_i32_0 = arith.constant 0 : i32
    %c0_i32_1 = arith.constant 0 : i32
    return %c0_i32, %c0_i32_0 : i32, i32
  }
  func.func @transform_12(%arg0: i32, %arg1: memref<1xi32, #tpu.memory_space<smem>>) -> (i32, i32, i32) {
    %c0_i32 = arith.constant 0 : i32
    %c0_i32_0 = arith.constant 0 : i32
    %c0_i32_1 = arith.constant 0 : i32
    %c0_i32_2 = arith.constant 0 : i32
    return %c0_i32, %c0_i32_0, %c0_i32_1 : i32, i32, i32
  }
}

</mosaic_0001>

<llo_original>
// kernel: tpu_custom_call.1
$region0: #{tpu_custom_call.1}
  #allocation0 [shape = 'u32[]', space=smem, size = 0x4, offset = 0x4, fixed_abs, tag = 'smem constant byte address 0x4 - core index']
  #allocation1 [shape = 'u32[144,128]{1,0:T(1,128)}', space=vmem, size = 0x12000, scoped, tag = 'internal scratch']
  #allocation2 [shape = 'f32[8,8,128]{2,1,0:T(8,128)}', space=vmem, size = 0x8000, scoped, tag = 'scratch operand']
  #allocation3 [shape = 'f32[8,8,32]{2,1,0:T(8,128)}', space=vmem, size = 0x8000, scoped, tag = 'scratch operand']
  #allocation4 [shape = 's32[1]{0}', space=sflag, size = 0x4, scoped, tag = 'scoped memory for tpu_custom_call.1']
  #allocation5 [shape = 's32[1]{0:T(128)S(6)}', space=smem, size = 0x200, scoped, tag = 'prefetched SMEM operand 0']
  %s0 = inlined_call_operand.<no memory space> [shape: s32[1], index: 0, kind: input, shape index: {}]
  %s1 = inlined_call_operand.vmem [shape: s32[8,1], index: 1, kind: input, shape index: {}]
  %s2 = inlined_call_operand.hbm [shape: f32[8,8,16], index: 2, kind: input, shape index: {}]
  %s3 = inlined_call_operand.hbm [shape: f32[2,8,32], index: 3, kind: input, shape index: {}]
  %s4 = inlined_call_operand.hbm [shape: f32[2,8,32], index: 4, kind: input, shape index: {}]
  %s5 = inlined_call_operand.hbm [shape: f32[16,128], index: 5, kind: input, shape index: {}]
  %s6 = inlined_call_operand.vmem [shape: f32[32,128], index: 6, kind: input, shape index: {}]
  %s7 = inlined_call_operand.vmem [shape: f32[1,128], index: 7, kind: input, shape index: {}]
  %s8 = inlined_call_operand.vmem [shape: f32[32,128], index: 8, kind: input, shape index: {}]
  %s9 = inlined_call_operand.hbm [shape: f32[32,128], index: 9, kind: input, shape index: {}]
  %s10 = inlined_call_operand.vmem [shape: f32[1,128], index: 10, kind: input, shape index: {}]
  %s11 = inlined_call_operand.vmem [shape: f32[32,8], index: 11, kind: input, shape index: {}]
  %s12 = inlined_call_operand.vmem [shape: f32[1,8], index: 12, kind: input, shape index: {}]
  %s13 = inlined_call_operand.hbm [shape: f32[8,8,8], index: 13, kind: output, shape index: {}]
  %s14 = sld [smem:[#allocation0]]
  $region78: #{tpu_custom_call.1} parent=0
    _
  %s16 = ssub.s32 1, %s14
  %s17 = scalar_select 0, %s16, %s14
  %18 = sst [smem:[#allocation5]] %s0
  $region1: #{tpu_custom_call.1} parent=0
    #allocation6 [shape = 'u8[32768]{0}', space=vmem, size = 0x8000, scoped, tag = 'input window, operand 2, single buffered']
    #allocation7 [shape = 's32[1]{0}', space=sflag, size = 0x4, scoped, tag = 'scoped memory for tpu_custom_call.1']
    #allocation8 [shape = 's32[1]{0}', space=sflag, size = 0x4, scoped, tag = 'scoped memory for tpu_custom_call.1']
    #allocation9 [shape = 'u8[8192]{0}', space=vmem, size = 0x2000, scoped, tag = 'input window, operand 3, single buffered']
    #allocation10 [shape = 's32[1]{0}', space=sflag, size = 0x4, scoped, tag = 'scoped memory for tpu_custom_call.1']
    #allocation11 [shape = 'u8[8192]{0}', space=vmem, size = 0x2000, scoped, tag = 'input window, operand 4, single buffered']
    #allocation12 [shape = 'u8[8192]{0}', space=vmem, size = 0x2000, scoped, tag = 'input window, operand 5, single buffered']
    #allocation13 [shape = 's32[1]{0}', space=sflag, size = 0x4, scoped, tag = 'scoped memory for tpu_custom_call.1']
    #allocation14 [shape = 'u8[16384]{0}', space=vmem, size = 0x4000, scoped, tag = 'input window, operand 9, single buffered']
    #allocation15 [shape = 'u8[32768]{0}', space=vmem, size = 0x8000, scoped, tag = 'output window, operand 0, single buffered']
    %19 = vsyncpa [#allocation7], 0
    %20 = vsyncpa [#allocation10], 0
    %21 = vsyncpa [#allocation13], 0
    %22 = vsyncpa [#allocation8], 0
    // Predicated region
    $region2: #{tpu_custom_call.1} parent=1 // pred_check
      _
    $region3: #{tpu_custom_call.1} parent=1 // pred_check_branch
      %24 = sbr.rel (0) target = $region5
    $region4: #{tpu_custom_call.1} parent=1 // pred_region
      _
    $region5: #{tpu_custom_call.1} parent=1 // pred_fallthru
      _
    // Predicated region
    $region6: #{tpu_custom_call.1} parent=1 // pred_check
      _
    $region7: #{tpu_custom_call.1} parent=1 // pred_check_branch
      %26 = sbr.rel (0) target = $region9
    $region8: #{tpu_custom_call.1} parent=1 // pred_region
      %s28 = ssub.s32 1024, 1024
      %29 = vsyncadd [#allocation7], %s28
      %s30 = sshll.u32 [#allocation6], 4
      %s31 = int_to_ptr.vmem [resolvable:$true] %s30
      %36 = dma.hbm_to_vmem [thread:$0]  %s2, 1024, %s31, [#allocation7], 128, 128, 8
    $region9: #{tpu_custom_call.1} parent=1 // pred_fallthru
      _
    // Predicated region
    $region10: #{tpu_custom_call.1} parent=1 // pred_check
      _
    $region11: #{tpu_custom_call.1} parent=1 // pred_check_branch
      %38 = sbr.rel (0) target = $region13
    $region12: #{tpu_custom_call.1} parent=1 // pred_region
      %s40 = ssub.s32 256, 256
      %41 = vsyncadd [#allocation10], %s40
      %s42 = sshll.u32 [#allocation9], 4
      %s43 = int_to_ptr.vmem [resolvable:$true] %s42
      %48 = dma.hbm_to_vmem [thread:$0]  %s3, 256, %s43, [#allocation10], 128, 128, 8
    $region13: #{tpu_custom_call.1} parent=1 // pred_fallthru
      _
    // Predicated region
    $region14: #{tpu_custom_call.1} parent=1 // pred_check
      _
    $region15: #{tpu_custom_call.1} parent=1 // pred_check_branch
      %50 = sbr.rel (0) target = $region17
    $region16: #{tpu_custom_call.1} parent=1 // pred_region
      %s52 = ssub.s32 256, 256
      %53 = vsyncadd [#allocation10], %s52
      %s54 = sshll.u32 [#allocation11], 4
      %s55 = int_to_ptr.vmem [resolvable:$true] %s54
      %60 = dma.hbm_to_vmem [thread:$0]  %s4, 256, %s55, [#allocation10], 128, 128, 8
    $region17: #{tpu_custom_call.1} parent=1 // pred_fallthru
      _
    // Predicated region
    $region18: #{tpu_custom_call.1} parent=1 // pred_check
      _
    $region19: #{tpu_custom_call.1} parent=1 // pred_check_branch
      %62 = sbr.rel (0) target = $region21
    $region20: #{tpu_custom_call.1} parent=1 // pred_region
      %s64 = ssub.s32 256, 256
      %65 = vsyncadd [#allocation13], %s64
      %s66 = sshll.u32 [#allocation12], 4
      %s67 = int_to_ptr.vmem [resolvable:$true] %s66
      %72 = dma.hbm_to_vmem [thread:$0]  %s5, 256, %s67, [#allocation13], 128, 128, 8
    $region21: #{tpu_custom_call.1} parent=1 // pred_fallthru
      _
    // Predicated region
    $region22: #{tpu_custom_call.1} parent=1 // pred_check
      _
    $region23: #{tpu_custom_call.1} parent=1 // pred_check_branch
      %74 = sbr.rel (0) target = $region25
    $region24: #{tpu_custom_call.1} parent=1 // pred_region
      _
    $region25: #{tpu_custom_call.1} parent=1 // pred_fallthru
      _
    // Predicated region
    $region26: #{tpu_custom_call.1} parent=1 // pred_check
      _
    $region27: #{tpu_custom_call.1} parent=1 // pred_check_branch
      %76 = sbr.rel (0) target = $region29
    $region28: #{tpu_custom_call.1} parent=1 // pred_region
      _
    $region29: #{tpu_custom_call.1} parent=1 // pred_fallthru
      _
    // Predicated region
    $region30: #{tpu_custom_call.1} parent=1 // pred_check
      _
    $region31: #{tpu_custom_call.1} parent=1 // pred_check_branch
      %78 = sbr.rel (0) target = $region33
    $region32: #{tpu_custom_call.1} parent=1 // pred_region
      _
    $region33: #{tpu_custom_call.1} parent=1 // pred_fallthru
      _
    // Predicated region
    $region34: #{tpu_custom_call.1} parent=1 // pred_check
      _
    $region35: #{tpu_custom_call.1} parent=1 // pred_check_branch
      %80 = sbr.rel (0) target = $region37
    $region36: #{tpu_custom_call.1} parent=1 // pred_region
      %s82 = ssub.s32 512, 512
      %83 = vsyncadd [#allocation13], %s82
      %s84 = sshll.u32 [#allocation14], 4
      %s85 = int_to_ptr.vmem [resolvable:$true] %s84
      %90 = dma.hbm_to_vmem [thread:$0]  %s9, 512, %s85, [#allocation13], 128, 128, 8
    $region37: #{tpu_custom_call.1} parent=1 // pred_fallthru
      _
    // Predicated region
    $region38: #{tpu_custom_call.1} parent=1 // pred_check
      _
    $region39: #{tpu_custom_call.1} parent=1 // pred_check_branch
      %92 = sbr.rel (0) target = $region41
    $region40: #{tpu_custom_call.1} parent=1 // pred_region
      _
    $region41: #{tpu_custom_call.1} parent=1 // pred_fallthru
      _
    // Predicated region
    $region42: #{tpu_custom_call.1} parent=1 // pred_check
      _
    $region43: #{tpu_custom_call.1} parent=1 // pred_check_branch
      %94 = sbr.rel (0) target = $region45
    $region44: #{tpu_custom_call.1} parent=1 // pred_region
      _
    $region45: #{tpu_custom_call.1} parent=1 // pred_fallthru
      _
    // Predicated region
    $region46: #{tpu_custom_call.1} parent=1 // pred_check
      _
    $region47: #{tpu_custom_call.1} parent=1 // pred_check_branch
      %96 = sbr.rel (0) target = $region49
    $region48: #{tpu_custom_call.1} parent=1 // pred_region
      _
    $region49: #{tpu_custom_call.1} parent=1 // pred_fallthru
      _
    // Predicated region
    $region50: #{tpu_custom_call.1} parent=1 // pred_check
      _
    $region51: #{tpu_custom_call.1} parent=1 // pred_check_branch
      %98 = sbr.rel (0) target = $region53
    $region52: #{tpu_custom_call.1} parent=1 // pred_region
      %99 = dma.done [#allocation7], 1024
    $region53: #{tpu_custom_call.1} parent=1 // pred_fallthru
      _
    // Predicated region
    $region54: #{tpu_custom_call.1} parent=1 // pred_check
      _
    $region55: #{tpu_custom_call.1} parent=1 // pred_check_branch
      %101 = sbr.rel (0) target = $region57
    $region56: #{tpu_custom_call.1} parent=1 // pred_region
      %102 = dma.done [#allocation10], 256
    $region57: #{tpu_custom_call.1} parent=1 // pred_fallthru
      _
    // Predicated region
    $region58: #{tpu_custom_call.1} parent=1 // pred_check
      _
    $region59: #{tpu_custom_call.1} parent=1 // pred_check_branch
      %104 = sbr.rel (0) target = $region61
    $region60: #{tpu_custom_call.1} parent=1 // pred_region
      %105 = dma.done [#allocation10], 256
    $region61: #{tpu_custom_call.1} parent=1 // pred_fallthru
      _
    // Predicated region
    $region62: #{tpu_custom_call.1} parent=1 // pred_check
      _
    $region63: #{tpu_custom_call.1} parent=1 // pred_check_branch
      %107 = sbr.rel (0) target = $region65
    $region64: #{tpu_custom_call.1} parent=1 // pred_region
      %108 = dma.done [#allocation13], 256
    $region65: #{tpu_custom_call.1} parent=1 // pred_fallthru
      _
    // Predicated region
    $region66: #{tpu_custom_call.1} parent=1 // pred_check
      _
    $region67: #{tpu_custom_call.1} parent=1 // pred_check_branch
      %110 = sbr.rel (0) target = $region69
    $region68: #{tpu_custom_call.1} parent=1 // pred_region
      %111 = dma.done [#allocation13], 512
    $region69: #{tpu_custom_call.1} parent=1 // pred_fallthru
      _
    %s112 = sld [smem:[#allocation5]]
    %v113 = vld [vmem:[%s1] sm:$0xff]
    %v114 = vld [vmem:[#allocation6] sm:$0xff]
    %v115 = vld [vmem:[#allocation6 + $0x8] sm:$0xff]
    %v116 = vld [vmem:[#allocation6 + $0x10] sm:$0xff]
    %v117 = vld [vmem:[#allocation6 + $0x18] sm:$0xff]
    %v118 = vld [vmem:[#allocation6 + $0x20] sm:$0xff]
    %v119 = vld [vmem:[#allocation6 + $0x28] sm:$0xff]
    %v120 = vld [vmem:[#allocation6 + $0x30] sm:$0xff]
    %v121 = vld [vmem:[#allocation6 + $0x38] sm:$0xff]
    %v122 = vld [vmem:[#allocation12] sm:$0xff]
    %v123 = vld [vmem:[#allocation12 + $0x8] sm:$0xff]
    %v124 = vld [vmem:[%s7] sm:$0x1]
    %v126 = vlaneseq
    %v127 = vshrl.u32 %v126, 7
    %v128 = vsub.s32 0, %v127
    %v129 = vrot.slane %v124, %v128
    %vm131 = vcmask 130048
    %v133 = vsel %vm131, %v114, 0
    %v136 = vsel %vm131, %v115, 0
    %v139 = vsel %vm131, %v116, 0
    %v142 = vsel %vm131, %v117, 0
    %v145 = vsel %vm131, %v118, 0
    %v148 = vsel %vm131, %v119, 0
    %v151 = vsel %vm131, %v120, 0
    %v154 = vsel %vm131, %v121, 0
    %156 = vmatprep.subr.mxu0 0.0
    %157 = vmatpush1.msra.mxu0 %v122
    %158 = vmatprep.subr.mxu0 0.0
    %159 = vmatpush1.msra.mxu0 %v123
    %160 = vmatprep.subr.mxu0 0.0
    %161 = vmatpush1.msra.mxu0 0.0
    %162 = vmatprep.subr.mxu0 0.0
    %163 = vmatpush1.msra.mxu0 0.0
    %164 = vmatprep.subr.mxu0 0.0
    %165 = vmatpush1.msra.mxu0 0.0
    %166 = vmatprep.subr.mxu0 0.0
    %167 = vmatpush1.msra.mxu0 0.0
    %168 = vmatprep.subr.mxu0 0.0
    %169 = vmatpush1.msra.mxu0 0.0
    %170 = vmatprep.subr.mxu0 0.0
    %171 = vmatpush1.msra.mxu0 0.0
    %172 = vmatprep.subr.mxu0 0.0
    %173 = vmatpush1.msra.mxu0 0.0
    %174 = vmatprep.subr.mxu0 0.0
    %175 = vmatpush1.msra.mxu0 0.0
    %176 = vmatprep.subr.mxu0 0.0
    %177 = vmatpush1.msra.mxu0 0.0
    %178 = vmatprep.subr.mxu0 0.0
    %179 = vmatpush1.msra.mxu0 0.0
    %180 = vmatprep.subr.mxu0 0.0
    %181 = vmatpush1.msra.mxu0 0.0
    %182 = vmatprep.subr.mxu0 0.0
    %183 = vmatpush1.msra.mxu0 0.0
    %184 = vmatprep.subr.mxu0 0.0
    %185 = vmatpush1.msra.mxu0 0.0
    %186 = vmatprep.subr.mxu0 0.0
    %187 = vmatpush1.msra.mxu0 0.0
    %188 = vmatprep.subr.mxu0 0.0
    %189 = vmatpush1.msra.mxu0 0.0
    %190 = vmatprep.subr.mxu0 0.0
    %191 = vmatpush1.msra.mxu0 0.0
    %192 = vmatprep.subr.mxu0 0.0
    %193 = vmatpush1.msra.mxu0 0.0
    %194 = vmatprep.subr.mxu0 0.0
    %195 = vmatpush1.msra.mxu0 0.0
    %196 = vmatprep.subr.mxu0 0.0
    %197 = vmatpush1.msra.mxu0 0.0
    %198 = vmatprep.subr.mxu0 0.0
    %199 = vmatpush1.msra.mxu0 0.0
    %200 = vmatprep.subr.mxu0 0.0
    %201 = vmatpush1.msra.mxu0 0.0
    %202 = vmatprep.subr.mxu0 0.0
    %203 = vmatpush1.msra.mxu0 0.0
    %204 = vmatprep.subr.mxu0 0.0
    %205 = vmatpush1.msra.mxu0 0.0
    %206 = vmatprep.subr.mxu0 0.0
    %207 = vmatpush1.msra.mxu0 0.0
    %208 = vmatprep.subr.mxu0 0.0
    %209 = vmatpush1.msra.mxu0 0.0
    %210 = vmatprep.subr.mxu0 0.0
    %211 = vmatpush1.msra.mxu0 0.0
    %212 = vmatprep.subr.mxu0 0.0
    %213 = vmatpush1.msra.mxu0 0.0
    %214 = vmatprep.subr.mxu0 0.0
    %215 = vmatpush1.msra.mxu0 0.0
    %216 = vmatprep.subr.mxu0 0.0
    %217 = vmatpush1.msra.mxu0 0.0
    %218 = vmatprep.subr.mxu0 0.0
    %219 = vmatpush1.msra.mxu0 0.0
    %220 = vmatprep.mubr.f32.mxu0 0.0
    %221 = vmatmul.mubr.f32.gmra.mrb[0].mxu0 %v133
    %v222 = vpop.f32.mrb[0].mxu0
    %v223 = vadd.f32 %v129, %v222
    %v224 = vpop.f32.mrb[0].mxu0
    %225 = vmatprep.mubr.f32.mxu0 0.0
    %226 = vmatmul.mubr.f32.gmra.mrb[0].mxu0 %v136
    %v227 = vpop.f32.mrb[0].mxu0
    %v228 = vadd.f32 %v129, %v227
    %v229 = vpop.f32.mrb[0].mxu0
    %230 = vmatprep.mubr.f32.mxu0 0.0
    %231 = vmatmul.mubr.f32.gmra.mrb[0].mxu0 %v139
    %v232 = vpop.f32.mrb[0].mxu0
    %v233 = vadd.f32 %v129, %v232
    %v234 = vpop.f32.mrb[0].mxu0
    %235 = vmatprep.mubr.f32.mxu0 0.0
    %236 = vmatmul.mubr.f32.gmra.mrb[0].mxu0 %v142
    %v237 = vpop.f32.mrb[0].mxu0
    %v238 = vadd.f32 %v129, %v237
    %v239 = vpop.f32.mrb[0].mxu0
    %240 = vmatprep.mubr.f32.mxu0 0.0
    %241 = vmatmul.mubr.f32.gmra.mrb[0].mxu0 %v145
    %v242 = vpop.f32.mrb[0].mxu0
    %v243 = vadd.f32 %v129, %v242
    %v244 = vpop.f32.mrb[0].mxu0
    %245 = vmatprep.mubr.f32.mxu0 0.0
    %246 = vmatmul.mubr.f32.gmra.mrb[0].mxu0 %v148
    %v247 = vpop.f32.mrb[0].mxu0
    %v248 = vadd.f32 %v129, %v247
    %v249 = vpop.f32.mrb[0].mxu0
    %250 = vmatprep.mubr.f32.mxu0 0.0
    %251 = vmatmul.mubr.f32.gmra.mrb[0].mxu0 %v151
    %v252 = vpop.f32.mrb[0].mxu0
    %v253 = vadd.f32 %v129, %v252
    %v254 = vpop.f32.mrb[0].mxu0
    %255 = vmatprep.mubr.f32.mxu0 0.0
    %256 = vmatmul.mubr.f32.gmra.mrb[0].mxu0 %v154
    %v257 = vpop.f32.mrb[0].mxu0
    %v258 = vadd.f32 %v129, %v257
    %v259 = vpop.f32.mrb[0].mxu0
    %260 = vdwg.mxu0
    %261 = vst [vmem:[#allocation2] sm:$0xff] %v223
    %262 = vst [vmem:[#allocation2 + $0x8] sm:$0xff] %v228
    %263 = vst [vmem:[#allocation2 + $0x10] sm:$0xff] %v233
    %264 = vst [vmem:[#allocation2 + $0x18] sm:$0xff] %v238
    %265 = vst [vmem:[#allocation2 + $0x20] sm:$0xff] %v243
    %266 = vst [vmem:[#allocation2 + $0x28] sm:$0xff] %v248
    %267 = vst [vmem:[#allocation2 + $0x30] sm:$0xff] %v253
    %268 = vst [vmem:[#allocation2 + $0x38] sm:$0xff] %v258
    %v269 = vld [vmem:[#allocation9] sm:$0xff]
    %s270 = scalar_lea.vmem [#allocation9], 8
    %v271 = vld [vmem:[%s270] sm:$0xff]
    %v272 = vld [vmem:[#allocation11] sm:$0xff]
    %s273 = scalar_lea.vmem [#allocation11], 8
    %v274 = vld [vmem:[%s273] sm:$0xff]
    %vm275 = vcmp.gt.s32.totalorder %v113, 0
    %v276 = vld [vmem:[#allocation2] sm:$0xff]
    %v277 = vld [vmem:[%s6] sm:$0xff]
    %v278 = vld [vmem:[%s6 + $0x8] sm:$0xff]
    %v279 = vld [vmem:[%s6 + $0x10] sm:$0xff]
    %v280 = vld [vmem:[%s6 + $0x18] sm:$0xff]
    %vm281 = vcmask 261120
    %v283 = vsel %vm281, %v269, 0
    %285 = vmatprep.subr.mxu0 0.0
    %286 = vmatpush1.msra.mxu0 %v277
    %287 = vmatprep.subr.mxu0 0.0
    %288 = vmatpush1.msra.mxu0 %v278
    %289 = vmatprep.subr.mxu0 0.0
    %290 = vmatpush1.msra.mxu0 %v279
    %291 = vmatprep.subr.mxu0 0.0
    %292 = vmatpush1.msra.mxu0 %v280
    %293 = vmatprep.subr.mxu0 0.0
    %294 = vmatpush1.msra.mxu0 0.0
    %295 = vmatprep.subr.mxu0 0.0
    %296 = vmatpush1.msra.mxu0 0.0
    %297 = vmatprep.subr.mxu0 0.0
    %298 = vmatpush1.msra.mxu0 0.0
    %299 = vmatprep.subr.mxu0 0.0
    %300 = vmatpush1.msra.mxu0 0.0
    %301 = vmatprep.subr.mxu0 0.0
    %302 = vmatpush1.msra.mxu0 0.0
    %303 = vmatprep.subr.mxu0 0.0
    %304 = vmatpush1.msra.mxu0 0.0
    %305 = vmatprep.subr.mxu0 0.0
    %306 = vmatpush1.msra.mxu0 0.0
    %307 = vmatprep.subr.mxu0 0.0
    %308 = vmatpush1.msra.mxu0 0.0
    %309 = vmatprep.subr.mxu0 0.0
    %310 = vmatpush1.msra.mxu0 0.0
    %311 = vmatprep.subr.mxu0 0.0
    %312 = vmatpush1.msra.mxu0 0.0
    %313 = vmatprep.subr.mxu0 0.0
    %314 = vmatpush1.msra.mxu0 0.0
    %315 = vmatprep.subr.mxu0 0.0
    %316 = vmatpush1.msra.mxu0 0.0
    %317 = vmatprep.subr.mxu0 0.0
    %318 = vmatpush1.msra.mxu0 0.0
    %319 = vmatprep.subr.mxu0 0.0
    %320 = vmatpush1.msra.mxu0 0.0
    %321 = vmatprep.subr.mxu0 0.0
    %322 = vmatpush1.msra.mxu0 0.0
    %323 = vmatprep.subr.mxu0 0.0
    %324 = vmatpush1.msra.mxu0 0.0
    %325 = vmatprep.subr.mxu0 0.0
    %326 = vmatpush1.msra.mxu0 0.0
    %327 = vmatprep.subr.mxu0 0.0
    %328 = vmatpush1.msra.mxu0 0.0
    %329 = vmatprep.subr.mxu0 0.0
    %330 = vmatpush1.msra.mxu0 0.0
    %331 = vmatprep.subr.mxu0 0.0
    %332 = vmatpush1.msra.mxu0 0.0
    %333 = vmatprep.subr.mxu0 0.0
    %334 = vmatpush1.msra.mxu0 0.0
    %335 = vmatprep.subr.mxu0 0.0
    %336 = vmatpush1.msra.mxu0 0.0
    %337 = vmatprep.subr.mxu0 0.0
    %338 = vmatpush1.msra.mxu0 0.0
    %339 = vmatprep.subr.mxu0 0.0
    %340 = vmatpush1.msra.mxu0 0.0
    %341 = vmatprep.subr.mxu0 0.0
    %342 = vmatpush1.msra.mxu0 0.0
    %343 = vmatprep.subr.mxu0 0.0
    %344 = vmatpush1.msra.mxu0 0.0
    %345 = vmatprep.subr.mxu0 0.0
    %346 = vmatpush1.msra.mxu0 0.0
    %347 = vmatprep.subr.mxu0 0.0
    %348 = vmatpush1.msra.mxu0 0.0
    %349 = vmatprep.mubr.f32.mxu0 0.0
    %350 = vmatmul.mubr.f32.gmra.mrb[0].mxu0 %v283
    %v351 = vpop.f32.mrb[0].mxu0
    %v352 = vadd.f32 0.0, %v351
    %v353 = vpop.f32.mrb[0].mxu0
    %354 = vdwg.mxu0
    %v355 = vadd.f32 %v276, %v352
    %v356 = vxor.u32 %v355, 2147483648
    %v357 = vmul.f32 %v356, 1.442695
    %v358 = vpow.pop %v357
    %v359 = vadd.f32 %v358, 1.0
    %v360 = vrcp.pop %v359
    %v361 = vmul.f32 1.0, %v360
    %v362 = vtanh.pop %v355
    %364 = vrot.lane.b32.xlu0 %v272, 32
    %v365 = vpop.permute.xlu0 %364
    %v367 = vmul.f32 %v361, %v365
    %369 = vrot.lane.b32.xlu0 %v362, 64
    %v370 = vpop.permute.xlu0 %369
    %v372 = vmul.f32 %v361, %v370
    %374 = vrot.lane.b32.xlu0 %v372, 32
    %v375 = vpop.permute.xlu0 %374
    %v377 = vadd.f32 %v367, %v375
    %v378 = vtanh.pop %v377
    %380 = vrot.lane.b32.xlu0 %v378, 64
    %v381 = vpop.permute.xlu0 %380
    %v383 = vmul.f32 %v361, %v381
    %v384 = vsel %vm275, 1, 0
    %385 = vset.pattern.permute.xlu0 0
    %386 = vperm.xlu0 %385, %v384
    %v387 = vpop.permute.xlu0 %386
    %vm388 = vcmp.eq.s32.totalorder %v387, 1
    %389 = vrot.lane.b32.xlu0 %v269, 96
    %v390 = vpop.permute.xlu0 %389
    %v392 = vsel %vm388, %v383, %v390
    %v393 = vsel %vm388, %v377, %v365
    %v394 = vsel %vm388, %v383, 0.0
    %v395 = vld [vmem:[%s8] sm:$0xff]
    %v396 = vld [vmem:[%s8 + $0x8] sm:$0xff]
    %v397 = vld [vmem:[%s8 + $0x10] sm:$0xff]
    %v398 = vld [vmem:[%s8 + $0x18] sm:$0xff]
    %v399 = vld [vmem:[#allocation14] sm:$0xff]
    %v400 = vld [vmem:[#allocation14 + $0x8] sm:$0xff]
    %v401 = vld [vmem:[#allocation14 + $0x10] sm:$0xff]
    %v402 = vld [vmem:[#allocation14 + $0x18] sm:$0xff]
    %v404 = vsel %vm281, %v271, 0
    %406 = vmatprep.subr.mxu0 0.0
    %407 = vmatpush1.msra.mxu0 %v399
    %408 = vmatprep.subr.mxu0 0.0
    %409 = vmatpush1.msra.mxu0 %v400
    %410 = vmatprep.subr.mxu0 0.0
    %411 = vmatpush1.msra.mxu0 %v401
    %412 = vmatprep.subr.mxu0 0.0
    %413 = vmatpush1.msra.mxu0 %v402
    %414 = vmatprep.subr.mxu0 0.0
    %415 = vmatpush1.msra.mxu0 0.0
    %416 = vmatprep.subr.mxu0 0.0
    %417 = vmatpush1.msra.mxu0 0.0
    %418 = vmatprep.subr.mxu0 0.0
    %419 = vmatpush1.msra.mxu0 0.0
    %420 = vmatprep.subr.mxu0 0.0
    %421 = vmatpush1.msra.mxu0 0.0
    %422 = vmatprep.subr.mxu0 0.0
    %423 = vmatpush1.msra.mxu0 0.0
    %424 = vmatprep.subr.mxu0 0.0
    %425 = vmatpush1.msra.mxu0 0.0
    %426 = vmatprep.subr.mxu0 0.0
    %427 = vmatpush1.msra.mxu0 0.0
    %428 = vmatprep.subr.mxu0 0.0
    %429 = vmatpush1.msra.mxu0 0.0
    %430 = vmatprep.subr.mxu0 0.0
    %431 = vmatpush1.msra.mxu0 0.0
    %432 = vmatprep.subr.mxu0 0.0
    %433 = vmatpush1.msra.mxu0 0.0
    %434 = vmatprep.subr.mxu0 0.0
    %435 = vmatpush1.msra.mxu0 0.0
    %436 = vmatprep.subr.mxu0 0.0
    %437 = vmatpush1.msra.mxu0 0.0
    %438 = vmatprep.subr.mxu0 0.0
    %439 = vmatpush1.msra.mxu0 0.0
    %440 = vmatprep.subr.mxu0 0.0
    %441 = vmatpush1.msra.mxu0 0.0
    %442 = vmatprep.subr.mxu0 0.0
    %443 = vmatpush1.msra.mxu0 0.0
    %444 = vmatprep.subr.mxu0 0.0
    %445 = vmatpush1.msra.mxu0 0.0
    %446 = vmatprep.subr.mxu0 0.0
    %447 = vmatpush1.msra.mxu0 0.0
    %448 = vmatprep.subr.mxu0 0.0
    %449 = vmatpush1.msra.mxu0 0.0
    %450 = vmatprep.subr.mxu0 0.0
    %451 = vmatpush1.msra.mxu0 0.0
    %452 = vmatprep.subr.mxu0 0.0
    %453 = vmatpush1.msra.mxu0 0.0
    %454 = vmatprep.subr.mxu0 0.0
    %455 = vmatpush1.msra.mxu0 0.0
    %456 = vmatprep.subr.mxu0 0.0
    %457 = vmatpush1.msra.mxu0 0.0
    %458 = vmatprep.subr.mxu0 0.0
    %459 = vmatpush1.msra.mxu0 0.0
    %460 = vmatprep.subr.mxu0 0.0
    %461 = vmatpush1.msra.mxu0 0.0
    %462 = vmatprep.subr.mxu0 0.0
    %463 = vmatpush1.msra.mxu0 0.0
    %464 = vmatprep.subr.mxu0 0.0
    %465 = vmatpush1.msra.mxu0 0.0
    %466 = vmatprep.subr.mxu0 0.0
    %467 = vmatpush1.msra.mxu0 0.0
    %468 = vmatprep.subr.mxu0 0.0
    %469 = vmatpush1.msra.mxu0 0.0
    %470 = vmatprep.mubr.f32.mxu0 0.0
    %471 = vmatmul.mubr.f32.gmra.mrb[0].mxu0 %v404
    %v472 = vpop.f32.mrb[0].mxu0
    %v473 = vadd.f32 0.0, %v472
    %v474 = vpop.f32.mrb[0].mxu0
    %475 = vdwg.mxu0
    %477 = vrot.lane.b32.xlu0 %v394, 32
    %v478 = vpop.permute.xlu0 %477
    %v479 = vsel %vm281, %v478, 0
    %481 = vmatprep.subr.mxu0 0.0
    %482 = vmatpush1.msra.mxu0 %v395
    %483 = vmatprep.subr.mxu0 0.0
    %484 = vmatpush1.msra.mxu0 %v396
    %485 = vmatprep.subr.mxu0 0.0
    %486 = vmatpush1.msra.mxu0 %v397
    %487 = vmatprep.subr.mxu0 0.0
    %488 = vmatpush1.msra.mxu0 %v398
    %489 = vmatprep.subr.mxu0 0.0
    %490 = vmatpush1.msra.mxu0 0.0
    %491 = vmatprep.subr.mxu0 0.0
    %492 = vmatpush1.msra.mxu0 0.0
    %493 = vmatprep.subr.mxu0 0.0
    %494 = vmatpush1.msra.mxu0 0.0
    %495 = vmatprep.subr.mxu0 0.0
    %496 = vmatpush1.msra.mxu0 0.0
    %497 = vmatprep.subr.mxu0 0.0
    %498 = vmatpush1.msra.mxu0 0.0
    %499 = vmatprep.subr.mxu0 0.0
    %500 = vmatpush1.msra.mxu0 0.0
    %501 = vmatprep.subr.mxu0 0.0
    %502 = vmatpush1.msra.mxu0 0.0
    %503 = vmatprep.subr.mxu0 0.0
    %504 = vmatpush1.msra.mxu0 0.0
    %505 = vmatprep.subr.mxu0 0.0
    %506 = vmatpush1.msra.mxu0 0.0
    %507 = vmatprep.subr.mxu0 0.0
    %508 = vmatpush1.msra.mxu0 0.0
    %509 = vmatprep.subr.mxu0 0.0
    %510 = vmatpush1.msra.mxu0 0.0
    %511 = vmatprep.subr.mxu0 0.0
    %512 = vmatpush1.msra.mxu0 0.0
    %513 = vmatprep.subr.mxu0 0.0
    %514 = vmatpush1.msra.mxu0 0.0
    %515 = vmatprep.subr.mxu0 0.0
    %516 = vmatpush1.msra.mxu0 0.0
    %517 = vmatprep.subr.mxu0 0.0
    %518 = vmatpush1.msra.mxu0 0.0
    %519 = vmatprep.subr.mxu0 0.0
    %520 = vmatpush1.msra.mxu0 0.0
    %521 = vmatprep.subr.mxu0 0.0
    %522 = vmatpush1.msra.mxu0 0.0
    %523 = vmatprep.subr.mxu0 0.0
    %524 = vmatpush1.msra.mxu0 0.0
    %525 = vmatprep.subr.mxu0 0.0
    %526 = vmatpush1.msra.mxu0 0.0
    %527 = vmatprep.subr.mxu0 0.0
    %528 = vmatpush1.msra.mxu0 0.0
    %529 = vmatprep.subr.mxu0 0.0
    %530 = vmatpush1.msra.mxu0 0.0
    %531 = vmatprep.subr.mxu0 0.0
    %532 = vmatpush1.msra.mxu0 0.0
    %533 = vmatprep.subr.mxu0 0.0
    %534 = vmatpush1.msra.mxu0 0.0
    %535 = vmatprep.subr.mxu0 0.0
    %536 = vmatpush1.msra.mxu0 0.0
    %537 = vmatprep.subr.mxu0 0.0
    %538 = vmatpush1.msra.mxu0 0.0
    %539 = vmatprep.subr.mxu0 0.0
    %540 = vmatpush1.msra.mxu0 0.0
    %541 = vmatprep.subr.mxu0 0.0
    %542 = vmatpush1.msra.mxu0 0.0
    %543 = vmatprep.subr.mxu0 0.0
    %544 = vmatpush1.msra.mxu0 0.0
    %545 = vmatprep.mubr.f32.mxu0 0.0
    %546 = vmatmul.mubr.f32.gmra.mrb[0].mxu0 %v479
    %v547 = vpop.f32.mrb[0].mxu0
    %v548 = vadd.f32 %v473, %v547
    %v549 = vpop.f32.mrb[0].mxu0
    %550 = vdwg.mxu0
    %v551 = vld [vmem:[%s10] sm:$0x1]
    %v553 = vlaneseq
    %v554 = vshrl.u32 %v553, 7
    %v555 = vsub.s32 0, %v554
    %v556 = vrot.slane %v551, %v555
    %v558 = vadd.f32 %v548, %v556
    %v559 = vxor.u32 %v558, 2147483648
    %v560 = vmul.f32 %v559, 1.442695
    %v561 = vpow.pop %v560
    %v562 = vadd.f32 %v561, 1.0
    %v563 = vrcp.pop %v562
    %v564 = vmul.f32 1.0, %v563
    %v565 = vtanh.pop %v558
    %567 = vrot.lane.b32.xlu0 %v274, 32
    %v568 = vpop.permute.xlu0 %567
    %v570 = vmul.f32 %v564, %v568
    %572 = vrot.lane.b32.xlu0 %v565, 64
    %v573 = vpop.permute.xlu0 %572
    %v575 = vmul.f32 %v564, %v573
    %577 = vrot.lane.b32.xlu0 %v575, 32
    %v578 = vpop.permute.xlu0 %577
    %v580 = vadd.f32 %v570, %v578
    %v581 = vtanh.pop %v580
    %583 = vrot.lane.b32.xlu0 %v581, 64
    %v584 = vpop.permute.xlu0 %583
    %v586 = vmul.f32 %v564, %v584
    %587 = vrot.lane.b32.xlu0 %v271, 96
    %v588 = vpop.permute.xlu0 %587
    %v590 = vsel %vm388, %v586, %v588
    %v591 = vsel %vm388, %v580, %v568
    %v592 = vsel %vm388, %v586, 0.0
    %594 = vrot.lane.b32.xlu0 %v592, 32
    %v595 = vpop.permute.xlu0 %594
    %597 = vst.msk [vmem:[#allocation3] sm:$0xff] %vm281, %v595
    %vm598 = vcmp.gt.s32.totalorder %v113, 1
    %s599 = scalar_lea.vmem [#allocation2], 8
    %v600 = vld [vmem:[%s599] sm:$0xff]
    %v601 = vld [vmem:[%s6] sm:$0xff]
    %v602 = vld [vmem:[%s6 + $0x8] sm:$0xff]
    %v603 = vld [vmem:[%s6 + $0x10] sm:$0xff]
    %v604 = vld [vmem:[%s6 + $0x18] sm:$0xff]
    %606 = vrot.lane.b32.xlu0 %v392, 32
    %v607 = vpop.permute.xlu0 %606
    %v608 = vsel %vm281, %v607, 0
    %610 = vmatprep.subr.mxu0 0.0
    %611 = vmatpush1.msra.mxu0 %v601
    %612 = vmatprep.subr.mxu0 0.0
    %613 = vmatpush1.msra.mxu0 %v602
    %614 = vmatprep.subr.mxu0 0.0
    %615 = vmatpush1.msra.mxu0 %v603
    %616 = vmatprep.subr.mxu0 0.0
    %617 = vmatpush1.msra.mxu0 %v604
    %618 = vmatprep.subr.mxu0 0.0
    %619 = vmatpush1.msra.mxu0 0.0
    %620 = vmatprep.subr.mxu0 0.0
    %621 = vmatpush1.msra.mxu0 0.0
    %622 = vmatprep.subr.mxu0 0.0
    %623 = vmatpush1.msra.mxu0 0.0
    %624 = vmatprep.subr.mxu0 0.0
    %625 = vmatpush1.msra.mxu0 0.0
    %626 = vmatprep.subr.mxu0 0.0
    %627 = vmatpush1.msra.mxu0 0.0
    %628 = vmatprep.subr.mxu0 0.0
    %629 = vmatpush1.msra.mxu0 0.0
    %630 = vmatprep.subr.mxu0 0.0
    %631 = vmatpush1.msra.mxu0 0.0
    %632 = vmatprep.subr.mxu0 0.0
    %633 = vmatpush1.msra.mxu0 0.0
    %634 = vmatprep.subr.mxu0 0.0
    %635 = vmatpush1.msra.mxu0 0.0
    %636 = vmatprep.subr.mxu0 0.0
    %637 = vmatpush1.msra.mxu0 0.0
    %638 = vmatprep.subr.mxu0 0.0
    %639 = vmatpush1.msra.mxu0 0.0
    %640 = vmatprep.subr.mxu0 0.0
    %641 = vmatpush1.msra.mxu0 0.0
    %642 = vmatprep.subr.mxu0 0.0
    %643 = vmatpush1.msra.mxu0 0.0
    %644 = vmatprep.subr.mxu0 0.0
    %645 = vmatpush1.msra.mxu0 0.0
    %646 = vmatprep.subr.mxu0 0.0
    %647 = vmatpush1.msra.mxu0 0.0
    %648 = vmatprep.subr.mxu0 0.0
    %649 = vmatpush1.msra.mxu0 0.0
    %650 = vmatprep.subr.mxu0 0.0
    %651 = vmatpush1.msra.mxu0 0.0
    %652 = vmatprep.subr.mxu0 0.0
    %653 = vmatpush1.msra.mxu0 0.0
    %654 = vmatprep.subr.mxu0 0.0
    %655 = vmatpush1.msra.mxu0 0.0
    %656 = vmatprep.subr.mxu0 0.0
    %657 = vmatpush1.msra.mxu0 0.0
    %658 = vmatprep.subr.mxu0 0.0
    %659 = vmatpush1.msra.mxu0 0.0
    %660 = vmatprep.subr.mxu0 0.0
    %661 = vmatpush1.msra.mxu0 0.0
    %662 = vmatprep.subr.mxu0 0.0
    %663 = vmatpush1.msra.mxu0 0.0
    %664 = vmatprep.subr.mxu0 0.0
    %665 = vmatpush1.msra.mxu0 0.0
    %666 = vmatprep.subr.mxu0 0.0
    %667 = vmatpush1.msra.mxu0 0.0
    %668 = vmatprep.subr.mxu0 0.0
    %669 = vmatpush1.msra.mxu0 0.0
    %670 = vmatprep.subr.mxu0 0.0
    %671 = vmatpush1.msra.mxu0 0.0
    %672 = vmatprep.subr.mxu0 0.0
    %673 = vmatpush1.msra.mxu0 0.0
    %674 = vmatprep.mubr.f32.mxu0 0.0
    %675 = vmatmul.mubr.f32.gmra.mrb[0].mxu0 %v608
    %v676 = vpop.f32.mrb[0].mxu0
    %v677 = vadd.f32 0.0, %v676
    %v678 = vpop.f32.mrb[0].mxu0
    %679 = vdwg.mxu0
    %v680 = vadd.f32 %v600, %v677
    %v681 = vxor.u32 %v680, 2147483648
    %v682 = vmul.f32 %v681, 1.442695
    %v683 = vpow.pop %v682
    %v684 = vadd.f32 %v683, 1.0
    %v685 = vrcp.pop %v684
    %v686 = vmul.f32 1.0, %v685
    %v687 = vtanh.pop %v680
    %v688 = vmul.f32 %v686, %v393
    %690 = vrot.lane.b32.xlu0 %v687, 64
    %v691 = vpop.permute.xlu0 %690
    %v693 = vmul.f32 %v686, %v691
    %695 = vrot.lane.b32.xlu0 %v693, 32
    %v696 = vpop.permute.xlu0 %695
    %v698 = vadd.f32 %v688, %v696
    %v699 = vtanh.pop %v698
    %701 = vrot.lane.b32.xlu0 %v699, 64
    %v702 = vpop.permute.xlu0 %701
    %v704 = vmul.f32 %v686, %v702
    %v705 = vsel %vm598, 1, 0
    %706 = vset.pattern.permute.xlu0 0
    %707 = vperm.xlu0 %706, %v705
    %v708 = vpop.permute.xlu0 %707
    %vm709 = vcmp.eq.s32.totalorder %v708, 1
    %v710 = vsel %vm709, %v704, %v392
    %v711 = vsel %vm709, %v698, %v393
    %v712 = vsel %vm709, %v704, 0.0
    %v713 = vld [vmem:[%s8] sm:$0xff]
    %v714 = vld [vmem:[%s8 + $0x8] sm:$0xff]
    %v715 = vld [vmem:[%s8 + $0x10] sm:$0xff]
    %v716 = vld [vmem:[%s8 + $0x18] sm:$0xff]
    %v717 = vld [vmem:[#allocation14] sm:$0xff]
    %v718 = vld [vmem:[#allocation14 + $0x8] sm:$0xff]
    %v719 = vld [vmem:[#allocation14 + $0x10] sm:$0xff]
    %v720 = vld [vmem:[#allocation14 + $0x18] sm:$0xff]
    %722 = vrot.lane.b32.xlu0 %v590, 32
    %v723 = vpop.permute.xlu0 %722
    %v724 = vsel %vm281, %v723, 0
    %726 = vmatprep.subr.mxu0 0.0
    %727 = vmatpush1.msra.mxu0 %v717
    %728 = vmatprep.subr.mxu0 0.0
    %729 = vmatpush1.msra.mxu0 %v718
    %730 = vmatprep.subr.mxu0 0.0
    %731 = vmatpush1.msra.mxu0 %v719
    %732 = vmatprep.subr.mxu0 0.0
    %733 = vmatpush1.msra.mxu0 %v720
    %734 = vmatprep.subr.mxu0 0.0
    %735 = vmatpush1.msra.mxu0 0.0
    %736 = vmatprep.subr.mxu0 0.0
    %737 = vmatpush1.msra.mxu0 0.0
    %738 = vmatprep.subr.mxu0 0.0
    %739 = vmatpush1.msra.mxu0 0.0
    %740 = vmatprep.subr.mxu0 0.0
    %741 = vmatpush1.msra.mxu0 0.0
    %742 = vmatprep.subr.mxu0 0.0
    %743 = vmatpush1.msra.mxu0 0.0
    %744 = vmatprep.subr.mxu0 0.0
    %745 = vmatpush1.msra.mxu0 0.0
    %746 = vmatprep.subr.mxu0 0.0
    %747 = vmatpush1.msra.mxu0 0.0
    %748 = vmatprep.subr.mxu0 0.0
    %749 = vmatpush1.msra.mxu0 0.0
    %750 = vmatprep.subr.mxu0 0.0
    %751 = vmatpush1.msra.mxu0 0.0
    %752 = vmatprep.subr.mxu0 0.0
    %753 = vmatpush1.msra.mxu0 0.0
    %754 = vmatprep.subr.mxu0 0.0
    %755 = vmatpush1.msra.mxu0 0.0
    %756 = vmatprep.subr.mxu0 0.0
    %757 = vmatpush1.msra.mxu0 0.0
    %758 = vmatprep.subr.mxu0 0.0
    %759 = vmatpush1.msra.mxu0 0.0
    %760 = vmatprep.subr.mxu0 0.0
    %761 = vmatpush1.msra.mxu0 0.0
    %762 = vmatprep.subr.mxu0 0.0
    %763 = vmatpush1.msra.mxu0 0.0
    %764 = vmatprep.subr.mxu0 0.0
    %765 = vmatpush1.msra.mxu0 0.0
    %766 = vmatprep.subr.mxu0 0.0
    %767 = vmatpush1.msra.mxu0 0.0
    %768 = vmatprep.subr.mxu0 0.0
    %769 = vmatpush1.msra.mxu0 0.0
    %770 = vmatprep.subr.mxu0 0.0
    %771 = vmatpush1.msra.mxu0 0.0
    %772 = vmatprep.subr.mxu0 0.0
    %773 = vmatpush1.msra.mxu0 0.0
    %774 = vmatprep.subr.mxu0 0.0
    %775 = vmatpush1.msra.mxu0 0.0
    %776 = vmatprep.subr.mxu0 0.0
    %777 = vmatpush1.msra.mxu0 0.0
    %778 = vmatprep.subr.mxu0 0.0
    %779 = vmatpush1.msra.mxu0 0.0
    %780 = vmatprep.subr.mxu0 0.0
    %781 = vmatpush1.msra.mxu0 0.0
    %782 = vmatprep.subr.mxu0 0.0
    %783 = vmatpush1.msra.mxu0 0.0
    %784 = vmatprep.subr.mxu0 0.0
    %785 = vmatpush1.msra.mxu0 0.0
    %786 = vmatprep.subr.mxu0 0.0
    %787 = vmatpush1.msra.mxu0 0.0
    %788 = vmatprep.subr.mxu0 0.0
    %789 = vmatpush1.msra.mxu0 0.0
    %790 = vmatprep.mubr.f32.mxu0 0.0
    %791 = vmatmul.mubr.f32.gmra.mrb[0].mxu0 %v724
    %v792 = vpop.f32.mrb[0].mxu0
    %v793 = vadd.f32 0.0, %v792
    %v794 = vpop.f32.mrb[0].mxu0
    %795 = vdwg.mxu0
    %797 = vrot.lane.b32.xlu0 %v712, 32
    %v798 = vpop.permute.xlu0 %797
    %v799 = vsel %vm281, %v798, 0
    %801 = vmatprep.subr.mxu0 0.0
    %802 = vmatpush1.msra.mxu0 %v713
    %803 = vmatprep.subr.mxu0 0.0
    %804 = vmatpush1.msra.mxu0 %v714
    %805 = vmatprep.subr.mxu0 0.0
    %806 = vmatpush1.msra.mxu0 %v715
    %807 = vmatprep.subr.mxu0 0.0
    %808 = vmatpush1.msra.mxu0 %v716
    %809 = vmatprep.subr.mxu0 0.0
    %810 = vmatpush1.msra.mxu0 0.0
    %811 = vmatprep.subr.mxu0 0.0
    %812 = vmatpush1.msra.mxu0 0.0
    %813 = vmatprep.subr.mxu0 0.0
    %814 = vmatpush1.msra.mxu0 0.0
    %815 = vmatprep.subr.mxu0 0.0
    %816 = vmatpush1.msra.mxu0 0.0
    %817 = vmatprep.subr.mxu0 0.0
    %818 = vmatpush1.msra.mxu0 0.0
    %819 = vmatprep.subr.mxu0 0.0
    %820 = vmatpush1.msra.mxu0 0.0
    %821 = vmatprep.subr.mxu0 0.0
    %822 = vmatpush1.msra.mxu0 0.0
    %823 = vmatprep.subr.mxu0 0.0
    %824 = vmatpush1.msra.mxu0 0.0
    %825 = vmatprep.subr.mxu0 0.0
    %826 = vmatpush1.msra.mxu0 0.0
    %827 = vmatprep.subr.mxu0 0.0
    %828 = vmatpush1.msra.mxu0 0.0
    %829 = vmatprep.subr.mxu0 0.0
    %830 = vmatpush1.msra.mxu0 0.0
    %831 = vmatprep.subr.mxu0 0.0
    %832 = vmatpush1.msra.mxu0 0.0
    %833 = vmatprep.subr.mxu0 0.0
    %834 = vmatpush1.msra.mxu0 0.0
    %835 = vmatprep.subr.mxu0 0.0
    %836 = vmatpush1.msra.mxu0 0.0
    %837 = vmatprep.subr.mxu0 0.0
    %838 = vmatpush1.msra.mxu0 0.0
    %839 = vmatprep.subr.mxu0 0.0
    %840 = vmatpush1.msra.mxu0 0.0
    %841 = vmatprep.subr.mxu0 0.0
    %842 = vmatpush1.msra.mxu0 0.0
    %843 = vmatprep.subr.mxu0 0.0
    %844 = vmatpush1.msra.mxu0 0.0
    %845 = vmatprep.subr.mxu0 0.0
    %846 = vmatpush1.msra.mxu0 0.0
    %847 = vmatprep.subr.mxu0 0.0
    %848 = vmatpush1.msra.mxu0 0.0
    %849 = vmatprep.subr.mxu0 0.0
    %850 = vmatpush1.msra.mxu0 0.0
    %851 = vmatprep.subr.mxu0 0.0
    %852 = vmatpush1.msra.mxu0 0.0
    %853 = vmatprep.subr.mxu0 0.0
    %854 = vmatpush1.msra.mxu0 0.0
    %855 = vmatprep.subr.mxu0 0.0
    %856 = vmatpush1.msra.mxu0 0.0
    %857 = vmatprep.subr.mxu0 0.0
    %858 = vmatpush1.msra.mxu0 0.0
    %859 = vmatprep.subr.mxu0 0.0
    %860 = vmatpush1.msra.mxu0 0.0
    %861 = vmatprep.subr.mxu0 0.0
    %862 = vmatpush1.msra.mxu0 0.0
    %863 = vmatprep.subr.mxu0 0.0
    %864 = vmatpush1.msra.mxu0 0.0
    %865 = vmatprep.mubr.f32.mxu0 0.0
    %866 = vmatmul.mubr.f32.gmra.mrb[0].mxu0 %v799
    %v867 = vpop.f32.mrb[0].mxu0
    %v868 = vadd.f32 %v793, %v867
    %v869 = vpop.f32.mrb[0].mxu0
    %870 = vdwg.mxu0
    %v871 = vld [vmem:[%s10] sm:$0x1]
    %v873 = vlaneseq
    %v874 = vshrl.u32 %v873, 7
    %v875 = vsub.s32 0, %v874
    %v876 = vrot.slane %v871, %v875
    %v878 = vadd.f32 %v868, %v876
    %v879 = vxor.u32 %v878, 2147483648
    %v880 = vmul.f32 %v879, 1.442695
    %v881 = vpow.pop %v880
    %v882 = vadd.f32 %v881, 1.0
    %v883 = vrcp.pop %v882
    %v884 = vmul.f32 1.0, %v883
    %v885 = vtanh.pop %v878
    %v886 = vmul.f32 %v884, %v591
    %888 = vrot.lane.b32.xlu0 %v885, 64
    %v889 = vpop.permute.xlu0 %888
    %v891 = vmul.f32 %v884, %v889
    %893 = vrot.lane.b32.xlu0 %v891, 32
    %v894 = vpop.permute.xlu0 %893
    %v896 = vadd.f32 %v886, %v894
    %v897 = vtanh.pop %v896
    %899 = vrot.lane.b32.xlu0 %v897, 64
    %v900 = vpop.permute.xlu0 %899
    %v902 = vmul.f32 %v884, %v900
    %v903 = vsel %vm709, %v902, %v590
    %v904 = vsel %vm709, %v896, %v591
    %v905 = vsel %vm709, %v902, 0.0
    %907 = vrot.lane.b32.xlu0 %v905, 32
    %v908 = vpop.permute.xlu0 %907
    %s910 = scalar_lea.vmem [#allocation3], 8
    %911 = vst.msk [vmem:[%s910] sm:$0xff] %vm281, %v908
    %vm912 = vcmp.gt.s32.totalorder %v113, 2
    %s913 = scalar_lea.vmem [#allocation2], 16
    %v914 = vld [vmem:[%s913] sm:$0xff]
    %v915 = vld [vmem:[%s6] sm:$0xff]
    %v916 = vld [vmem:[%s6 + $0x8] sm:$0xff]
    %v917 = vld [vmem:[%s6 + $0x10] sm:$0xff]
    %v918 = vld [vmem:[%s6 + $0x18] sm:$0xff]
    %920 = vrot.lane.b32.xlu0 %v710, 32
    %v921 = vpop.permute.xlu0 %920
    %v922 = vsel %vm281, %v921, 0
    %924 = vmatprep.subr.mxu0 0.0
    %925 = vmatpush1.msra.mxu0 %v915
    %926 = vmatprep.subr.mxu0 0.0
    %927 = vmatpush1.msra.mxu0 %v916
    %928 = vmatprep.subr.mxu0 0.0
    %929 = vmatpush1.msra.mxu0 %v917
    %930 = vmatprep.subr.mxu0 0.0
    %931 = vmatpush1.msra.mxu0 %v918
    %932 = vmatprep.subr.mxu0 0.0
    %933 = vmatpush1.msra.mxu0 0.0
    %934 = vmatprep.subr.mxu0 0.0
    %935 = vmatpush1.msra.mxu0 0.0
    %936 = vmatprep.subr.mxu0 0.0
    %937 = vmatpush1.msra.mxu0 0.0
    %938 = vmatprep.subr.mxu0 0.0
    %939 = vmatpush1.msra.mxu0 0.0
    %940 = vmatprep.subr.mxu0 0.0
    %941 = vmatpush1.msra.mxu0 0.0
    %942 = vmatprep.subr.mxu0 0.0
    %943 = vmatpush1.msra.mxu0 0.0
    %944 = vmatprep.subr.mxu0 0.0
    %945 = vmatpush1.msra.mxu0 0.0
    %946 = vmatprep.subr.mxu0 0.0
    %947 = vmatpush1.msra.mxu0 0.0
    %948 = vmatprep.subr.mxu0 0.0
    %949 = vmatpush1.msra.mxu0 0.0
    %950 = vmatprep.subr.mxu0 0.0
    %951 = vmatpush1.msra.mxu0 0.0
    %952 = vmatprep.subr.mxu0 0.0
    %953 = vmatpush1.msra.mxu0 0.0
    %954 = vmatprep.subr.mxu0 0.0
    %955 = vmatpush1.msra.mxu0 0.0
    %956 = vmatprep.subr.mxu0 0.0
    %957 = vmatpush1.msra.mxu0 0.0
    %958 = vmatprep.subr.mxu0 0.0
    %959 = vmatpush1.msra.mxu0 0.0
    %960 = vmatprep.subr.mxu0 0.0
    %961 = vmatpush1.msra.mxu0 0.0
    %962 = vmatprep.subr.mxu0 0.0
    %963 = vmatpush1.msra.mxu0 0.0
    %964 = vmatprep.subr.mxu0 0.0
    %965 = vmatpush1.msra.mxu0 0.0
    %966 = vmatprep.subr.mxu0 0.0
    %967 = vmatpush1.msra.mxu0 0.0
    %968 = vmatprep.subr.mxu0 0.0
    %969 = vmatpush1.msra.mxu0 0.0
    %970 = vmatprep.subr.mxu0 0.0
    %971 = vmatpush1.msra.mxu0 0.0
    %972 = vmatprep.subr.mxu0 0.0
    %973 = vmatpush1.msra.mxu0 0.0
    %974 = vmatprep.subr.mxu0 0.0
    %975 = vmatpush1.msra.mxu0 0.0
    %976 = vmatprep.subr.mxu0 0.0
    %977 = vmatpush1.msra.mxu0 0.0
    %978 = vmatprep.subr.mxu0 0.0
    %979 = vmatpush1.msra.mxu0 0.0
    %980 = vmatprep.subr.mxu0 0.0
    %981 = vmatpush1.msra.mxu0 0.0
    %982 = vmatprep.subr.mxu0 0.0
    %983 = vmatpush1.msra.mxu0 0.0
    %984 = vmatprep.subr.mxu0 0.0
    %985 = vmatpush1.msra.mxu0 0.0
    %986 = vmatprep.subr.mxu0 0.0
    %987 = vmatpush1.msra.mxu0 0.0
    %988 = vmatprep.mubr.f32.mxu0 0.0
    %989 = vmatmul.mubr.f32.gmra.mrb[0].mxu0 %v922
    %v990 = vpop.f32.mrb[0].mxu0
    %v991 = vadd.f32 0.0, %v990
    %v992 = vpop.f32.mrb[0].mxu0
    %993 = vdwg.mxu0
    %v994 = vadd.f32 %v914, %v991
    %v995 = vxor.u32 %v994, 2147483648
    %v996 = vmul.f32 %v995, 1.442695
    %v997 = vpow.pop %v996
    %v998 = vadd.f32 %v997, 1.0
    %v999 = vrcp.pop %v998
    %v1000 = vmul.f32 1.0, %v999
    %v1001 = vtanh.pop %v994
    %v1002 = vmul.f32 %v1000, %v711
    %1004 = vrot.lane.b32.xlu0 %v1001, 64
    %v1005 = vpop.permute.xlu0 %1004
    %v1007 = vmul.f32 %v1000, %v1005
    %1009 = vrot.lane.b32.xlu0 %v1007, 32
    %v1010 = vpop.permute.xlu0 %1009
    %v1012 = vadd.f32 %v1002, %v1010
    %v1013 = vtanh.pop %v1012
    %1015 = vrot.lane.b32.xlu0 %v1013, 64
    %v1016 = vpop.permute.xlu0 %1015
    %v1018 = vmul.f32 %v1000, %v1016
    %v1019 = vsel %vm912, 1, 0
    %1020 = vset.pattern.permute.xlu0 0
    %1021 = vperm.xlu0 %1020, %v1019
    %v1022 = vpop.permute.xlu0 %1021
    %vm1023 = vcmp.eq.s32.totalorder %v1022, 1
    %v1024 = vsel %vm1023, %v1018, %v710
    %v1025 = vsel %vm1023, %v1012, %v711
    %v1026 = vsel %vm1023, %v1018, 0.0
    %v1027 = vld [vmem:[%s8] sm:$0xff]
    %v1028 = vld [vmem:[%s8 + $0x8] sm:$0xff]
    %v1029 = vld [vmem:[%s8 + $0x10] sm:$0xff]
    %v1030 = vld [vmem:[%s8 + $0x18] sm:$0xff]
    %v1031 = vld [vmem:[#allocation14] sm:$0xff]
    %v1032 = vld [vmem:[#allocation14 + $0x8] sm:$0xff]
    %v1033 = vld [vmem:[#allocation14 + $0x10] sm:$0xff]
    %v1034 = vld [vmem:[#allocation14 + $0x18] sm:$0xff]
    %1036 = vrot.lane.b32.xlu0 %v903, 32
    %v1037 = vpop.permute.xlu0 %1036
    %v1038 = vsel %vm281, %v1037, 0
    %1040 = vmatprep.subr.mxu0 0.0
    %1041 = vmatpush1.msra.mxu0 %v1031
    %1042 = vmatprep.subr.mxu0 0.0
    %1043 = vmatpush1.msra.mxu0 %v1032
    %1044 = vmatprep.subr.mxu0 0.0
    %1045 = vmatpush1.msra.mxu0 %v1033
    %1046 = vmatprep.subr.mxu0 0.0
    %1047 = vmatpush1.msra.mxu0 %v1034
    %1048 = vmatprep.subr.mxu0 0.0
    %1049 = vmatpush1.msra.mxu0 0.0
    %1050 = vmatprep.subr.mxu0 0.0
    %1051 = vmatpush1.msra.mxu0 0.0
    %1052 = vmatprep.subr.mxu0 0.0
    %1053 = vmatpush1.msra.mxu0 0.0
    %1054 = vmatprep.subr.mxu0 0.0
    %1055 = vmatpush1.msra.mxu0 0.0
    %1056 = vmatprep.subr.mxu0 0.0
    %1057 = vmatpush1.msra.mxu0 0.0
    %1058 = vmatprep.subr.mxu0 0.0
    %1059 = vmatpush1.msra.mxu0 0.0
    %1060 = vmatprep.subr.mxu0 0.0
    %1061 = vmatpush1.msra.mxu0 0.0
    %1062 = vmatprep.subr.mxu0 0.0
    %1063 = vmatpush1.msra.mxu0 0.0
    %1064 = vmatprep.subr.mxu0 0.0
    %1065 = vmatpush1.msra.mxu0 0.0
    %1066 = vmatprep.subr.mxu0 0.0
    %1067 = vmatpush1.msra.mxu0 0.0
    %1068 = vmatprep.subr.mxu0 0.0
    %1069 = vmatpush1.msra.mxu0 0.0
    %1070 = vmatprep.subr.mxu0 0.0
    %1071 = vmatpush1.msra.mxu0 0.0
    %1072 = vmatprep.subr.mxu0 0.0
    %1073 = vmatpush1.msra.mxu0 0.0
    %1074 = vmatprep.subr.mxu0 0.0
    %1075 = vmatpush1.msra.mxu0 0.0
    %1076 = vmatprep.subr.mxu0 0.0
    %1077 = vmatpush1.msra.mxu0 0.0
    %1078 = vmatprep.subr.mxu0 0.0
    %1079 = vmatpush1.msra.mxu0 0.0
    %1080 = vmatprep.subr.mxu0 0.0
    %1081 = vmatpush1.msra.mxu0 0.0
    %1082 = vmatprep.subr.mxu0 0.0
    %1083 = vmatpush1.msra.mxu0 0.0
    %1084 = vmatprep.subr.mxu0 0.0
    %1085 = vmatpush1.msra.mxu0 0.0
    %1086 = vmatprep.subr.mxu0 0.0
    %1087 = vmatpush1.msra.mxu0 0.0
    %1088 = vmatprep.subr.mxu0 0.0
    %1089 = vmatpush1.msra.mxu0 0.0
    %1090 = vmatprep.subr.mxu0 0.0
    %1091 = vmatpush1.msra.mxu0 0.0
    %1092 = vmatprep.subr.mxu0 0.0
    %1093 = vmatpush1.msra.mxu0 0.0
    %1094 = vmatprep.subr.mxu0 0.0
    %1095 = vmatpush1.msra.mxu0 0.0
    %1096 = vmatprep.subr.mxu0 0.0
    %1097 = vmatpush1.msra.mxu0 0.0
    %1098 = vmatprep.subr.mxu0 0.0
    %1099 = vmatpush1.msra.mxu0 0.0
    %1100 = vmatprep.subr.mxu0 0.0
    %1101 = vmatpush1.msra.mxu0 0.0
    %1102 = vmatprep.subr.mxu0 0.0
    %1103 = vmatpush1.msra.mxu0 0.0
    %1104 = vmatprep.mubr.f32.mxu0 0.0
    %1105 = vmatmul.mubr.f32.gmra.mrb[0].mxu0 %v1038
    %v1106 = vpop.f32.mrb[0].mxu0
    %v1107 = vadd.f32 0.0, %v1106
    %v1108 = vpop.f32.mrb[0].mxu0
    %1109 = vdwg.mxu0
    %1111 = vrot.lane.b32.xlu0 %v1026, 32
    %v1112 = vpop.permute.xlu0 %1111
    %v1113 = vsel %vm281, %v1112, 0
    %1115 = vmatprep.subr.mxu0 0.0
    %1116 = vmatpush1.msra.mxu0 %v1027
    %1117 = vmatprep.subr.mxu0 0.0
    %1118 = vmatpush1.msra.mxu0 %v1028
    %1119 = vmatprep.subr.mxu0 0.0
    %1120 = vmatpush1.msra.mxu0 %v1029
    %1121 = vmatprep.subr.mxu0 0.0
    %1122 = vmatpush1.msra.mxu0 %v1030
    %1123 = vmatprep.subr.mxu0 0.0
    %1124 = vmatpush1.msra.mxu0 0.0
    %1125 = vmatprep.subr.mxu0 0.0
    %1126 = vmatpush1.msra.mxu0 0.0
    %1127 = vmatprep.subr.mxu0 0.0
    %1128 = vmatpush1.msra.mxu0 0.0
    %1129 = vmatprep.subr.mxu0 0.0
    %1130 = vmatpush1.msra.mxu0 0.0
    %1131 = vmatprep.subr.mxu0 0.0
    %1132 = vmatpush1.msra.mxu0 0.0
    %1133 = vmatprep.subr.mxu0 0.0
    %1134 = vmatpush1.msra.mxu0 0.0
    %1135 = vmatprep.subr.mxu0 0.0
    %1136 = vmatpush1.msra.mxu0 0.0
    %1137 = vmatprep.subr.mxu0 0.0
    %1138 = vmatpush1.msra.mxu0 0.0
    %1139 = vmatprep.subr.mxu0 0.0
    %1140 = vmatpush1.msra.mxu0 0.0
    %1141 = vmatprep.subr.mxu0 0.0
    %1142 = vmatpush1.msra.mxu0 0.0
    %1143 = vmatprep.subr.mxu0 0.0
    %1144 = vmatpush1.msra.mxu0 0.0
    %1145 = vmatprep.subr.mxu0 0.0
    %1146 = vmatpush1.msra.mxu0 0.0
    %1147 = vmatprep.subr.mxu0 0.0
    %1148 = vmatpush1.msra.mxu0 0.0
    %1149 = vmatprep.subr.mxu0 0.0
    %1150 = vmatpush1.msra.mxu0 0.0
    %1151 = vmatprep.subr.mxu0 0.0
    %1152 = vmatpush1.msra.mxu0 0.0
    %1153 = vmatprep.subr.mxu0 0.0
    %1154 = vmatpush1.msra.mxu0 0.0
    %1155 = vmatprep.subr.mxu0 0.0
    %1156 = vmatpush1.msra.mxu0 0.0
    %1157 = vmatprep.subr.mxu0 0.0
    %1158 = vmatpush1.msra.mxu0 0.0
    %1159 = vmatprep.subr.mxu0 0.0
    %1160 = vmatpush1.msra.mxu0 0.0
    %1161 = vmatprep.subr.mxu0 0.0
    %1162 = vmatpush1.msra.mxu0 0.0
    %1163 = vmatprep.subr.mxu0 0.0
    %1164 = vmatpush1.msra.mxu0 0.0
    %1165 = vmatprep.subr.mxu0 0.0
    %1166 = vmatpush1.msra.mxu0 0.0
    %1167 = vmatprep.subr.mxu0 0.0
    %1168 = vmatpush1.msra.mxu0 0.0
    %1169 = vmatprep.subr.mxu0 0.0
    %1170 = vmatpush1.msra.mxu0 0.0
    %1171 = vmatprep.subr.mxu0 0.0
    %1172 = vmatpush1.msra.mxu0 0.0
    %1173 = vmatprep.subr.mxu0 0.0
    %1174 = vmatpush1.msra.mxu0 0.0
    %1175 = vmatprep.subr.mxu0 0.0
    %1176 = vmatpush1.msra.mxu0 0.0
    %1177 = vmatprep.subr.mxu0 0.0
    %1178 = vmatpush1.msra.mxu0 0.0
    %1179 = vmatprep.mubr.f32.mxu0 0.0
    %1180 = vmatmul.mubr.f32.gmra.mrb[0].mxu0 %v1113
    %v1181 = vpop.f32.mrb[0].mxu0
    %v1182 = vadd.f32 %v1107, %v1181
    %v1183 = vpop.f32.mrb[0].mxu0
    %1184 = vdwg.mxu0
    %v1185 = vld [vmem:[%s10] sm:$0x1]
    %v1187 = vlaneseq
    %v1188 = vshrl.u32 %v1187, 7
    %v1189 = vsub.s32 0, %v1188
    %v1190 = vrot.slane %v1185, %v1189
    %v1192 = vadd.f32 %v1182, %v1190
    %v1193 = vxor.u32 %v1192, 2147483648
    %v1194 = vmul.f32 %v1193, 1.442695
    %v1195 = vpow.pop %v1194
    %v1196 = vadd.f32 %v1195, 1.0
    %v1197 = vrcp.pop %v1196
    %v1198 = vmul.f32 1.0, %v1197
    %v1199 = vtanh.pop %v1192
    %v1200 = vmul.f32 %v1198, %v904
    %1202 = vrot.lane.b32.xlu0 %v1199, 64
    %v1203 = vpop.permute.xlu0 %1202
    %v1205 = vmul.f32 %v1198, %v1203
    %1207 = vrot.lane.b32.xlu0 %v1205, 32
    %v1208 = vpop.permute.xlu0 %1207
    %v1210 = vadd.f32 %v1200, %v1208
    %v1211 = vtanh.pop %v1210
    %1213 = vrot.lane.b32.xlu0 %v1211, 64
    %v1214 = vpop.permute.xlu0 %1213
    %v1216 = vmul.f32 %v1198, %v1214
    %v1217 = vsel %vm1023, %v1216, %v903
    %v1218 = vsel %vm1023, %v1210, %v904
    %v1219 = vsel %vm1023, %v1216, 0.0
    %1221 = vrot.lane.b32.xlu0 %v1219, 32
    %v1222 = vpop.permute.xlu0 %1221
    %s1224 = scalar_lea.vmem [#allocation3], 16
    %1225 = vst.msk [vmem:[%s1224] sm:$0xff] %vm281, %v1222
    %vm1226 = vcmp.gt.s32.totalorder %v113, 3
    %s1227 = scalar_lea.vmem [#allocation2], 24
    %v1228 = vld [vmem:[%s1227] sm:$0xff]
    %v1229 = vld [vmem:[%s6] sm:$0xff]
    %v1230 = vld [vmem:[%s6 + $0x8] sm:$0xff]
    %v1231 = vld [vmem:[%s6 + $0x10] sm:$0xff]
    %v1232 = vld [vmem:[%s6 + $0x18] sm:$0xff]
    %1234 = vrot.lane.b32.xlu0 %v1024, 32
    %v1235 = vpop.permute.xlu0 %1234
    %v1236 = vsel %vm281, %v1235, 0
    %1238 = vmatprep.subr.mxu0 0.0
    %1239 = vmatpush1.msra.mxu0 %v1229
    %1240 = vmatprep.subr.mxu0 0.0
    %1241 = vmatpush1.msra.mxu0 %v1230
    %1242 = vmatprep.subr.mxu0 0.0
    %1243 = vmatpush1.msra.mxu0 %v1231
    %1244 = vmatprep.subr.mxu0 0.0
    %1245 = vmatpush1.msra.mxu0 %v1232
    %1246 = vmatprep.subr.mxu0 0.0
    %1247 = vmatpush1.msra.mxu0 0.0
    %1248 = vmatprep.subr.mxu0 0.0
    %1249 = vmatpush1.msra.mxu0 0.0
    %1250 = vmatprep.subr.mxu0 0.0
    %1251 = vmatpush1.msra.mxu0 0.0
    %1252 = vmatprep.subr.mxu0 0.0
    %1253 = vmatpush1.msra.mxu0 0.0
    %1254 = vmatprep.subr.mxu0 0.0
    %1255 = vmatpush1.msra.mxu0 0.0
    %1256 = vmatprep.subr.mxu0 0.0
    %1257 = vmatpush1.msra.mxu0 0.0
    %1258 = vmatprep.subr.mxu0 0.0
    %1259 = vmatpush1.msra.mxu0 0.0
    %1260 = vmatprep.subr.mxu0 0.0
    %1261 = vmatpush1.msra.mxu0 0.0
    %1262 = vmatprep.subr.mxu0 0.0
    %1263 = vmatpush1.msra.mxu0 0.0
    %1264 = vmatprep.subr.mxu0 0.0
    %1265 = vmatpush1.msra.mxu0 0.0
    %1266 = vmatprep.subr.mxu0 0.0
    %1267 = vmatpush1.msra.mxu0 0.0
    %1268 = vmatprep.subr.mxu0 0.0
    %1269 = vmatpush1.msra.mxu0 0.0
    %1270 = vmatprep.subr.mxu0 0.0
    %1271 = vmatpush1.msra.mxu0 0.0
    %1272 = vmatprep.subr.mxu0 0.0
    %1273 = vmatpush1.msra.mxu0 0.0
    %1274 = vmatprep.subr.mxu0 0.0
    %1275 = vmatpush1.msra.mxu0 0.0
    %1276 = vmatprep.subr.mxu0 0.0
    %1277 = vmatpush1.msra.mxu0 0.0
    %1278 = vmatprep.subr.mxu0 0.0
    %1279 = vmatpush1.msra.mxu0 0.0
    %1280 = vmatprep.subr.mxu0 0.0
    %1281 = vmatpush1.msra.mxu0 0.0
    %1282 = vmatprep.subr.mxu0 0.0
    %1283 = vmatpush1.msra.mxu0 0.0
    %1284 = vmatprep.subr.mxu0 0.0
    %1285 = vmatpush1.msra.mxu0 0.0
    %1286 = vmatprep.subr.mxu0 0.0
    %1287 = vmatpush1.msra.mxu0 0.0
    %1288 = vmatprep.subr.mxu0 0.0
    %1289 = vmatpush1.msra.mxu0 0.0
    %1290 = vmatprep.subr.mxu0 0.0
    %1291 = vmatpush1.msra.mxu0 0.0
    %1292 = vmatprep.subr.mxu0 0.0
    %1293 = vmatpush1.msra.mxu0 0.0
    %1294 = vmatprep.subr.mxu0 0.0
    %1295 = vmatpush1.msra.mxu0 0.0
    %1296 = vmatprep.subr.mxu0 0.0
    %1297 = vmatpush1.msra.mxu0 0.0
    %1298 = vmatprep.subr.mxu0 0.0
    %1299 = vmatpush1.msra.mxu0 0.0
    %1300 = vmatprep.subr.mxu0 0.0
    %1301 = vmatpush1.msra.mxu0 0.0
    %1302 = vmatprep.mubr.f32.mxu0 0.0
    %1303 = vmatmul.mubr.f32.gmra.mrb[0].mxu0 %v1236
    %v1304 = vpop.f32.mrb[0].mxu0
    %v1305 = vadd.f32 0.0, %v1304
    %v1306 = vpop.f32.mrb[0].mxu0
    %1307 = vdwg.mxu0
    %v1308 = vadd.f32 %v1228, %v1305
    %v1309 = vxor.u32 %v1308, 2147483648
    %v1310 = vmul.f32 %v1309, 1.442695
    %v1311 = vpow.pop %v1310
    %v1312 = vadd.f32 %v1311, 1.0
    %v1313 = vrcp.pop %v1312
    %v1314 = vmul.f32 1.0, %v1313
    %v1315 = vtanh.pop %v1308
    %v1316 = vmul.f32 %v1314, %v1025
    %1318 = vrot.lane.b32.xlu0 %v1315, 64
    %v1319 = vpop.permute.xlu0 %1318
    %v1321 = vmul.f32 %v1314, %v1319
    %1323 = vrot.lane.b32.xlu0 %v1321, 32
    %v1324 = vpop.permute.xlu0 %1323
    %v1326 = vadd.f32 %v1316, %v1324
    %v1327 = vtanh.pop %v1326
    %1329 = vrot.lane.b32.xlu0 %v1327, 64
    %v1330 = vpop.permute.xlu0 %1329
    %v1332 = vmul.f32 %v1314, %v1330
    %v1333 = vsel %vm1226, 1, 0
    %1334 = vset.pattern.permute.xlu0 0
    %1335 = vperm.xlu0 %1334, %v1333
    %v1336 = vpop.permute.xlu0 %1335
    %vm1337 = vcmp.eq.s32.totalorder %v1336, 1
    %v1338 = vsel %vm1337, %v1332, %v1024
    %v1339 = vsel %vm1337, %v1326, %v1025
    %v1340 = vsel %vm1337, %v1332, 0.0
    %v1341 = vld [vmem:[%s8] sm:$0xff]
    %v1342 = vld [vmem:[%s8 + $0x8] sm:$0xff]
    %v1343 = vld [vmem:[%s8 + $0x10] sm:$0xff]
    %v1344 = vld [vmem:[%s8 + $0x18] sm:$0xff]
    %v1345 = vld [vmem:[#allocation14] sm:$0xff]
    %v1346 = vld [vmem:[#allocation14 + $0x8] sm:$0xff]
    %v1347 = vld [vmem:[#allocation14 + $0x10] sm:$0xff]
    %v1348 = vld [vmem:[#allocation14 + $0x18] sm:$0xff]
    %1350 = vrot.lane.b32.xlu0 %v1217, 32
    %v1351 = vpop.permute.xlu0 %1350
    %v1352 = vsel %vm281, %v1351, 0
    %1354 = vmatprep.subr.mxu0 0.0
    %1355 = vmatpush1.msra.mxu0 %v1345
    %1356 = vmatprep.subr.mxu0 0.0
    %1357 = vmatpush1.msra.mxu0 %v1346
    %1358 = vmatprep.subr.mxu0 0.0
    %1359 = vmatpush1.msra.mxu0 %v1347
    %1360 = vmatprep.subr.mxu0 0.0
    %1361 = vmatpush1.msra.mxu0 %v1348
    %1362 = vmatprep.subr.mxu0 0.0
    %1363 = vmatpush1.msra.mxu0 0.0
    %1364 = vmatprep.subr.mxu0 0.0
    %1365 = vmatpush1.msra.mxu0 0.0
    %1366 = vmatprep.subr.mxu0 0.0
    %1367 = vmatpush1.msra.mxu0 0.0
    %1368 = vmatprep.subr.mxu0 0.0
    %1369 = vmatpush1.msra.mxu0 0.0
    %1370 = vmatprep.subr.mxu0 0.0
    %1371 = vmatpush1.msra.mxu0 0.0
    %1372 = vmatprep.subr.mxu0 0.0
    %1373 = vmatpush1.msra.mxu0 0.0
    %1374 = vmatprep.subr.mxu0 0.0
    %1375 = vmatpush1.msra.mxu0 0.0
    %1376 = vmatprep.subr.mxu0 0.0
    %1377 = vmatpush1.msra.mxu0 0.0
    %1378 = vmatprep.subr.mxu0 0.0
    %1379 = vmatpush1.msra.mxu0 0.0
    %1380 = vmatprep.subr.mxu0 0.0
    %1381 = vmatpush1.msra.mxu0 0.0
    %1382 = vmatprep.subr.mxu0 0.0
    %1383 = vmatpush1.msra.mxu0 0.0
    %1384 = vmatprep.subr.mxu0 0.0
    %1385 = vmatpush1.msra.mxu0 0.0
    %1386 = vmatprep.subr.mxu0 0.0
    %1387 = vmatpush1.msra.mxu0 0.0
    %1388 = vmatprep.subr.mxu0 0.0
    %1389 = vmatpush1.msra.mxu0 0.0
    %1390 = vmatprep.subr.mxu0 0.0
    %1391 = vmatpush1.msra.mxu0 0.0
    %1392 = vmatprep.subr.mxu0 0.0
    %1393 = vmatpush1.msra.mxu0 0.0
    %1394 = vmatprep.subr.mxu0 0.0
    %1395 = vmatpush1.msra.mxu0 0.0
    %1396 = vmatprep.subr.mxu0 0.0
    %1397 = vmatpush1.msra.mxu0 0.0
    %1398 = vmatprep.subr.mxu0 0.0
    %1399 = vmatpush1.msra.mxu0 0.0
    %1400 = vmatprep.subr.mxu0 0.0
    %1401 = vmatpush1.msra.mxu0 0.0
    %1402 = vmatprep.subr.mxu0 0.0
    %1403 = vmatpush1.msra.mxu0 0.0
    %1404 = vmatprep.subr.mxu0 0.0
    %1405 = vmatpush1.msra.mxu0 0.0
    %1406 = vmatprep.subr.mxu0 0.0
    %1407 = vmatpush1.msra.mxu0 0.0
    %1408 = vmatprep.subr.mxu0 0.0
    %1409 = vmatpush1.msra.mxu0 0.0
    %1410 = vmatprep.subr.mxu0 0.0
    %1411 = vmatpush1.msra.mxu0 0.0
    %1412 = vmatprep.subr.mxu0 0.0
    %1413 = vmatpush1.msra.mxu0 0.0
    %1414 = vmatprep.subr.mxu0 0.0
    %1415 = vmatpush1.msra.mxu0 0.0
    %1416 = vmatprep.subr.mxu0 0.0
    %1417 = vmatpush1.msra.mxu0 0.0
    %1418 = vmatprep.mubr.f32.mxu0 0.0
    %1419 = vmatmul.mubr.f32.gmra.mrb[0].mxu0 %v1352
    %v1420 = vpop.f32.mrb[0].mxu0
    %v1421 = vadd.f32 0.0, %v1420
    %v1422 = vpop.f32.mrb[0].mxu0
    %1423 = vdwg.mxu0
    %1425 = vrot.lane.b32.xlu0 %v1340, 32
    %v1426 = vpop.permute.xlu0 %1425
    %v1427 = vsel %vm281, %v1426, 0
    %1429 = vmatprep.subr.mxu0 0.0
    %1430 = vmatpush1.msra.mxu0 %v1341
    %1431 = vmatprep.subr.mxu0 0.0
    %1432 = vmatpush1.msra.mxu0 %v1342
    %1433 = vmatprep.subr.mxu0 0.0
    %1434 = vmatpush1.msra.mxu0 %v1343
    %1435 = vmatprep.subr.mxu0 0.0
    %1436 = vmatpush1.msra.mxu0 %v1344
    %1437 = vmatprep.subr.mxu0 0.0
    %1438 = vmatpush1.msra.mxu0 0.0
    %1439 = vmatprep.subr.mxu0 0.0
    %1440 = vmatpush1.msra.mxu0 0.0
    %1441 = vmatprep.subr.mxu0 0.0
    %1442 = vmatpush1.msra.mxu0 0.0
    %1443 = vmatprep.subr.mxu0 0.0
    %1444 = vmatpush1.msra.mxu0 0.0
    %1445 = vmatprep.subr.mxu0 0.0
    %1446 = vmatpush1.msra.mxu0 0.0
    %1447 = vmatprep.subr.mxu0 0.0
    %1448 = vmatpush1.msra.mxu0 0.0
    %1449 = vmatprep.subr.mxu0 0.0
    %1450 = vmatpush1.msra.mxu0 0.0
    %1451 = vmatprep.subr.mxu0 0.0
    %1452 = vmatpush1.msra.mxu0 0.0
    %1453 = vmatprep.subr.mxu0 0.0
    %1454 = vmatpush1.msra.mxu0 0.0
    %1455 = vmatprep.subr.mxu0 0.0
    %1456 = vmatpush1.msra.mxu0 0.0
    %1457 = vmatprep.subr.mxu0 0.0
    %1458 = vmatpush1.msra.mxu0 0.0
    %1459 = vmatprep.subr.mxu0 0.0
    %1460 = vmatpush1.msra.mxu0 0.0
    %1461 = vmatprep.subr.mxu0 0.0
    %1462 = vmatpush1.msra.mxu0 0.0
    %1463 = vmatprep.subr.mxu0 0.0
    %1464 = vmatpush1.msra.mxu0 0.0
    %1465 = vmatprep.subr.mxu0 0.0
    %1466 = vmatpush1.msra.mxu0 0.0
    %1467 = vmatprep.subr.mxu0 0.0
    %1468 = vmatpush1.msra.mxu0 0.0
    %1469 = vmatprep.subr.mxu0 0.0
    %1470 = vmatpush1.msra.mxu0 0.0
    %1471 = vmatprep.subr.mxu0 0.0
    %1472 = vmatpush1.msra.mxu0 0.0
    %1473 = vmatprep.subr.mxu0 0.0
    %1474 = vmatpush1.msra.mxu0 0.0
    %1475 = vmatprep.subr.mxu0 0.0
    %1476 = vmatpush1.msra.mxu0 0.0
    %1477 = vmatprep.subr.mxu0 0.0
    %1478 = vmatpush1.msra.mxu0 0.0
    %1479 = vmatprep.subr.mxu0 0.0
    %1480 = vmatpush1.msra.mxu0 0.0
    %1481 = vmatprep.subr.mxu0 0.0
    %1482 = vmatpush1.msra.mxu0 0.0
    %1483 = vmatprep.subr.mxu0 0.0
    %1484 = vmatpush1.msra.mxu0 0.0
    %1485 = vmatprep.subr.mxu0 0.0
    %1486 = vmatpush1.msra.mxu0 0.0
    %1487 = vmatprep.subr.mxu0 0.0
    %1488 = vmatpush1.msra.mxu0 0.0
    %1489 = vmatprep.subr.mxu0 0.0
    %1490 = vmatpush1.msra.mxu0 0.0
    %1491 = vmatprep.subr.mxu0 0.0
    %1492 = vmatpush1.msra.mxu0 0.0
    %1493 = vmatprep.mubr.f32.mxu0 0.0
    %1494 = vmatmul.mubr.f32.gmra.mrb[0].mxu0 %v1427
    %v1495 = vpop.f32.mrb[0].mxu0
    %v1496 = vadd.f32 %v1421, %v1495
    %v1497 = vpop.f32.mrb[0].mxu0
    %1498 = vdwg.mxu0
    %v1499 = vld [vmem:[%s10] sm:$0x1]
    %v1501 = vlaneseq
    %v1502 = vshrl.u32 %v1501, 7
    %v1503 = vsub.s32 0, %v1502
    %v1504 = vrot.slane %v1499, %v1503
    %v1506 = vadd.f32 %v1496, %v1504
    %v1507 = vxor.u32 %v1506, 2147483648
    %v1508 = vmul.f32 %v1507, 1.442695
    %v1509 = vpow.pop %v1508
    %v1510 = vadd.f32 %v1509, 1.0
    %v1511 = vrcp.pop %v1510
    %v1512 = vmul.f32 1.0, %v1511
    %v1513 = vtanh.pop %v1506
    %v1514 = vmul.f32 %v1512, %v1218
    %1516 = vrot.lane.b32.xlu0 %v1513, 64
    %v1517 = vpop.permute.xlu0 %1516
    %v1519 = vmul.f32 %v1512, %v1517
    %1521 = vrot.lane.b32.xlu0 %v1519, 32
    %v1522 = vpop.permute.xlu0 %1521
    %v1524 = vadd.f32 %v1514, %v1522
    %v1525 = vtanh.pop %v1524
    %1527 = vrot.lane.b32.xlu0 %v1525, 64
    %v1528 = vpop.permute.xlu0 %1527
    %v1530 = vmul.f32 %v1512, %v1528
    %v1531 = vsel %vm1337, %v1530, %v1217
    %v1532 = vsel %vm1337, %v1524, %v1218
    %v1533 = vsel %vm1337, %v1530, 0.0
    %1535 = vrot.lane.b32.xlu0 %v1533, 32
    %v1536 = vpop.permute.xlu0 %1535
    %s1538 = scalar_lea.vmem [#allocation3], 24
    %1539 = vst.msk [vmem:[%s1538] sm:$0xff] %vm281, %v1536
    %vm1540 = vcmp.gt.s32.totalorder %v113, 4
    %s1541 = scalar_lea.vmem [#allocation2], 32
    %v1542 = vld [vmem:[%s1541] sm:$0xff]
    %v1543 = vld [vmem:[%s6] sm:$0xff]
    %v1544 = vld [vmem:[%s6 + $0x8] sm:$0xff]
    %v1545 = vld [vmem:[%s6 + $0x10] sm:$0xff]
    %v1546 = vld [vmem:[%s6 + $0x18] sm:$0xff]
    %1548 = vrot.lane.b32.xlu0 %v1338, 32
    %v1549 = vpop.permute.xlu0 %1548
    %v1550 = vsel %vm281, %v1549, 0
    %1552 = vmatprep.subr.mxu0 0.0
    %1553 = vmatpush1.msra.mxu0 %v1543
    %1554 = vmatprep.subr.mxu0 0.0
    %1555 = vmatpush1.msra.mxu0 %v1544
    %1556 = vmatprep.subr.mxu0 0.0
    %1557 = vmatpush1.msra.mxu0 %v1545
    %1558 = vmatprep.subr.mxu0 0.0
    %1559 = vmatpush1.msra.mxu0 %v1546
    %1560 = vmatprep.subr.mxu0 0.0
    %1561 = vmatpush1.msra.mxu0 0.0
    %1562 = vmatprep.subr.mxu0 0.0
    %1563 = vmatpush1.msra.mxu0 0.0
    %1564 = vmatprep.subr.mxu0 0.0
    %1565 = vmatpush1.msra.mxu0 0.0
    %1566 = vmatprep.subr.mxu0 0.0
    %1567 = vmatpush1.msra.mxu0 0.0
    %1568 = vmatprep.subr.mxu0 0.0
    %1569 = vmatpush1.msra.mxu0 0.0
    %1570 = vmatprep.subr.mxu0 0.0
    %1571 = vmatpush1.msra.mxu0 0.0
    %1572 = vmatprep.subr.mxu0 0.0
    %1573 = vmatpush1.msra.mxu0 0.0
    %1574 = vmatprep.subr.mxu0 0.0
    %1575 = vmatpush1.msra.mxu0 0.0
    %1576 = vmatprep.subr.mxu0 0.0
    %1577 = vmatpush1.msra.mxu0 0.0
    %1578 = vmatprep.subr.mxu0 0.0
    %1579 = vmatpush1.msra.mxu0 0.0
    %1580 = vmatprep.subr.mxu0 0.0
    %1581 = vmatpush1.msra.mxu0 0.0
    %1582 = vmatprep.subr.mxu0 0.0
    %1583 = vmatpush1.msra.mxu0 0.0
    %1584 = vmatprep.subr.mxu0 0.0
    %1585 = vmatpush1.msra.mxu0 0.0
    %1586 = vmatprep.subr.mxu0 0.0
    %1587 = vmatpush1.msra.mxu0 0.0
    %1588 = vmatprep.subr.mxu0 0.0
    %1589 = vmatpush1.msra.mxu0 0.0
    %1590 = vmatprep.subr.mxu0 0.0
    %1591 = vmatpush1.msra.mxu0 0.0
    %1592 = vmatprep.subr.mxu0 0.0
    %1593 = vmatpush1.msra.mxu0 0.0
    %1594 = vmatprep.subr.mxu0 0.0
    %1595 = vmatpush1.msra.mxu0 0.0
    %1596 = vmatprep.subr.mxu0 0.0
    %1597 = vmatpush1.msra.mxu0 0.0
    %1598 = vmatprep.subr.mxu0 0.0
    %1599 = vmatpush1.msra.mxu0 0.0
    %1600 = vmatprep.subr.mxu0 0.0
    %1601 = vmatpush1.msra.mxu0 0.0
    %1602 = vmatprep.subr.mxu0 0.0
    %1603 = vmatpush1.msra.mxu0 0.0
    %1604 = vmatprep.subr.mxu0 0.0
    %1605 = vmatpush1.msra.mxu0 0.0
    %1606 = vmatprep.subr.mxu0 0.0
    %1607 = vmatpush1.msra.mxu0 0.0
    %1608 = vmatprep.subr.mxu0 0.0
    %1609 = vmatpush1.msra.mxu0 0.0
    %1610 = vmatprep.subr.mxu0 0.0
    %1611 = vmatpush1.msra.mxu0 0.0
    %1612 = vmatprep.subr.mxu0 0.0
    %1613 = vmatpush1.msra.mxu0 0.0
    %1614 = vmatprep.subr.mxu0 0.0
    %1615 = vmatpush1.msra.mxu0 0.0
    %1616 = vmatprep.mubr.f32.mxu0 0.0
    %1617 = vmatmul.mubr.f32.gmra.mrb[0].mxu0 %v1550
    %v1618 = vpop.f32.mrb[0].mxu0
    %v1619 = vadd.f32 0.0, %v1618
    %v1620 = vpop.f32.mrb[0].mxu0
    %1621 = vdwg.mxu0
    %v1622 = vadd.f32 %v1542, %v1619
    %v1623 = vxor.u32 %v1622, 2147483648
    %v1624 = vmul.f32 %v1623, 1.442695
    %v1625 = vpow.pop %v1624
    %v1626 = vadd.f32 %v1625, 1.0
    %v1627 = vrcp.pop %v1626
    %v1628 = vmul.f32 1.0, %v1627
    %v1629 = vtanh.pop %v1622
    %v1630 = vmul.f32 %v1628, %v1339
    %1632 = vrot.lane.b32.xlu0 %v1629, 64
    %v1633 = vpop.permute.xlu0 %1632
    %v1635 = vmul.f32 %v1628, %v1633
    %1637 = vrot.lane.b32.xlu0 %v1635, 32
    %v1638 = vpop.permute.xlu0 %1637
    %v1640 = vadd.f32 %v1630, %v1638
    %v1641 = vtanh.pop %v1640
    %1643 = vrot.lane.b32.xlu0 %v1641, 64
    %v1644 = vpop.permute.xlu0 %1643
    %v1646 = vmul.f32 %v1628, %v1644
    %v1647 = vsel %vm1540, 1, 0
    %1648 = vset.pattern.permute.xlu0 0
    %1649 = vperm.xlu0 %1648, %v1647
    %v1650 = vpop.permute.xlu0 %1649
    %vm1651 = vcmp.eq.s32.totalorder %v1650, 1
    %v1652 = vsel %vm1651, %v1646, %v1338
    %v1653 = vsel %vm1651, %v1640, %v1339
    %v1654 = vsel %vm1651, %v1646, 0.0
    %v1655 = vld [vmem:[%s8] sm:$0xff]
    %v1656 = vld [vmem:[%s8 + $0x8] sm:$0xff]
    %v1657 = vld [vmem:[%s8 + $0x10] sm:$0xff]
    %v1658 = vld [vmem:[%s8 + $0x18] sm:$0xff]
    %v1659 = vld [vmem:[#allocation14] sm:$0xff]
    %v1660 = vld [vmem:[#allocation14 + $0x8] sm:$0xff]
    %v1661 = vld [vmem:[#allocation14 + $0x10] sm:$0xff]
    %v1662 = vld [vmem:[#allocation14 + $0x18] sm:$0xff]
    %1664 = vrot.lane.b32.xlu0 %v1531, 32
    %v1665 = vpop.permute.xlu0 %1664
    %v1666 = vsel %vm281, %v1665, 0
    %1668 = vmatprep.subr.mxu0 0.0
    %1669 = vmatpush1.msra.mxu0 %v1659
    %1670 = vmatprep.subr.mxu0 0.0
    %1671 = vmatpush1.msra.mxu0 %v1660
    %1672 = vmatprep.subr.mxu0 0.0
    %1673 = vmatpush1.msra.mxu0 %v1661
    %1674 = vmatprep.subr.mxu0 0.0
    %1675 = vmatpush1.msra.mxu0 %v1662
    %1676 = vmatprep.subr.mxu0 0.0
    %1677 = vmatpush1.msra.mxu0 0.0
    %1678 = vmatprep.subr.mxu0 0.0
    %1679 = vmatpush1.msra.mxu0 0.0
    %1680 = vmatprep.subr.mxu0 0.0
    %1681 = vmatpush1.msra.mxu0 0.0
    %1682 = vmatprep.subr.mxu0 0.0
    %1683 = vmatpush1.msra.mxu0 0.0
    %1684 = vmatprep.subr.mxu0 0.0
    %1685 = vmatpush1.msra.mxu0 0.0
    %1686 = vmatprep.subr.mxu0 0.0
    %1687 = vmatpush1.msra.mxu0 0.0
    %1688 = vmatprep.subr.mxu0 0.0
    %1689 = vmatpush1.msra.mxu0 0.0
    %1690 = vmatprep.subr.mxu0 0.0
    %1691 = vmatpush1.msra.mxu0 0.0
    %1692 = vmatprep.subr.mxu0 0.0
    %1693 = vmatpush1.msra.mxu0 0.0
    %1694 = vmatprep.subr.mxu0 0.0
    %1695 = vmatpush1.msra.mxu0 0.0
    %1696 = vmatprep.subr.mxu0 0.0
    %1697 = vmatpush1.msra.mxu0 0.0
    %1698 = vmatprep.subr.mxu0 0.0
    %1699 = vmatpush1.msra.mxu0 0.0
    %1700 = vmatprep.subr.mxu0 0.0
    %1701 = vmatpush1.msra.mxu0 0.0
    %1702 = vmatprep.subr.mxu0 0.0
    %1703 = vmatpush1.msra.mxu0 0.0
    %1704 = vmatprep.subr.mxu0 0.0
    %1705 = vmatpush1.msra.mxu0 0.0
    %1706 = vmatprep.subr.mxu0 0.0
    %1707 = vmatpush1.msra.mxu0 0.0
    %1708 = vmatprep.subr.mxu0 0.0
    %1709 = vmatpush1.msra.mxu0 0.0
    %1710 = vmatprep.subr.mxu0 0.0
    %1711 = vmatpush1.msra.mxu0 0.0
    %1712 = vmatprep.subr.mxu0 0.0
    %1713 = vmatpush1.msra.mxu0 0.0
    %1714 = vmatprep.subr.mxu0 0.0
    %1715 = vmatpush1.msra.mxu0 0.0
    %1716 = vmatprep.subr.mxu0 0.0
    %1717 = vmatpush1.msra.mxu0 0.0
    %1718 = vmatprep.subr.mxu0 0.0
    %1719 = vmatpush1.msra.mxu0 0.0
    %1720 = vmatprep.subr.mxu0 0.0
    %1721 = vmatpush1.msra.mxu0 0.0
    %1722 = vmatprep.subr.mxu0 0.0
    %1723 = vmatpush1.msra.mxu0 0.0
    %1724 = vmatprep.subr.mxu0 0.0
    %1725 = vmatpush1.msra.mxu0 0.0
    %1726 = vmatprep.subr.mxu0 0.0
    %1727 = vmatpush1.msra.mxu0 0.0
    %1728 = vmatprep.subr.mxu0 0.0
    %1729 = vmatpush1.msra.mxu0 0.0
    %1730 = vmatprep.subr.mxu0 0.0
    %1731 = vmatpush1.msra.mxu0 0.0
    %1732 = vmatprep.mubr.f32.mxu0 0.0
    %1733 = vmatmul.mubr.f32.gmra.mrb[0].mxu0 %v1666
    %v1734 = vpop.f32.mrb[0].mxu0
    %v1735 = vadd.f32 0.0, %v1734
    %v1736 = vpop.f32.mrb[0].mxu0
    %1737 = vdwg.mxu0
    %1739 = vrot.lane.b32.xlu0 %v1654, 32
    %v1740 = vpop.permute.xlu0 %1739
    %v1741 = vsel %vm281, %v1740, 0
    %1743 = vmatprep.subr.mxu0 0.0
    %1744 = vmatpush1.msra.mxu0 %v1655
    %1745 = vmatprep.subr.mxu0 0.0
    %1746 = vmatpush1.msra.mxu0 %v1656
    %1747 = vmatprep.subr.mxu0 0.0
    %1748 = vmatpush1.msra.mxu0 %v1657
    %1749 = vmatprep.subr.mxu0 0.0
    %1750 = vmatpush1.msra.mxu0 %v1658
    %1751 = vmatprep.subr.mxu0 0.0
    %1752 = vmatpush1.msra.mxu0 0.0
    %1753 = vmatprep.subr.mxu0 0.0
    %1754 = vmatpush1.msra.mxu0 0.0
    %1755 = vmatprep.subr.mxu0 0.0
    %1756 = vmatpush1.msra.mxu0 0.0
    %1757 = vmatprep.subr.mxu0 0.0
    %1758 = vmatpush1.msra.mxu0 0.0
    %1759 = vmatprep.subr.mxu0 0.0
    %1760 = vmatpush1.msra.mxu0 0.0
    %1761 = vmatprep.subr.mxu0 0.0
    %1762 = vmatpush1.msra.mxu0 0.0
    %1763 = vmatprep.subr.mxu0 0.0
    %1764 = vmatpush1.msra.mxu0 0.0
    %1765 = vmatprep.subr.mxu0 0.0
    %1766 = vmatpush1.msra.mxu0 0.0
    %1767 = vmatprep.subr.mxu0 0.0
    %1768 = vmatpush1.msra.mxu0 0.0
    %1769 = vmatprep.subr.mxu0 0.0
    %1770 = vmatpush1.msra.mxu0 0.0
    %1771 = vmatprep.subr.mxu0 0.0
    %1772 = vmatpush1.msra.mxu0 0.0
    %1773 = vmatprep.subr.mxu0 0.0
    %1774 = vmatpush1.msra.mxu0 0.0
    %1775 = vmatprep.subr.mxu0 0.0
    %1776 = vmatpush1.msra.mxu0 0.0
    %1777 = vmatprep.subr.mxu0 0.0
    %1778 = vmatpush1.msra.mxu0 0.0
    %1779 = vmatprep.subr.mxu0 0.0
    %1780 = vmatpush1.msra.mxu0 0.0
    %1781 = vmatprep.subr.mxu0 0.0
    %1782 = vmatpush1.msra.mxu0 0.0
    %1783 = vmatprep.subr.mxu0 0.0
    %1784 = vmatpush1.msra.mxu0 0.0
    %1785 = vmatprep.subr.mxu0 0.0
    %1786 = vmatpush1.msra.mxu0 0.0
    %1787 = vmatprep.subr.mxu0 0.0
    %1788 = vmatpush1.msra.mxu0 0.0
    %1789 = vmatprep.subr.mxu0 0.0
    %1790 = vmatpush1.msra.mxu0 0.0
    %1791 = vmatprep.subr.mxu0 0.0
    %1792 = vmatpush1.msra.mxu0 0.0
    %1793 = vmatprep.subr.mxu0 0.0
    %1794 = vmatpush1.msra.mxu0 0.0
    %1795 = vmatprep.subr.mxu0 0.0
    %1796 = vmatpush1.msra.mxu0 0.0
    %1797 = vmatprep.subr.mxu0 0.0
    %1798 = vmatpush1.msra.mxu0 0.0
    %1799 = vmatprep.subr.mxu0 0.0
    %1800 = vmatpush1.msra.mxu0 0.0
    %1801 = vmatprep.subr.mxu0 0.0
    %1802 = vmatpush1.msra.mxu0 0.0
    %1803 = vmatprep.subr.mxu0 0.0
    %1804 = vmatpush1.msra.mxu0 0.0
    %1805 = vmatprep.subr.mxu0 0.0
    %1806 = vmatpush1.msra.mxu0 0.0
    %1807 = vmatprep.mubr.f32.mxu0 0.0
    %1808 = vmatmul.mubr.f32.gmra.mrb[0].mxu0 %v1741
    %v1809 = vpop.f32.mrb[0].mxu0
    %v1810 = vadd.f32 %v1735, %v1809
    %v1811 = vpop.f32.mrb[0].mxu0
    %1812 = vdwg.mxu0
    %v1813 = vld [vmem:[%s10] sm:$0x1]
    %v1815 = vlaneseq
    %v1816 = vshrl.u32 %v1815, 7
    %v1817 = vsub.s32 0, %v1816
    %v1818 = vrot.slane %v1813, %v1817
    %v1820 = vadd.f32 %v1810, %v1818
    %v1821 = vxor.u32 %v1820, 2147483648
    %v1822 = vmul.f32 %v1821, 1.442695
    %v1823 = vpow.pop %v1822
    %v1824 = vadd.f32 %v1823, 1.0
    %v1825 = vrcp.pop %v1824
    %v1826 = vmul.f32 1.0, %v1825
    %v1827 = vtanh.pop %v1820
    %v1828 = vmul.f32 %v1826, %v1532
    %1830 = vrot.lane.b32.xlu0 %v1827, 64
    %v1831 = vpop.permute.xlu0 %1830
    %v1833 = vmul.f32 %v1826, %v1831
    %1835 = vrot.lane.b32.xlu0 %v1833, 32
    %v1836 = vpop.permute.xlu0 %1835
    %v1838 = vadd.f32 %v1828, %v1836
    %v1839 = vtanh.pop %v1838
    %1841 = vrot.lane.b32.xlu0 %v1839, 64
    %v1842 = vpop.permute.xlu0 %1841
    %v1844 = vmul.f32 %v1826, %v1842
    %v1845 = vsel %vm1651, %v1844, %v1531
    %v1846 = vsel %vm1651, %v1838, %v1532
    %v1847 = vsel %vm1651, %v1844, 0.0
    %1849 = vrot.lane.b32.xlu0 %v1847, 32
    %v1850 = vpop.permute.xlu0 %1849
    %s1852 = scalar_lea.vmem [#allocation3], 32
    %1853 = vst.msk [vmem:[%s1852] sm:$0xff] %vm281, %v1850
    %vm1854 = vcmp.gt.s32.totalorder %v113, 5
    %s1855 = scalar_lea.vmem [#allocation2], 40
    %v1856 = vld [vmem:[%s1855] sm:$0xff]
    %v1857 = vld [vmem:[%s6] sm:$0xff]
    %v1858 = vld [vmem:[%s6 + $0x8] sm:$0xff]
    %v1859 = vld [vmem:[%s6 + $0x10] sm:$0xff]
    %v1860 = vld [vmem:[%s6 + $0x18] sm:$0xff]
    %1862 = vrot.lane.b32.xlu0 %v1652, 32
    %v1863 = vpop.permute.xlu0 %1862
    %v1864 = vsel %vm281, %v1863, 0
    %1866 = vmatprep.subr.mxu0 0.0
    %1867 = vmatpush1.msra.mxu0 %v1857
    %1868 = vmatprep.subr.mxu0 0.0
    %1869 = vmatpush1.msra.mxu0 %v1858
    %1870 = vmatprep.subr.mxu0 0.0
    %1871 = vmatpush1.msra.mxu0 %v1859
    %1872 = vmatprep.subr.mxu0 0.0
    %1873 = vmatpush1.msra.mxu0 %v1860
    %1874 = vmatprep.subr.mxu0 0.0
    %1875 = vmatpush1.msra.mxu0 0.0
    %1876 = vmatprep.subr.mxu0 0.0
    %1877 = vmatpush1.msra.mxu0 0.0
    %1878 = vmatprep.subr.mxu0 0.0
    %1879 = vmatpush1.msra.mxu0 0.0
    %1880 = vmatprep.subr.mxu0 0.0
    %1881 = vmatpush1.msra.mxu0 0.0
    %1882 = vmatprep.subr.mxu0 0.0
    %1883 = vmatpush1.msra.mxu0 0.0
    %1884 = vmatprep.subr.mxu0 0.0
    %1885 = vmatpush1.msra.mxu0 0.0
    %1886 = vmatprep.subr.mxu0 0.0
    %1887 = vmatpush1.msra.mxu0 0.0
    %1888 = vmatprep.subr.mxu0 0.0
    %1889 = vmatpush1.msra.mxu0 0.0
    %1890 = vmatprep.subr.mxu0 0.0
    %1891 = vmatpush1.msra.mxu0 0.0
    %1892 = vmatprep.subr.mxu0 0.0
    %1893 = vmatpush1.msra.mxu0 0.0
    %1894 = vmatprep.subr.mxu0 0.0
    %1895 = vmatpush1.msra.mxu0 0.0
    %1896 = vmatprep.subr.mxu0 0.0
    %1897 = vmatpush1.msra.mxu0 0.0
    %1898 = vmatprep.subr.mxu0 0.0
    %1899 = vmatpush1.msra.mxu0 0.0
    %1900 = vmatprep.subr.mxu0 0.0
    %1901 = vmatpush1.msra.mxu0 0.0
    %1902 = vmatprep.subr.mxu0 0.0
    %1903 = vmatpush1.msra.mxu0 0.0
    %1904 = vmatprep.subr.mxu0 0.0
    %1905 = vmatpush1.msra.mxu0 0.0
    %1906 = vmatprep.subr.mxu0 0.0
    %1907 = vmatpush1.msra.mxu0 0.0
    %1908 = vmatprep.subr.mxu0 0.0
    %1909 = vmatpush1.msra.mxu0 0.0
    %1910 = vmatprep.subr.mxu0 0.0
    %1911 = vmatpush1.msra.mxu0 0.0
    %1912 = vmatprep.subr.mxu0 0.0
    %1913 = vmatpush1.msra.mxu0 0.0
    %1914 = vmatprep.subr.mxu0 0.0
    %1915 = vmatpush1.msra.mxu0 0.0
    %1916 = vmatprep.subr.mxu0 0.0
    %1917 = vmatpush1.msra.mxu0 0.0
    %1918 = vmatprep.subr.mxu0 0.0
    %1919 = vmatpush1.msra.mxu0 0.0
    %1920 = vmatprep.subr.mxu0 0.0
    %1921 = vmatpush1.msra.mxu0 0.0
    %1922 = vmatprep.subr.mxu0 0.0
    %1923 = vmatpush1.msra.mxu0 0.0
    %1924 = vmatprep.subr.mxu0 0.0
    %1925 = vmatpush1.msra.mxu0 0.0
    %1926 = vmatprep.subr.mxu0 0.0
    %1927 = vmatpush1.msra.mxu0 0.0
    %1928 = vmatprep.subr.mxu0 0.0
    %1929 = vmatpush1.msra.mxu0 0.0
    %1930 = vmatprep.mubr.f32.mxu0 0.0
    %1931 = vmatmul.mubr.f32.gmra.mrb[0].mxu0 %v1864
    %v1932 = vpop.f32.mrb[0].mxu0
    %v1933 = vadd.f32 0.0, %v1932
    %v1934 = vpop.f32.mrb[0].mxu0
    %1935 = vdwg.mxu0
    %v1936 = vadd.f32 %v1856, %v1933
    %v1937 = vxor.u32 %v1936, 2147483648
    %v1938 = vmul.f32 %v1937, 1.442695
    %v1939 = vpow.pop %v1938
    %v1940 = vadd.f32 %v1939, 1.0
    %v1941 = vrcp.pop %v1940
    %v1942 = vmul.f32 1.0, %v1941
    %v1943 = vtanh.pop %v1936
    %v1944 = vmul.f32 %v1942, %v1653
    %1946 = vrot.lane.b32.xlu0 %v1943, 64
    %v1947 = vpop.permute.xlu0 %1946
    %v1949 = vmul.f32 %v1942, %v1947
    %1951 = vrot.lane.b32.xlu0 %v1949, 32
    %v1952 = vpop.permute.xlu0 %1951
    %v1954 = vadd.f32 %v1944, %v1952
    %v1955 = vtanh.pop %v1954
    %1957 = vrot.lane.b32.xlu0 %v1955, 64
    %v1958 = vpop.permute.xlu0 %1957
    %v1960 = vmul.f32 %v1942, %v1958
    %v1961 = vsel %vm1854, 1, 0
    %1962 = vset.pattern.permute.xlu0 0
    %1963 = vperm.xlu0 %1962, %v1961
    %v1964 = vpop.permute.xlu0 %1963
    %vm1965 = vcmp.eq.s32.totalorder %v1964, 1
    %v1966 = vsel %vm1965, %v1960, %v1652
    %v1967 = vsel %vm1965, %v1954, %v1653
    %v1968 = vsel %vm1965, %v1960, 0.0
    %v1969 = vld [vmem:[%s8] sm:$0xff]
    %v1970 = vld [vmem:[%s8 + $0x8] sm:$0xff]
    %v1971 = vld [vmem:[%s8 + $0x10] sm:$0xff]
    %v1972 = vld [vmem:[%s8 + $0x18] sm:$0xff]
    %v1973 = vld [vmem:[#allocation14] sm:$0xff]
    %v1974 = vld [vmem:[#allocation14 + $0x8] sm:$0xff]
    %v1975 = vld [vmem:[#allocation14 + $0x10] sm:$0xff]
    %v1976 = vld [vmem:[#allocation14 + $0x18] sm:$0xff]
    %1978 = vrot.lane.b32.xlu0 %v1845, 32
    %v1979 = vpop.permute.xlu0 %1978
    %v1980 = vsel %vm281, %v1979, 0
    %1982 = vmatprep.subr.mxu0 0.0
    %1983 = vmatpush1.msra.mxu0 %v1973
    %1984 = vmatprep.subr.mxu0 0.0
    %1985 = vmatpush1.msra.mxu0 %v1974
    %1986 = vmatprep.subr.mxu0 0.0
    %1987 = vmatpush1.msra.mxu0 %v1975
    %1988 = vmatprep.subr.mxu0 0.0
    %1989 = vmatpush1.msra.mxu0 %v1976
    %1990 = vmatprep.subr.mxu0 0.0
    %1991 = vmatpush1.msra.mxu0 0.0
    %1992 = vmatprep.subr.mxu0 0.0
    %1993 = vmatpush1.msra.mxu0 0.0
    %1994 = vmatprep.subr.mxu0 0.0
    %1995 = vmatpush1.msra.mxu0 0.0
    %1996 = vmatprep.subr.mxu0 0.0
    %1997 = vmatpush1.msra.mxu0 0.0
    %1998 = vmatprep.subr.mxu0 0.0
    %1999 = vmatpush1.msra.mxu0 0.0
    %2000 = vmatprep.subr.mxu0 0.0
    %2001 = vmatpush1.msra.mxu0 0.0
    %2002 = vmatprep.subr.mxu0 0.0
    %2003 = vmatpush1.msra.mxu0 0.0
    %2004 = vmatprep.subr.mxu0 0.0
    %2005 = vmatpush1.msra.mxu0 0.0
    %2006 = vmatprep.subr.mxu0 0.0
    %2007 = vmatpush1.msra.mxu0 0.0
    %2008 = vmatprep.subr.mxu0 0.0
    %2009 = vmatpush1.msra.mxu0 0.0
    %2010 = vmatprep.subr.mxu0 0.0
    %2011 = vmatpush1.msra.mxu0 0.0
    %2012 = vmatprep.subr.mxu0 0.0
    %2013 = vmatpush1.msra.mxu0 0.0
    %2014 = vmatprep.subr.mxu0 0.0
    %2015 = vmatpush1.msra.mxu0 0.0
    %2016 = vmatprep.subr.mxu0 0.0
    %2017 = vmatpush1.msra.mxu0 0.0
    %2018 = vmatprep.subr.mxu0 0.0
    %2019 = vmatpush1.msra.mxu0 0.0
    %2020 = vmatprep.subr.mxu0 0.0
    %2021 = vmatpush1.msra.mxu0 0.0
    %2022 = vmatprep.subr.mxu0 0.0
    %2023 = vmatpush1.msra.mxu0 0.0
    %2024 = vmatprep.subr.mxu0 0.0
    %2025 = vmatpush1.msra.mxu0 0.0
    %2026 = vmatprep.subr.mxu0 0.0
    %2027 = vmatpush1.msra.mxu0 0.0
    %2028 = vmatprep.subr.mxu0 0.0
    %2029 = vmatpush1.msra.mxu0 0.0
    %2030 = vmatprep.subr.mxu0 0.0
    %2031 = vmatpush1.msra.mxu0 0.0
    %2032 = vmatprep.subr.mxu0 0.0
    %2033 = vmatpush1.msra.mxu0 0.0
    %2034 = vmatprep.subr.mxu0 0.0
    %2035 = vmatpush1.msra.mxu0 0.0
    %2036 = vmatprep.subr.mxu0 0.0
    %2037 = vmatpush1.msra.mxu0 0.0
    %2038 = vmatprep.subr.mxu0 0.0
    %2039 = vmatpush1.msra.mxu0 0.0
    %2040 = vmatprep.subr.mxu0 0.0
    %2041 = vmatpush1.msra.mxu0 0.0
    %2042 = vmatprep.subr.mxu0 0.0
    %2043 = vmatpush1.msra.mxu0 0.0
    %2044 = vmatprep.subr.mxu0 0.0
    %2045 = vmatpush1.msra.mxu0 0.0
    %2046 = vmatprep.mubr.f32.mxu0 0.0
    %2047 = vmatmul.mubr.f32.gmra.mrb[0].mxu0 %v1980
    %v2048 = vpop.f32.mrb[0].mxu0
    %v2049 = vadd.f32 0.0, %v2048
    %v2050 = vpop.f32.mrb[0].mxu0
    %2051 = vdwg.mxu0
    %2053 = vrot.lane.b32.xlu0 %v1968, 32
    %v2054 = vpop.permute.xlu0 %2053
    %v2055 = vsel %vm281, %v2054, 0
    %2057 = vmatprep.subr.mxu0 0.0
    %2058 = vmatpush1.msra.mxu0 %v1969
    %2059 = vmatprep.subr.mxu0 0.0
    %2060 = vmatpush1.msra.mxu0 %v1970
    %2061 = vmatprep.subr.mxu0 0.0
    %2062 = vmatpush1.msra.mxu0 %v1971
    %2063 = vmatprep.subr.mxu0 0.0
    %2064 = vmatpush1.msra.mxu0 %v1972
    %2065 = vmatprep.subr.mxu0 0.0
    %2066 = vmatpush1.msra.mxu0 0.0
    %2067 = vmatprep.subr.mxu0 0.0
    %2068 = vmatpush1.msra.mxu0 0.0
    %2069 = vmatprep.subr.mxu0 0.0
    %2070 = vmatpush1.msra.mxu0 0.0
    %2071 = vmatprep.subr.mxu0 0.0
    %2072 = vmatpush1.msra.mxu0 0.0
    %2073 = vmatprep.subr.mxu0 0.0
    %2074 = vmatpush1.msra.mxu0 0.0
    %2075 = vmatprep.subr.mxu0 0.0
    %2076 = vmatpush1.msra.mxu0 0.0
    %2077 = vmatprep.subr.mxu0 0.0
    %2078 = vmatpush1.msra.mxu0 0.0
    %2079 = vmatprep.subr.mxu0 0.0
    %2080 = vmatpush1.msra.mxu0 0.0
    %2081 = vmatprep.subr.mxu0 0.0
    %2082 = vmatpush1.msra.mxu0 0.0
    %2083 = vmatprep.subr.mxu0 0.0
    %2084 = vmatpush1.msra.mxu0 0.0
    %2085 = vmatprep.subr.mxu0 0.0
    %2086 = vmatpush1.msra.mxu0 0.0
    %2087 = vmatprep.subr.mxu0 0.0
    %2088 = vmatpush1.msra.mxu0 0.0
    %2089 = vmatprep.subr.mxu0 0.0
    %2090 = vmatpush1.msra.mxu0 0.0
    %2091 = vmatprep.subr.mxu0 0.0
    %2092 = vmatpush1.msra.mxu0 0.0
    %2093 = vmatprep.subr.mxu0 0.0
    %2094 = vmatpush1.msra.mxu0 0.0
    %2095 = vmatprep.subr.mxu0 0.0
    %2096 = vmatpush1.msra.mxu0 0.0
    %2097 = vmatprep.subr.mxu0 0.0
    %2098 = vmatpush1.msra.mxu0 0.0
    %2099 = vmatprep.subr.mxu0 0.0
    %2100 = vmatpush1.msra.mxu0 0.0
    %2101 = vmatprep.subr.mxu0 0.0
    %2102 = vmatpush1.msra.mxu0 0.0
    %2103 = vmatprep.subr.mxu0 0.0
    %2104 = vmatpush1.msra.mxu0 0.0
    %2105 = vmatprep.subr.mxu0 0.0
    %2106 = vmatpush1.msra.mxu0 0.0
    %2107 = vmatprep.subr.mxu0 0.0
    %2108 = vmatpush1.msra.mxu0 0.0
    %2109 = vmatprep.subr.mxu0 0.0
    %2110 = vmatpush1.msra.mxu0 0.0
    %2111 = vmatprep.subr.mxu0 0.0
    %2112 = vmatpush1.msra.mxu0 0.0
    %2113 = vmatprep.subr.mxu0 0.0
    %2114 = vmatpush1.msra.mxu0 0.0
    %2115 = vmatprep.subr.mxu0 0.0
    %2116 = vmatpush1.msra.mxu0 0.0
    %2117 = vmatprep.subr.mxu0 0.0
    %2118 = vmatpush1.msra.mxu0 0.0
    %2119 = vmatprep.subr.mxu0 0.0
    %2120 = vmatpush1.msra.mxu0 0.0
    %2121 = vmatprep.mubr.f32.mxu0 0.0
    %2122 = vmatmul.mubr.f32.gmra.mrb[0].mxu0 %v2055
    %v2123 = vpop.f32.mrb[0].mxu0
    %v2124 = vadd.f32 %v2049, %v2123
    %v2125 = vpop.f32.mrb[0].mxu0
    %2126 = vdwg.mxu0
    %v2127 = vld [vmem:[%s10] sm:$0x1]
    %v2129 = vlaneseq
    %v2130 = vshrl.u32 %v2129, 7
    %v2131 = vsub.s32 0, %v2130
    %v2132 = vrot.slane %v2127, %v2131
    %v2134 = vadd.f32 %v2124, %v2132
    %v2135 = vxor.u32 %v2134, 2147483648
    %v2136 = vmul.f32 %v2135, 1.442695
    %v2137 = vpow.pop %v2136
    %v2138 = vadd.f32 %v2137, 1.0
    %v2139 = vrcp.pop %v2138
    %v2140 = vmul.f32 1.0, %v2139
    %v2141 = vtanh.pop %v2134
    %v2142 = vmul.f32 %v2140, %v1846
    %2144 = vrot.lane.b32.xlu0 %v2141, 64
    %v2145 = vpop.permute.xlu0 %2144
    %v2147 = vmul.f32 %v2140, %v2145
    %2149 = vrot.lane.b32.xlu0 %v2147, 32
    %v2150 = vpop.permute.xlu0 %2149
    %v2152 = vadd.f32 %v2142, %v2150
    %v2153 = vtanh.pop %v2152
    %2155 = vrot.lane.b32.xlu0 %v2153, 64
    %v2156 = vpop.permute.xlu0 %2155
    %v2158 = vmul.f32 %v2140, %v2156
    %v2159 = vsel %vm1965, %v2158, %v1845
    %v2160 = vsel %vm1965, %v2152, %v1846
    %v2161 = vsel %vm1965, %v2158, 0.0
    %2163 = vrot.lane.b32.xlu0 %v2161, 32
    %v2164 = vpop.permute.xlu0 %2163
    %s2166 = scalar_lea.vmem [#allocation3], 40
    %2167 = vst.msk [vmem:[%s2166] sm:$0xff] %vm281, %v2164
    %vm2168 = vcmp.gt.s32.totalorder %v113, 6
    %s2169 = scalar_lea.vmem [#allocation2], 48
    %v2170 = vld [vmem:[%s2169] sm:$0xff]
    %v2171 = vld [vmem:[%s6] sm:$0xff]
    %v2172 = vld [vmem:[%s6 + $0x8] sm:$0xff]
    %v2173 = vld [vmem:[%s6 + $0x10] sm:$0xff]
    %v2174 = vld [vmem:[%s6 + $0x18] sm:$0xff]
    %2176 = vrot.lane.b32.xlu0 %v1966, 32
    %v2177 = vpop.permute.xlu0 %2176
    %v2178 = vsel %vm281, %v2177, 0
    %2180 = vmatprep.subr.mxu0 0.0
    %2181 = vmatpush1.msra.mxu0 %v2171
    %2182 = vmatprep.subr.mxu0 0.0
    %2183 = vmatpush1.msra.mxu0 %v2172
    %2184 = vmatprep.subr.mxu0 0.0
    %2185 = vmatpush1.msra.mxu0 %v2173
    %2186 = vmatprep.subr.mxu0 0.0
    %2187 = vmatpush1.msra.mxu0 %v2174
    %2188 = vmatprep.subr.mxu0 0.0
    %2189 = vmatpush1.msra.mxu0 0.0
    %2190 = vmatprep.subr.mxu0 0.0
    %2191 = vmatpush1.msra.mxu0 0.0
    %2192 = vmatprep.subr.mxu0 0.0
    %2193 = vmatpush1.msra.mxu0 0.0
    %2194 = vmatprep.subr.mxu0 0.0
    %2195 = vmatpush1.msra.mxu0 0.0
    %2196 = vmatprep.subr.mxu0 0.0
    %2197 = vmatpush1.msra.mxu0 0.0
    %2198 = vmatprep.subr.mxu0 0.0
    %2199 = vmatpush1.msra.mxu0 0.0
    %2200 = vmatprep.subr.mxu0 0.0
    %2201 = vmatpush1.msra.mxu0 0.0
    %2202 = vmatprep.subr.mxu0 0.0
    %2203 = vmatpush1.msra.mxu0 0.0
    %2204 = vmatprep.subr.mxu0 0.0
    %2205 = vmatpush1.msra.mxu0 0.0
    %2206 = vmatprep.subr.mxu0 0.0
    %2207 = vmatpush1.msra.mxu0 0.0
    %2208 = vmatprep.subr.mxu0 0.0
    %2209 = vmatpush1.msra.mxu0 0.0
    %2210 = vmatprep.subr.mxu0 0.0
    %2211 = vmatpush1.msra.mxu0 0.0
    %2212 = vmatprep.subr.mxu0 0.0
    %2213 = vmatpush1.msra.mxu0 0.0
    %2214 = vmatprep.subr.mxu0 0.0
    %2215 = vmatpush1.msra.mxu0 0.0
    %2216 = vmatprep.subr.mxu0 0.0
    %2217 = vmatpush1.msra.mxu0 0.0
    %2218 = vmatprep.subr.mxu0 0.0
    %2219 = vmatpush1.msra.mxu0 0.0
    %2220 = vmatprep.subr.mxu0 0.0
    %2221 = vmatpush1.msra.mxu0 0.0
    %2222 = vmatprep.subr.mxu0 0.0
    %2223 = vmatpush1.msra.mxu0 0.0
    %2224 = vmatprep.subr.mxu0 0.0
    %2225 = vmatpush1.msra.mxu0 0.0
    %2226 = vmatprep.subr.mxu0 0.0
    %2227 = vmatpush1.msra.mxu0 0.0
    %2228 = vmatprep.subr.mxu0 0.0
    %2229 = vmatpush1.msra.mxu0 0.0
    %2230 = vmatprep.subr.mxu0 0.0
    %2231 = vmatpush1.msra.mxu0 0.0
    %2232 = vmatprep.subr.mxu0 0.0
    %2233 = vmatpush1.msra.mxu0 0.0
    %2234 = vmatprep.subr.mxu0 0.0
    %2235 = vmatpush1.msra.mxu0 0.0
    %2236 = vmatprep.subr.mxu0 0.0
    %2237 = vmatpush1.msra.mxu0 0.0
    %2238 = vmatprep.subr.mxu0 0.0
    %2239 = vmatpush1.msra.mxu0 0.0
    %2240 = vmatprep.subr.mxu0 0.0
    %2241 = vmatpush1.msra.mxu0 0.0
    %2242 = vmatprep.subr.mxu0 0.0
    %2243 = vmatpush1.msra.mxu0 0.0
    %2244 = vmatprep.mubr.f32.mxu0 0.0
    %2245 = vmatmul.mubr.f32.gmra.mrb[0].mxu0 %v2178
    %v2246 = vpop.f32.mrb[0].mxu0
    %v2247 = vadd.f32 0.0, %v2246
    %v2248 = vpop.f32.mrb[0].mxu0
    %2249 = vdwg.mxu0
    %v2250 = vadd.f32 %v2170, %v2247
    %v2251 = vxor.u32 %v2250, 2147483648
    %v2252 = vmul.f32 %v2251, 1.442695
    %v2253 = vpow.pop %v2252
    %v2254 = vadd.f32 %v2253, 1.0
    %v2255 = vrcp.pop %v2254
    %v2256 = vmul.f32 1.0, %v2255
    %v2257 = vtanh.pop %v2250
    %v2258 = vmul.f32 %v2256, %v1967
    %2260 = vrot.lane.b32.xlu0 %v2257, 64
    %v2261 = vpop.permute.xlu0 %2260
    %v2263 = vmul.f32 %v2256, %v2261
    %2265 = vrot.lane.b32.xlu0 %v2263, 32
    %v2266 = vpop.permute.xlu0 %2265
    %v2268 = vadd.f32 %v2258, %v2266
    %v2269 = vtanh.pop %v2268
    %2271 = vrot.lane.b32.xlu0 %v2269, 64
    %v2272 = vpop.permute.xlu0 %2271
    %v2274 = vmul.f32 %v2256, %v2272
    %v2275 = vsel %vm2168, 1, 0
    %2276 = vset.pattern.permute.xlu0 0
    %2277 = vperm.xlu0 %2276, %v2275
    %v2278 = vpop.permute.xlu0 %2277
    %vm2279 = vcmp.eq.s32.totalorder %v2278, 1
    %v2280 = vsel %vm2279, %v2274, %v1966
    %v2281 = vsel %vm2279, %v2268, %v1967
    %v2282 = vsel %vm2279, %v2274, 0.0
    %v2283 = vld [vmem:[%s8] sm:$0xff]
    %v2284 = vld [vmem:[%s8 + $0x8] sm:$0xff]
    %v2285 = vld [vmem:[%s8 + $0x10] sm:$0xff]
    %v2286 = vld [vmem:[%s8 + $0x18] sm:$0xff]
    %v2287 = vld [vmem:[#allocation14] sm:$0xff]
    %v2288 = vld [vmem:[#allocation14 + $0x8] sm:$0xff]
    %v2289 = vld [vmem:[#allocation14 + $0x10] sm:$0xff]
    %v2290 = vld [vmem:[#allocation14 + $0x18] sm:$0xff]
    %2292 = vrot.lane.b32.xlu0 %v2159, 32
    %v2293 = vpop.permute.xlu0 %2292
    %v2294 = vsel %vm281, %v2293, 0
    %2296 = vmatprep.subr.mxu0 0.0
    %2297 = vmatpush1.msra.mxu0 %v2287
    %2298 = vmatprep.subr.mxu0 0.0
    %2299 = vmatpush1.msra.mxu0 %v2288
    %2300 = vmatprep.subr.mxu0 0.0
    %2301 = vmatpush1.msra.mxu0 %v2289
    %2302 = vmatprep.subr.mxu0 0.0
    %2303 = vmatpush1.msra.mxu0 %v2290
    %2304 = vmatprep.subr.mxu0 0.0
    %2305 = vmatpush1.msra.mxu0 0.0
    %2306 = vmatprep.subr.mxu0 0.0
    %2307 = vmatpush1.msra.mxu0 0.0
    %2308 = vmatprep.subr.mxu0 0.0
    %2309 = vmatpush1.msra.mxu0 0.0
    %2310 = vmatprep.subr.mxu0 0.0
    %2311 = vmatpush1.msra.mxu0 0.0
    %2312 = vmatprep.subr.mxu0 0.0
    %2313 = vmatpush1.msra.mxu0 0.0
    %2314 = vmatprep.subr.mxu0 0.0
    %2315 = vmatpush1.msra.mxu0 0.0
    %2316 = vmatprep.subr.mxu0 0.0
    %2317 = vmatpush1.msra.mxu0 0.0
    %2318 = vmatprep.subr.mxu0 0.0
    %2319 = vmatpush1.msra.mxu0 0.0
    %2320 = vmatprep.subr.mxu0 0.0
    %2321 = vmatpush1.msra.mxu0 0.0
    %2322 = vmatprep.subr.mxu0 0.0
    %2323 = vmatpush1.msra.mxu0 0.0
    %2324 = vmatprep.subr.mxu0 0.0
    %2325 = vmatpush1.msra.mxu0 0.0
    %2326 = vmatprep.subr.mxu0 0.0
    %2327 = vmatpush1.msra.mxu0 0.0
    %2328 = vmatprep.subr.mxu0 0.0
    %2329 = vmatpush1.msra.mxu0 0.0
    %2330 = vmatprep.subr.mxu0 0.0
    %2331 = vmatpush1.msra.mxu0 0.0
    %2332 = vmatprep.subr.mxu0 0.0
    %2333 = vmatpush1.msra.mxu0 0.0
    %2334 = vmatprep.subr.mxu0 0.0
    %2335 = vmatpush1.msra.mxu0 0.0
    %2336 = vmatprep.subr.mxu0 0.0
    %2337 = vmatpush1.msra.mxu0 0.0
    %2338 = vmatprep.subr.mxu0 0.0
    %2339 = vmatpush1.msra.mxu0 0.0
    %2340 = vmatprep.subr.mxu0 0.0
    %2341 = vmatpush1.msra.mxu0 0.0
    %2342 = vmatprep.subr.mxu0 0.0
    %2343 = vmatpush1.msra.mxu0 0.0
    %2344 = vmatprep.subr.mxu0 0.0
    %2345 = vmatpush1.msra.mxu0 0.0
    %2346 = vmatprep.subr.mxu0 0.0
    %2347 = vmatpush1.msra.mxu0 0.0
    %2348 = vmatprep.subr.mxu0 0.0
    %2349 = vmatpush1.msra.mxu0 0.0
    %2350 = vmatprep.subr.mxu0 0.0
    %2351 = vmatpush1.msra.mxu0 0.0
    %2352 = vmatprep.subr.mxu0 0.0
    %2353 = vmatpush1.msra.mxu0 0.0
    %2354 = vmatprep.subr.mxu0 0.0
    %2355 = vmatpush1.msra.mxu0 0.0
    %2356 = vmatprep.subr.mxu0 0.0
    %2357 = vmatpush1.msra.mxu0 0.0
    %2358 = vmatprep.subr.mxu0 0.0
    %2359 = vmatpush1.msra.mxu0 0.0
    %2360 = vmatprep.mubr.f32.mxu0 0.0
    %2361 = vmatmul.mubr.f32.gmra.mrb[0].mxu0 %v2294
    %v2362 = vpop.f32.mrb[0].mxu0
    %v2363 = vadd.f32 0.0, %v2362
    %v2364 = vpop.f32.mrb[0].mxu0
    %2365 = vdwg.mxu0
    %2367 = vrot.lane.b32.xlu0 %v2282, 32
    %v2368 = vpop.permute.xlu0 %2367
    %v2369 = vsel %vm281, %v2368, 0
    %2371 = vmatprep.subr.mxu0 0.0
    %2372 = vmatpush1.msra.mxu0 %v2283
    %2373 = vmatprep.subr.mxu0 0.0
    %2374 = vmatpush1.msra.mxu0 %v2284
    %2375 = vmatprep.subr.mxu0 0.0
    %2376 = vmatpush1.msra.mxu0 %v2285
    %2377 = vmatprep.subr.mxu0 0.0
    %2378 = vmatpush1.msra.mxu0 %v2286
    %2379 = vmatprep.subr.mxu0 0.0
    %2380 = vmatpush1.msra.mxu0 0.0
    %2381 = vmatprep.subr.mxu0 0.0
    %2382 = vmatpush1.msra.mxu0 0.0
    %2383 = vmatprep.subr.mxu0 0.0
    %2384 = vmatpush1.msra.mxu0 0.0
    %2385 = vmatprep.subr.mxu0 0.0
    %2386 = vmatpush1.msra.mxu0 0.0
    %2387 = vmatprep.subr.mxu0 0.0
    %2388 = vmatpush1.msra.mxu0 0.0
    %2389 = vmatprep.subr.mxu0 0.0
    %2390 = vmatpush1.msra.mxu0 0.0
    %2391 = vmatprep.subr.mxu0 0.0
    %2392 = vmatpush1.msra.mxu0 0.0
    %2393 = vmatprep.subr.mxu0 0.0
    %2394 = vmatpush1.msra.mxu0 0.0
    %2395 = vmatprep.subr.mxu0 0.0
    %2396 = vmatpush1.msra.mxu0 0.0
    %2397 = vmatprep.subr.mxu0 0.0
    %2398 = vmatpush1.msra.mxu0 0.0
    %2399 = vmatprep.subr.mxu0 0.0
    %2400 = vmatpush1.msra.mxu0 0.0
    %2401 = vmatprep.subr.mxu0 0.0
    %2402 = vmatpush1.msra.mxu0 0.0
    %2403 = vmatprep.subr.mxu0 0.0
    %2404 = vmatpush1.msra.mxu0 0.0
    %2405 = vmatprep.subr.mxu0 0.0
    %2406 = vmatpush1.msra.mxu0 0.0
    %2407 = vmatprep.subr.mxu0 0.0
    %2408 = vmatpush1.msra.mxu0 0.0
    %2409 = vmatprep.subr.mxu0 0.0
    %2410 = vmatpush1.msra.mxu0 0.0
    %2411 = vmatprep.subr.mxu0 0.0
    %2412 = vmatpush1.msra.mxu0 0.0
    %2413 = vmatprep.subr.mxu0 0.0
    %2414 = vmatpush1.msra.mxu0 0.0
    %2415 = vmatprep.subr.mxu0 0.0
    %2416 = vmatpush1.msra.mxu0 0.0
    %2417 = vmatprep.subr.mxu0 0.0
    %2418 = vmatpush1.msra.mxu0 0.0
    %2419 = vmatprep.subr.mxu0 0.0
    %2420 = vmatpush1.msra.mxu0 0.0
    %2421 = vmatprep.subr.mxu0 0.0
    %2422 = vmatpush1.msra.mxu0 0.0
    %2423 = vmatprep.subr.mxu0 0.0
    %2424 = vmatpush1.msra.mxu0 0.0
    %2425 = vmatprep.subr.mxu0 0.0
    %2426 = vmatpush1.msra.mxu0 0.0
    %2427 = vmatprep.subr.mxu0 0.0
    %2428 = vmatpush1.msra.mxu0 0.0
    %2429 = vmatprep.subr.mxu0 0.0
    %2430 = vmatpush1.msra.mxu0 0.0
    %2431 = vmatprep.subr.mxu0 0.0
    %2432 = vmatpush1.msra.mxu0 0.0
    %2433 = vmatprep.subr.mxu0 0.0
    %2434 = vmatpush1.msra.mxu0 0.0
    %2435 = vmatprep.mubr.f32.mxu0 0.0
    %2436 = vmatmul.mubr.f32.gmra.mrb[0].mxu0 %v2369
    %v2437 = vpop.f32.mrb[0].mxu0
    %v2438 = vadd.f32 %v2363, %v2437
    %v2439 = vpop.f32.mrb[0].mxu0
    %2440 = vdwg.mxu0
    %v2441 = vld [vmem:[%s10] sm:$0x1]
    %v2443 = vlaneseq
    %v2444 = vshrl.u32 %v2443, 7
    %v2445 = vsub.s32 0, %v2444
    %v2446 = vrot.slane %v2441, %v2445
    %v2448 = vadd.f32 %v2438, %v2446
    %v2449 = vxor.u32 %v2448, 2147483648
    %v2450 = vmul.f32 %v2449, 1.442695
    %v2451 = vpow.pop %v2450
    %v2452 = vadd.f32 %v2451, 1.0
    %v2453 = vrcp.pop %v2452
    %v2454 = vmul.f32 1.0, %v2453
    %v2455 = vtanh.pop %v2448
    %v2456 = vmul.f32 %v2454, %v2160
    %2458 = vrot.lane.b32.xlu0 %v2455, 64
    %v2459 = vpop.permute.xlu0 %2458
    %v2461 = vmul.f32 %v2454, %v2459
    %2463 = vrot.lane.b32.xlu0 %v2461, 32
    %v2464 = vpop.permute.xlu0 %2463
    %v2466 = vadd.f32 %v2456, %v2464
    %v2467 = vtanh.pop %v2466
    %2469 = vrot.lane.b32.xlu0 %v2467, 64
    %v2470 = vpop.permute.xlu0 %2469
    %v2472 = vmul.f32 %v2454, %v2470
    %v2473 = vsel %vm2279, %v2472, %v2159
    %v2474 = vsel %vm2279, %v2466, %v2160
    %v2475 = vsel %vm2279, %v2472, 0.0
    %2477 = vrot.lane.b32.xlu0 %v2475, 32
    %v2478 = vpop.permute.xlu0 %2477
    %s2480 = scalar_lea.vmem [#allocation3], 48
    %2481 = vst.msk [vmem:[%s2480] sm:$0xff] %vm281, %v2478
    %vm2482 = vcmp.gt.s32.totalorder %v113, 7
    %s2483 = scalar_lea.vmem [#allocation2], 56
    %v2484 = vld [vmem:[%s2483] sm:$0xff]
    %v2485 = vld [vmem:[%s6] sm:$0xff]
    %v2486 = vld [vmem:[%s6 + $0x8] sm:$0xff]
    %v2487 = vld [vmem:[%s6 + $0x10] sm:$0xff]
    %v2488 = vld [vmem:[%s6 + $0x18] sm:$0xff]
    %2490 = vrot.lane.b32.xlu0 %v2280, 32
    %v2491 = vpop.permute.xlu0 %2490
    %v2492 = vsel %vm281, %v2491, 0
    %2494 = vmatprep.subr.mxu0 0.0
    %2495 = vmatpush1.msra.mxu0 %v2485
    %2496 = vmatprep.subr.mxu0 0.0
    %2497 = vmatpush1.msra.mxu0 %v2486
    %2498 = vmatprep.subr.mxu0 0.0
    %2499 = vmatpush1.msra.mxu0 %v2487
    %2500 = vmatprep.subr.mxu0 0.0
    %2501 = vmatpush1.msra.mxu0 %v2488
    %2502 = vmatprep.subr.mxu0 0.0
    %2503 = vmatpush1.msra.mxu0 0.0
    %2504 = vmatprep.subr.mxu0 0.0
    %2505 = vmatpush1.msra.mxu0 0.0
    %2506 = vmatprep.subr.mxu0 0.0
    %2507 = vmatpush1.msra.mxu0 0.0
    %2508 = vmatprep.subr.mxu0 0.0
    %2509 = vmatpush1.msra.mxu0 0.0
    %2510 = vmatprep.subr.mxu0 0.0
    %2511 = vmatpush1.msra.mxu0 0.0
    %2512 = vmatprep.subr.mxu0 0.0
    %2513 = vmatpush1.msra.mxu0 0.0
    %2514 = vmatprep.subr.mxu0 0.0
    %2515 = vmatpush1.msra.mxu0 0.0
    %2516 = vmatprep.subr.mxu0 0.0
    %2517 = vmatpush1.msra.mxu0 0.0
    %2518 = vmatprep.subr.mxu0 0.0
    %2519 = vmatpush1.msra.mxu0 0.0
    %2520 = vmatprep.subr.mxu0 0.0
    %2521 = vmatpush1.msra.mxu0 0.0
    %2522 = vmatprep.subr.mxu0 0.0
    %2523 = vmatpush1.msra.mxu0 0.0
    %2524 = vmatprep.subr.mxu0 0.0
    %2525 = vmatpush1.msra.mxu0 0.0
    %2526 = vmatprep.subr.mxu0 0.0
    %2527 = vmatpush1.msra.mxu0 0.0
    %2528 = vmatprep.subr.mxu0 0.0
    %2529 = vmatpush1.msra.mxu0 0.0
    %2530 = vmatprep.subr.mxu0 0.0
    %2531 = vmatpush1.msra.mxu0 0.0
    %2532 = vmatprep.subr.mxu0 0.0
    %2533 = vmatpush1.msra.mxu0 0.0
    %2534 = vmatprep.subr.mxu0 0.0
    %2535 = vmatpush1.msra.mxu0 0.0
    %2536 = vmatprep.subr.mxu0 0.0
    %2537 = vmatpush1.msra.mxu0 0.0
    %2538 = vmatprep.subr.mxu0 0.0
    %2539 = vmatpush1.msra.mxu0 0.0
    %2540 = vmatprep.subr.mxu0 0.0
    %2541 = vmatpush1.msra.mxu0 0.0
    %2542 = vmatprep.subr.mxu0 0.0
    %2543 = vmatpush1.msra.mxu0 0.0
    %2544 = vmatprep.subr.mxu0 0.0
    %2545 = vmatpush1.msra.mxu0 0.0
    %2546 = vmatprep.subr.mxu0 0.0
    %2547 = vmatpush1.msra.mxu0 0.0
    %2548 = vmatprep.subr.mxu0 0.0
    %2549 = vmatpush1.msra.mxu0 0.0
    %2550 = vmatprep.subr.mxu0 0.0
    %2551 = vmatpush1.msra.mxu0 0.0
    %2552 = vmatprep.subr.mxu0 0.0
    %2553 = vmatpush1.msra.mxu0 0.0
    %2554 = vmatprep.subr.mxu0 0.0
    %2555 = vmatpush1.msra.mxu0 0.0
    %2556 = vmatprep.subr.mxu0 0.0
    %2557 = vmatpush1.msra.mxu0 0.0
    %2558 = vmatprep.mubr.f32.mxu0 0.0
    %2559 = vmatmul.mubr.f32.gmra.mrb[0].mxu0 %v2492
    %v2560 = vpop.f32.mrb[0].mxu0
    %v2561 = vadd.f32 0.0, %v2560
    %v2562 = vpop.f32.mrb[0].mxu0
    %2563 = vdwg.mxu0
    %v2564 = vadd.f32 %v2484, %v2561
    %v2565 = vxor.u32 %v2564, 2147483648
    %v2566 = vmul.f32 %v2565, 1.442695
    %v2567 = vpow.pop %v2566
    %v2568 = vadd.f32 %v2567, 1.0
    %v2569 = vrcp.pop %v2568
    %v2570 = vmul.f32 1.0, %v2569
    %v2571 = vtanh.pop %v2564
    %v2572 = vmul.f32 %v2570, %v2281
    %2574 = vrot.lane.b32.xlu0 %v2571, 64
    %v2575 = vpop.permute.xlu0 %2574
    %v2577 = vmul.f32 %v2570, %v2575
    %2579 = vrot.lane.b32.xlu0 %v2577, 32
    %v2580 = vpop.permute.xlu0 %2579
    %v2582 = vadd.f32 %v2572, %v2580
    %v2583 = vtanh.pop %v2582
    %2585 = vrot.lane.b32.xlu0 %v2583, 64
    %v2586 = vpop.permute.xlu0 %2585
    %v2588 = vmul.f32 %v2570, %v2586
    %v2589 = vsel %vm2482, 1, 0
    %2590 = vset.pattern.permute.xlu0 0
    %2591 = vperm.xlu0 %2590, %v2589
    %v2592 = vpop.permute.xlu0 %2591
    %vm2593 = vcmp.eq.s32.totalorder %v2592, 1
    %v2594 = vsel %vm2593, %v2588, 0.0
    %v2595 = vld [vmem:[%s8] sm:$0xff]
    %v2596 = vld [vmem:[%s8 + $0x8] sm:$0xff]
    %v2597 = vld [vmem:[%s8 + $0x10] sm:$0xff]
    %v2598 = vld [vmem:[%s8 + $0x18] sm:$0xff]
    %v2599 = vld [vmem:[#allocation14] sm:$0xff]
    %v2600 = vld [vmem:[#allocation14 + $0x8] sm:$0xff]
    %v2601 = vld [vmem:[#allocation14 + $0x10] sm:$0xff]
    %v2602 = vld [vmem:[#allocation14 + $0x18] sm:$0xff]
    %2604 = vrot.lane.b32.xlu0 %v2473, 32
    %v2605 = vpop.permute.xlu0 %2604
    %v2606 = vsel %vm281, %v2605, 0
    %2608 = vmatprep.subr.mxu0 0.0
    %2609 = vmatpush1.msra.mxu0 %v2599
    %2610 = vmatprep.subr.mxu0 0.0
    %2611 = vmatpush1.msra.mxu0 %v2600
    %2612 = vmatprep.subr.mxu0 0.0
    %2613 = vmatpush1.msra.mxu0 %v2601
    %2614 = vmatprep.subr.mxu0 0.0
    %2615 = vmatpush1.msra.mxu0 %v2602
    %2616 = vmatprep.subr.mxu0 0.0
    %2617 = vmatpush1.msra.mxu0 0.0
    %2618 = vmatprep.subr.mxu0 0.0
    %2619 = vmatpush1.msra.mxu0 0.0
    %2620 = vmatprep.subr.mxu0 0.0
    %2621 = vmatpush1.msra.mxu0 0.0
    %2622 = vmatprep.subr.mxu0 0.0
    %2623 = vmatpush1.msra.mxu0 0.0
    %2624 = vmatprep.subr.mxu0 0.0
    %2625 = vmatpush1.msra.mxu0 0.0
    %2626 = vmatprep.subr.mxu0 0.0
    %2627 = vmatpush1.msra.mxu0 0.0
    %2628 = vmatprep.subr.mxu0 0.0
    %2629 = vmatpush1.msra.mxu0 0.0
    %2630 = vmatprep.subr.mxu0 0.0
    %2631 = vmatpush1.msra.mxu0 0.0
    %2632 = vmatprep.subr.mxu0 0.0
    %2633 = vmatpush1.msra.mxu0 0.0
    %2634 = vmatprep.subr.mxu0 0.0
    %2635 = vmatpush1.msra.mxu0 0.0
    %2636 = vmatprep.subr.mxu0 0.0
    %2637 = vmatpush1.msra.mxu0 0.0
    %2638 = vmatprep.subr.mxu0 0.0
    %2639 = vmatpush1.msra.mxu0 0.0
    %2640 = vmatprep.subr.mxu0 0.0
    %2641 = vmatpush1.msra.mxu0 0.0
    %2642 = vmatprep.subr.mxu0 0.0
    %2643 = vmatpush1.msra.mxu0 0.0
    %2644 = vmatprep.subr.mxu0 0.0
    %2645 = vmatpush1.msra.mxu0 0.0
    %2646 = vmatprep.subr.mxu0 0.0
    %2647 = vmatpush1.msra.mxu0 0.0
    %2648 = vmatprep.subr.mxu0 0.0
    %2649 = vmatpush1.msra.mxu0 0.0
    %2650 = vmatprep.subr.mxu0 0.0
    %2651 = vmatpush1.msra.mxu0 0.0
    %2652 = vmatprep.subr.mxu0 0.0
    %2653 = vmatpush1.msra.mxu0 0.0
    %2654 = vmatprep.subr.mxu0 0.0
    %2655 = vmatpush1.msra.mxu0 0.0
    %2656 = vmatprep.subr.mxu0 0.0
    %2657 = vmatpush1.msra.mxu0 0.0
    %2658 = vmatprep.subr.mxu0 0.0
    %2659 = vmatpush1.msra.mxu0 0.0
    %2660 = vmatprep.subr.mxu0 0.0
    %2661 = vmatpush1.msra.mxu0 0.0
    %2662 = vmatprep.subr.mxu0 0.0
    %2663 = vmatpush1.msra.mxu0 0.0
    %2664 = vmatprep.subr.mxu0 0.0
    %2665 = vmatpush1.msra.mxu0 0.0
    %2666 = vmatprep.subr.mxu0 0.0
    %2667 = vmatpush1.msra.mxu0 0.0
    %2668 = vmatprep.subr.mxu0 0.0
    %2669 = vmatpush1.msra.mxu0 0.0
    %2670 = vmatprep.subr.mxu0 0.0
    %2671 = vmatpush1.msra.mxu0 0.0
    %2672 = vmatprep.mubr.f32.mxu0 0.0
    %2673 = vmatmul.mubr.f32.gmra.mrb[0].mxu0 %v2606
    %v2674 = vpop.f32.mrb[0].mxu0
    %v2675 = vadd.f32 0.0, %v2674
    %v2676 = vpop.f32.mrb[0].mxu0
    %2677 = vdwg.mxu0
    %2679 = vrot.lane.b32.xlu0 %v2594, 32
    %v2680 = vpop.permute.xlu0 %2679
    %v2681 = vsel %vm281, %v2680, 0
    %2683 = vmatprep.subr.mxu0 0.0
    %2684 = vmatpush1.msra.mxu0 %v2595
    %2685 = vmatprep.subr.mxu0 0.0
    %2686 = vmatpush1.msra.mxu0 %v2596
    %2687 = vmatprep.subr.mxu0 0.0
    %2688 = vmatpush1.msra.mxu0 %v2597
    %2689 = vmatprep.subr.mxu0 0.0
    %2690 = vmatpush1.msra.mxu0 %v2598
    %2691 = vmatprep.subr.mxu0 0.0
    %2692 = vmatpush1.msra.mxu0 0.0
    %2693 = vmatprep.subr.mxu0 0.0
    %2694 = vmatpush1.msra.mxu0 0.0
    %2695 = vmatprep.subr.mxu0 0.0
    %2696 = vmatpush1.msra.mxu0 0.0
    %2697 = vmatprep.subr.mxu0 0.0
    %2698 = vmatpush1.msra.mxu0 0.0
    %2699 = vmatprep.subr.mxu0 0.0
    %2700 = vmatpush1.msra.mxu0 0.0
    %2701 = vmatprep.subr.mxu0 0.0
    %2702 = vmatpush1.msra.mxu0 0.0
    %2703 = vmatprep.subr.mxu0 0.0
    %2704 = vmatpush1.msra.mxu0 0.0
    %2705 = vmatprep.subr.mxu0 0.0
    %2706 = vmatpush1.msra.mxu0 0.0
    %2707 = vmatprep.subr.mxu0 0.0
    %2708 = vmatpush1.msra.mxu0 0.0
    %2709 = vmatprep.subr.mxu0 0.0
    %2710 = vmatpush1.msra.mxu0 0.0
    %2711 = vmatprep.subr.mxu0 0.0
    %2712 = vmatpush1.msra.mxu0 0.0
    %2713 = vmatprep.subr.mxu0 0.0
    %2714 = vmatpush1.msra.mxu0 0.0
    %2715 = vmatprep.subr.mxu0 0.0
    %2716 = vmatpush1.msra.mxu0 0.0
    %2717 = vmatprep.subr.mxu0 0.0
    %2718 = vmatpush1.msra.mxu0 0.0
    %2719 = vmatprep.subr.mxu0 0.0
    %2720 = vmatpush1.msra.mxu0 0.0
    %2721 = vmatprep.subr.mxu0 0.0
    %2722 = vmatpush1.msra.mxu0 0.0
    %2723 = vmatprep.subr.mxu0 0.0
    %2724 = vmatpush1.msra.mxu0 0.0
    %2725 = vmatprep.subr.mxu0 0.0
    %2726 = vmatpush1.msra.mxu0 0.0
    %2727 = vmatprep.subr.mxu0 0.0
    %2728 = vmatpush1.msra.mxu0 0.0
    %2729 = vmatprep.subr.mxu0 0.0
    %2730 = vmatpush1.msra.mxu0 0.0
    %2731 = vmatprep.subr.mxu0 0.0
    %2732 = vmatpush1.msra.mxu0 0.0
    %2733 = vmatprep.subr.mxu0 0.0
    %2734 = vmatpush1.msra.mxu0 0.0
    %2735 = vmatprep.subr.mxu0 0.0
    %2736 = vmatpush1.msra.mxu0 0.0
    %2737 = vmatprep.subr.mxu0 0.0
    %2738 = vmatpush1.msra.mxu0 0.0
    %2739 = vmatprep.subr.mxu0 0.0
    %2740 = vmatpush1.msra.mxu0 0.0
    %2741 = vmatprep.subr.mxu0 0.0
    %2742 = vmatpush1.msra.mxu0 0.0
    %2743 = vmatprep.subr.mxu0 0.0
    %2744 = vmatpush1.msra.mxu0 0.0
    %2745 = vmatprep.subr.mxu0 0.0
    %2746 = vmatpush1.msra.mxu0 0.0
    %2747 = vmatprep.mubr.f32.mxu0 0.0
    %2748 = vmatmul.mubr.f32.gmra.mrb[0].mxu0 %v2681
    %v2749 = vpop.f32.mrb[0].mxu0
    %v2750 = vadd.f32 %v2675, %v2749
    %v2751 = vpop.f32.mrb[0].mxu0
    %2752 = vdwg.mxu0
    %v2753 = vld [vmem:[%s10] sm:$0x1]
    %v2755 = vlaneseq
    %v2756 = vshrl.u32 %v2755, 7
    %v2757 = vsub.s32 0, %v2756
    %v2758 = vrot.slane %v2753, %v2757
    %v2760 = vadd.f32 %v2750, %v2758
    %v2761 = vxor.u32 %v2760, 2147483648
    %v2762 = vmul.f32 %v2761, 1.442695
    %v2763 = vpow.pop %v2762
    %v2764 = vadd.f32 %v2763, 1.0
    %v2765 = vrcp.pop %v2764
    %v2766 = vmul.f32 1.0, %v2765
    %v2767 = vtanh.pop %v2760
    %v2768 = vmul.f32 %v2766, %v2474
    %2770 = vrot.lane.b32.xlu0 %v2767, 64
    %v2771 = vpop.permute.xlu0 %2770
    %v2773 = vmul.f32 %v2766, %v2771
    %2775 = vrot.lane.b32.xlu0 %v2773, 32
    %v2776 = vpop.permute.xlu0 %2775
    %v2778 = vadd.f32 %v2768, %v2776
    %v2779 = vtanh.pop %v2778
    %2781 = vrot.lane.b32.xlu0 %v2779, 64
    %v2782 = vpop.permute.xlu0 %2781
    %v2784 = vmul.f32 %v2766, %v2782
    %v2785 = vsel %vm2593, %v2784, 0.0
    %2787 = vrot.lane.b32.xlu0 %v2785, 32
    %v2788 = vpop.permute.xlu0 %2787
    %s2790 = scalar_lea.vmem [#allocation3], 56
    %2791 = vst.msk [vmem:[%s2790] sm:$0xff] %vm281, %v2788
    %v2792 = vld [vmem:[#allocation3] sm:$0xff]
    %v2793 = vld [vmem:[#allocation3 + $0x8] sm:$0xff]
    %v2794 = vld [vmem:[#allocation3 + $0x10] sm:$0xff]
    %v2795 = vld [vmem:[#allocation3 + $0x18] sm:$0xff]
    %v2796 = vld [vmem:[#allocation3 + $0x20] sm:$0xff]
    %v2797 = vld [vmem:[#allocation3 + $0x28] sm:$0xff]
    %v2798 = vld [vmem:[#allocation3 + $0x30] sm:$0xff]
    %v2799 = vld [vmem:[#allocation3 + $0x38] sm:$0xff]
    %v2800 = vld [vmem:[%s11] sm:$0xff]
    %v2801 = vld [vmem:[%s11 + $0x8] sm:$0xff]
    %v2802 = vld [vmem:[%s11 + $0x10] sm:$0xff]
    %v2803 = vld [vmem:[%s11 + $0x18] sm:$0xff]
    %v2804 = vld [vmem:[%s12] sm:$0x1]
    %v2806 = vlaneseq
    %v2807 = vshrl.u32 %v2806, 7
    %v2808 = vsub.s32 0, %v2807
    %v2809 = vrot.slane %v2804, %v2808
    %v2812 = vsel %vm281, %v2792, 0
    %v2815 = vsel %vm281, %v2793, 0
    %v2818 = vsel %vm281, %v2794, 0
    %v2821 = vsel %vm281, %v2795, 0
    %v2824 = vsel %vm281, %v2796, 0
    %v2827 = vsel %vm281, %v2797, 0
    %v2830 = vsel %vm281, %v2798, 0
    %v2833 = vsel %vm281, %v2799, 0
    %2835 = vmatprep.subr.mxu0 0.0
    %2836 = vmatpush1.msra.mxu0 %v2800
    %2837 = vmatprep.subr.mxu0 0.0
    %2838 = vmatpush1.msra.mxu0 %v2801
    %2839 = vmatprep.subr.mxu0 0.0
    %2840 = vmatpush1.msra.mxu0 %v2802
    %2841 = vmatprep.subr.mxu0 0.0
    %2842 = vmatpush1.msra.mxu0 %v2803
    %2843 = vmatprep.subr.mxu0 0.0
    %2844 = vmatpush1.msra.mxu0 0.0
    %2845 = vmatprep.subr.mxu0 0.0
    %2846 = vmatpush1.msra.mxu0 0.0
    %2847 = vmatprep.subr.mxu0 0.0
    %2848 = vmatpush1.msra.mxu0 0.0
    %2849 = vmatprep.subr.mxu0 0.0
    %2850 = vmatpush1.msra.mxu0 0.0
    %2851 = vmatprep.subr.mxu0 0.0
    %2852 = vmatpush1.msra.mxu0 0.0
    %2853 = vmatprep.subr.mxu0 0.0
    %2854 = vmatpush1.msra.mxu0 0.0
    %2855 = vmatprep.subr.mxu0 0.0
    %2856 = vmatpush1.msra.mxu0 0.0
    %2857 = vmatprep.subr.mxu0 0.0
    %2858 = vmatpush1.msra.mxu0 0.0
    %2859 = vmatprep.subr.mxu0 0.0
    %2860 = vmatpush1.msra.mxu0 0.0
    %2861 = vmatprep.subr.mxu0 0.0
    %2862 = vmatpush1.msra.mxu0 0.0
    %2863 = vmatprep.subr.mxu0 0.0
    %2864 = vmatpush1.msra.mxu0 0.0
    %2865 = vmatprep.subr.mxu0 0.0
    %2866 = vmatpush1.msra.mxu0 0.0
    %2867 = vmatprep.subr.mxu0 0.0
    %2868 = vmatpush1.msra.mxu0 0.0
    %2869 = vmatprep.subr.mxu0 0.0
    %2870 = vmatpush1.msra.mxu0 0.0
    %2871 = vmatprep.subr.mxu0 0.0
    %2872 = vmatpush1.msra.mxu0 0.0
    %2873 = vmatprep.subr.mxu0 0.0
    %2874 = vmatpush1.msra.mxu0 0.0
    %2875 = vmatprep.subr.mxu0 0.0
    %2876 = vmatpush1.msra.mxu0 0.0
    %2877 = vmatprep.subr.mxu0 0.0
    %2878 = vmatpush1.msra.mxu0 0.0
    %2879 = vmatprep.subr.mxu0 0.0
    %2880 = vmatpush1.msra.mxu0 0.0
    %2881 = vmatprep.subr.mxu0 0.0
    %2882 = vmatpush1.msra.mxu0 0.0
    %2883 = vmatprep.subr.mxu0 0.0
    %2884 = vmatpush1.msra.mxu0 0.0
    %2885 = vmatprep.subr.mxu0 0.0
    %2886 = vmatpush1.msra.mxu0 0.0
    %2887 = vmatprep.subr.mxu0 0.0
    %2888 = vmatpush1.msra.mxu0 0.0
    %2889 = vmatprep.subr.mxu0 0.0
    %2890 = vmatpush1.msra.mxu0 0.0
    %2891 = vmatprep.subr.mxu0 0.0
    %2892 = vmatpush1.msra.mxu0 0.0
    %2893 = vmatprep.subr.mxu0 0.0
    %2894 = vmatpush1.msra.mxu0 0.0
    %2895 = vmatprep.subr.mxu0 0.0
    %2896 = vmatpush1.msra.mxu0 0.0
    %2897 = vmatprep.subr.mxu0 0.0
    %2898 = vmatpush1.msra.mxu0 0.0
    %2899 = vmatprep.mubr.f32.mxu0 0.0
    %2900 = vmatmul.mubr.f32.gmra.mrb[0].mxu0 %v2812
    %v2901 = vpop.f32.mrb[0].mxu0
    %v2902 = vadd.f32 %v2809, %v2901
    %v2903 = vpop.f32.mrb[0].mxu0
    %2904 = vmatprep.mubr.f32.mxu0 0.0
    %2905 = vmatmul.mubr.f32.gmra.mrb[0].mxu0 %v2815
    %v2906 = vpop.f32.mrb[0].mxu0
    %v2907 = vadd.f32 %v2809, %v2906
    %v2908 = vpop.f32.mrb[0].mxu0
    %2909 = vmatprep.mubr.f32.mxu0 0.0
    %2910 = vmatmul.mubr.f32.gmra.mrb[0].mxu0 %v2818
    %v2911 = vpop.f32.mrb[0].mxu0
    %v2912 = vadd.f32 %v2809, %v2911
    %v2913 = vpop.f32.mrb[0].mxu0
    %2914 = vmatprep.mubr.f32.mxu0 0.0
    %2915 = vmatmul.mubr.f32.gmra.mrb[0].mxu0 %v2821
    %v2916 = vpop.f32.mrb[0].mxu0
    %v2917 = vadd.f32 %v2809, %v2916
    %v2918 = vpop.f32.mrb[0].mxu0
    %2919 = vmatprep.mubr.f32.mxu0 0.0
    %2920 = vmatmul.mubr.f32.gmra.mrb[0].mxu0 %v2824
    %v2921 = vpop.f32.mrb[0].mxu0
    %v2922 = vadd.f32 %v2809, %v2921
    %v2923 = vpop.f32.mrb[0].mxu0
    %2924 = vmatprep.mubr.f32.mxu0 0.0
    %2925 = vmatmul.mubr.f32.gmra.mrb[0].mxu0 %v2827
    %v2926 = vpop.f32.mrb[0].mxu0
    %v2927 = vadd.f32 %v2809, %v2926
    %v2928 = vpop.f32.mrb[0].mxu0
    %2929 = vmatprep.mubr.f32.mxu0 0.0
    %2930 = vmatmul.mubr.f32.gmra.mrb[0].mxu0 %v2830
    %v2931 = vpop.f32.mrb[0].mxu0
    %v2932 = vadd.f32 %v2809, %v2931
    %v2933 = vpop.f32.mrb[0].mxu0
    %2934 = vmatprep.mubr.f32.mxu0 0.0
    %2935 = vmatmul.mubr.f32.gmra.mrb[0].mxu0 %v2833
    %v2936 = vpop.f32.mrb[0].mxu0
    %v2937 = vadd.f32 %v2809, %v2936
    %v2938 = vpop.f32.mrb[0].mxu0
    %2939 = vdwg.mxu0
    %v2940 = vlaneseq
    %v2941 = vshrl.u32 %v2940, 7
    %v2942 = vadd.s32 %v2941, 8
    %v2943 = vadd.s32 %v2941, 16
    %v2944 = vadd.s32 %v2941, 24
    %v2945 = vadd.s32 %v2941, 32
    %v2946 = vadd.s32 %v2941, 40
    %v2947 = vadd.s32 %v2941, 48
    %v2948 = vadd.s32 %v2941, 56
    %s2949 = smul.u32 %s112, 8
    %v2950 = vstv %s2949
    %vm2951 = vcmp.lt.s32.totalorder %v2941, %v2950
    %vm2952 = vcmp.lt.s32.totalorder %v2942, %v2950
    %vm2953 = vcmp.lt.s32.totalorder %v2943, %v2950
    %vm2954 = vcmp.lt.s32.totalorder %v2944, %v2950
    %vm2955 = vcmp.lt.s32.totalorder %v2945, %v2950
    %vm2956 = vcmp.lt.s32.totalorder %v2946, %v2950
    %vm2957 = vcmp.lt.s32.totalorder %v2947, %v2950
    %vm2958 = vcmp.lt.s32.totalorder %v2948, %v2950
    %v2959 = vsel %vm2951, 1, 0
    %v2960 = vsel %vm2952, 1, 0
    %v2961 = vsel %vm2953, 1, 0
    %v2962 = vsel %vm2954, 1, 0
    %v2963 = vsel %vm2955, 1, 0
    %v2964 = vsel %vm2956, 1, 0
    %v2965 = vsel %vm2957, 1, 0
    %v2966 = vsel %vm2958, 1, 0
    %vm2967 = vcmp.eq.s32.totalorder %v2959, 1
    %vm2968 = vcmp.eq.s32.totalorder %v2960, 1
    %vm2969 = vcmp.eq.s32.totalorder %v2961, 1
    %vm2970 = vcmp.eq.s32.totalorder %v2962, 1
    %vm2971 = vcmp.eq.s32.totalorder %v2963, 1
    %vm2972 = vcmp.eq.s32.totalorder %v2964, 1
    %vm2973 = vcmp.eq.s32.totalorder %v2965, 1
    %vm2974 = vcmp.eq.s32.totalorder %v2966, 1
    %v2975 = vsel %vm2967, %v2902, 0.0
    %v2976 = vsel %vm2968, %v2907, 0.0
    %v2977 = vsel %vm2969, %v2912, 0.0
    %v2978 = vsel %vm2970, %v2917, 0.0
    %v2979 = vsel %vm2971, %v2922, 0.0
    %v2980 = vsel %vm2972, %v2927, 0.0
    %v2981 = vsel %vm2973, %v2932, 0.0
    %v2982 = vsel %vm2974, %v2937, 0.0
    %vm2983 = vcmask 64512
    %2984 = vst.msk [vmem:[#allocation15] sm:$0xff] %vm2983, %v2975
    %2985 = vst.msk [vmem:[#allocation15 + $0x8] sm:$0xff] %vm2983, %v2976
    %2986 = vst.msk [vmem:[#allocation15 + $0x10] sm:$0xff] %vm2983, %v2977
    %2987 = vst.msk [vmem:[#allocation15 + $0x18] sm:$0xff] %vm2983, %v2978
    %2988 = vst.msk [vmem:[#allocation15 + $0x20] sm:$0xff] %vm2983, %v2979
    %2989 = vst.msk [vmem:[#allocation15 + $0x28] sm:$0xff] %vm2983, %v2980
    %2990 = vst.msk [vmem:[#allocation15 + $0x30] sm:$0xff] %vm2983, %v2981
    %2991 = vst.msk [vmem:[#allocation15 + $0x38] sm:$0xff] %vm2983, %v2982
    // Predicated region
    $region70: #{tpu_custom_call.1} parent=1 // pred_check
      _
    $region71: #{tpu_custom_call.1} parent=1 // pred_check_branch
      %2993 = sbr.rel (0) target = $region73
    $region72: #{tpu_custom_call.1} parent=1 // pred_region
      %s2995 = ssub.s32 1024, 1024
      %2996 = vsyncadd [#allocation8], %s2995
      %s2997 = sshll.u32 [#allocation15], 4
      %s2998 = int_to_ptr.vmem [resolvable:$true] %s2997
      %3003 = dma.vmem_to_hbm [thread:$0]  %s2998, 1024, %s13, [#allocation8], 128, 128, 8
    $region73: #{tpu_custom_call.1} parent=1 // pred_fallthru
      _
    // Predicated region
    $region74: #{tpu_custom_call.1} parent=1 // pred_check
      _
    $region75: #{tpu_custom_call.1} parent=1 // pred_check_branch
      %3005 = sbr.rel (0) target = $region77
    $region76: #{tpu_custom_call.1} parent=1 // pred_region
      %3006 = dma.done [#allocation8], 1024
    $region77: #{tpu_custom_call.1} parent=1 // pred_fallthru
      _
    %3007 = vsyncpa [#allocation7], 1
    %3008 = vsyncpa [#allocation10], 1
    %3009 = vsyncpa [#allocation13], 1
    %3010 = vsyncpa [#allocation8], 1

</llo_original>
